<compile_context>
chip_gen: v7x
topology: tpu7x:2x2x1
jax: 0.10.0
libtpu: 0.0.40
codegen_flags: <defaults>
</compile_context>

<pallas_src>
import functools

import jax
import jax.numpy as jnp
from jax import lax
from jax.experimental import pallas as pl
from jax.experimental.pallas import tpu as pltpu

LANES = 128
SUBLANES = 8
BF16 = jnp.bfloat16
F32 = jnp.float32


def _rup(n, m):
  return ((n + m - 1) // m) * m


def _hsig(v):
  return jnp.clip(v + 3.0, 0.0, 6.0) * (1.0 / 6.0)


# ---------------------------------------------------------------------------
# Fused kernel: one batch image per grid step; expand -> depthwise -> SE ->
# activation -> project (+ residual) all stay in VMEM.
# ---------------------------------------------------------------------------
def fused_inverted_residual_kernel(
    x_ref, wexp_ref, b1_ref,
    wdw_ref, b2_ref,
    sew1_ref, seb1_ref, sew2_ref, seb2_ref,
    wproj_ref, b3_ref,
    o_ref, scr_ref, *,
    H, W, k, stride, pad, expand, use_se, use_hs, identity):
  Ch = wdw_ref.shape[-1]
  Ho = (H + 2 * pad - k) // stride + 1
  Wo = (W + 2 * pad - k) // stride + 1
  Hc = Ho * stride                      # stride-1 rows computed before compaction
  Hs = scr_ref.shape[0]
  Wp = scr_ref.shape[1]

  def act(v):
    return v * _hsig(v) if use_hs else jnp.maximum(v, 0.0)

  x2d = x_ref[0]                        # (H*W, cin_p), bf16, lane-dense

  # ---- 1x1 expand conv (BN1 scale folded into wexp) + bias + activation ----
  if expand:
    h = jnp.dot(x2d, wexp_ref[...], preferred_element_type=F32)   # bf16 x bf16 -> f32
    h = act(h + b1_ref[...])
  else:
    h = x2d.astype(F32)                 # cin_p == ch_p in this branch

  # ---- stage depthwise input into the halo'd scratch (zero bands, no masks) ----
  if pad > 0:
    scr_ref[0:pad, :, :] = jnp.zeros((pad, Wp, Ch), F32)
    scr_ref[pad:pad + H, 0:pad, :] = jnp.zeros((H, pad, Ch), F32)
  if Hs > pad + H:
    scr_ref[pad + H:Hs, :, :] = jnp.zeros((Hs - pad - H, Wp, Ch), F32)
  if Wp > pad + W:
    scr_ref[pad:pad + H, pad + W:Wp, :] = jnp.zeros((H, Wp - pad - W, Ch), F32)
  scr_ref[pad:pad + H, pad:pad + W, :] = h.reshape(H, W, Ch)

  # ---- depthwise kxk conv (BN2 scale folded into wdw); taps are plain slices ----
  wdw = wdw_ref[...]                    # (k*k, Ch), f32
  acc = None
  for ki in range(k):
    for kj in range(k):
      win = scr_ref[ki:ki + Hc, kj:kj + W, :]          # (Hc, W, Ch) static slice
      tap = win * wdw[ki * k + kj]
      acc = tap if acc is None else acc + tap
  acc = acc + b2_ref[...]

  if stride > 1:
    # Keep only the strided output rows before SE / activation / projection.
    acc = acc.reshape(Ho, stride, W, Ch)[:, 0]
  Hk = Ho if stride > 1 else H

  # ---- Squeeze-Excite (pool over the true output positions + 2 tiny FCs) ----
  def se_scale(v):
    if stride == 1:
      pooled = jnp.sum(v, axis=(0, 1), keepdims=True)
    else:
      col = lax.broadcasted_iota(jnp.int32, (1, W, 1), 1)
      keep = (col % stride == 0).astype(F32)
      pooled = jnp.sum(v * keep, axis=(0, 1), keepdims=True)
    pooled = (pooled * (1.0 / (Ho * Wo))).reshape(1, Ch).astype(BF16)
    a1 = jnp.dot(pooled, sew1_ref[...], preferred_element_type=F32) + seb1_ref[...]
    a1 = jnp.maximum(a1, 0.0).astype(BF16)
    s = jnp.dot(a1, sew2_ref[...], preferred_element_type=F32) + seb2_ref[...]
    return _hsig(s)                     # (1, Ch)

  # PyTorch ordering differs per branch:
  #   expand branch:    dw -> BN2 -> SE -> act
  #   no-expand branch: dw -> BN2 -> act -> SE
  if expand:
    if use_se:
      acc = acc * se_scale(acc)
    acc = act(acc)
  else:
    acc = act(acc)
    if use_se:
      acc = acc * se_scale(acc)

  # ---- 1x1 projection conv (BN3 scale folded into wproj) + bias (+ residual) ----
  y2d = acc.reshape(Hk * W, Ch).astype(BF16)
  z = jnp.dot(y2d, wproj_ref[...], preferred_element_type=F32) + b3_ref[...]
  if identity:
    z = z + x2d.astype(F32)             # inp == oup -> same lane padding
  o_ref[0] = z.astype(o_ref.dtype)


# ---------------------------------------------------------------------------
# One-time parameter preparation: fold BN scales into weights, pad channel dims
# to 128 lanes, cast MXU weights to bf16 (do this once per model, not per call).
# ---------------------------------------------------------------------------
def prepare_params(p, *, inp, hidden_dim, oup, kernel_size, use_se):
  k = kernel_size
  cin_p = _rup(inp, LANES)
  ch_p = _rup(hidden_dim, LANES)
  co_p = _rup(oup, LANES)
  expand = inp != hidden_dim

  def padw(a, rows, cols, dt):
    a = a.astype(F32)
    a = jnp.pad(a, ((0, rows - a.shape[0]), (0, cols - a.shape[1])))
    return a.astype(dt)

  prep = {}
  if expand:
    prep["w_exp"] = padw(p["w_exp"] * p["bn1_scale"], cin_p, ch_p, BF16)
    prep["b1"] = padw(p["bn1_bias"], 1, ch_p, F32)
  else:
    prep["w_exp"] = jnp.zeros((SUBLANES, LANES), BF16)   # unused dummy
    prep["b1"] = jnp.zeros((1, LANES), F32)
  prep["w_dw"] = padw(p["w_dw"].reshape(k * k, hidden_dim) * p["bn2_scale"],
                      k * k, ch_p, F32)                  # depthwise stays f32 (VPU)
  prep["b2"] = padw(p["bn2_bias"], 1, ch_p, F32)
  if use_se:
    cr = p["se_w1"].shape[1]
    cr_p = _rup(cr, LANES)
    prep["se_w1"] = padw(p["se_w1"], ch_p, cr_p, BF16)
    prep["se_b1"] = padw(p["se_b1"], 1, cr_p, F32)
    prep["se_w2"] = padw(p["se_w2"], cr_p, ch_p, BF16)
    prep["se_b2"] = padw(p["se_b2"], 1, ch_p, F32)
  else:
    prep["se_w1"] = jnp.zeros((SUBLANES, LANES), BF16)   # unused dummies
    prep["se_b1"] = jnp.zeros((1, LANES), F32)
    prep["se_w2"] = jnp.zeros((SUBLANES, LANES), BF16)
    prep["se_b2"] = jnp.zeros((1, LANES), F32)
  prep["w_proj"] = padw(p["w_proj"] * p["bn3_scale"], ch_p, co_p, BF16)
  prep["b3"] = padw(p["bn3_bias"], 1, co_p, F32)
  return prep


# ---------------------------------------------------------------------------
# Flat, lane-dense entry point: x_flat is (B, H*W, cin_p) bf16 (NHWC flattened,
# channels zero-padded to 128).  Returns (B, N_out, co_p) bf16 where
# N_out = H*W (stride 1) or Ho*W (stride 2; W subsampled by the caller).
# ---------------------------------------------------------------------------
def inverted_residual_flat(x_flat, prep, *, H, W, inp, hidden_dim, oup,
                           kernel_size, stride, use_se, use_hs):
  assert stride in (1, 2)
  assert W % SUBLANES == 0, "TODO(synk): support W % 8 != 0 (sublane repack)"
  expand = inp != hidden_dim
  identity = (stride == 1) and (inp == oup)
  if not expand:
    assert _rup(inp, LANES) == _rup(hidden_dim, LANES)
  k = kernel_size
  pad = (k - 1) // 2
  B = x_flat.shape[0]
  cin_p = x_flat.shape[-1]
  ch_p = prep["w_dw"].shape[-1]
  co_p = prep["w_proj"].shape[-1]
  Ho = (H + 2 * pad - k) // stride + 1
  Hc = Ho * stride
  Hs = Hc + 2 * pad
  Wp = _rup(W + 2 * pad, SUBLANES)
  Hk = H if stride == 1 else Ho
  N_out = Hk * W

  kernel = functools.partial(
      fused_inverted_residual_kernel,
      H=H, W=W, k=k, stride=stride, pad=pad,
      expand=expand, use_se=use_se, use_hs=use_hs, identity=identity)

  # Scoped VMEM budget: double-buffered I/O + weights + scratch + slack,
  # clamped to [32 MiB, 56 MiB] (safe on v5e/v6e/v7x; v5e's default is only 16 MiB).
  weight_names = ("w_exp", "b1", "w_dw", "b2", "se_w1", "se_b1",
                  "se_w2", "se_b2", "w_proj", "b3")
  weight_bytes = sum(int(prep[n].size) * prep[n].dtype.itemsize
                     for n in weight_names)
  io_bytes = H * W * cin_p * 2 + N_out * co_p * 2
  scr_bytes = Hs * Wp * ch_p * 4
  need = 2 * (io_bytes + weight_bytes) + scr_bytes + (8 << 20)
  vmem_limit = int(min(max(need, 32 << 20), 56 << 20))

  const2 = lambda i: (0, 0)
  in_specs = [
      pl.BlockSpec((1, H * W, cin_p), lambda i: (i, 0, 0)),      # x
      pl.BlockSpec(prep["w_exp"].shape, const2),
      pl.BlockSpec(prep["b1"].shape, const2),
      pl.BlockSpec(prep["w_dw"].shape, const2),
      pl.BlockSpec(prep["b2"].shape, const2),
      pl.BlockSpec(prep["se_w1"].shape, const2),
      pl.BlockSpec(prep["se_b1"].shape, const2),
      pl.BlockSpec(prep["se_w2"].shape, const2),
      pl.BlockSpec(prep["se_b2"].shape, const2),
      pl.BlockSpec(prep["w_proj"].shape, const2),
      pl.BlockSpec(prep["b3"].shape, const2),
  ]
  # TODO(synk): on v7x add pipeline_mode=pl.Buffered(1) to the grid-invariant
  # weight specs above and tile the pixel axis for production resolutions.

  out = pl.pallas_call(
      kernel,
      out_shape=jax.ShapeDtypeStruct((B, N_out, co_p), BF16),
      grid=(B,),
      in_specs=in_specs,
      out_specs=pl.BlockSpec((1, N_out, co_p), lambda i: (i, 0, 0)),
      scratch_shapes=[pltpu.VMEM((Hs, Wp, ch_p), F32)],
      compiler_params=pltpu.CompilerParams(
          dimension_semantics=("parallel",),
          vmem_limit_bytes=vmem_limit),
  )(x_flat, prep["w_exp"], prep["b1"], prep["w_dw"], prep["b2"],
    prep["se_w1"], prep["se_b1"], prep["se_w2"], prep["se_b2"],
    prep["w_proj"], prep["b3"])
  return out


# ---------------------------------------------------------------------------
# Convenience wrapper: PyTorch NCHW f32 in / out.
# TODO(synk): in a full network keep activations in the padded bf16 flat layout
# across consecutive blocks; only convert at network entry/exit.
# ---------------------------------------------------------------------------
def inverted_residual_forward(x_nchw, prep, *, inp, hidden_dim, oup,
                              kernel_size, stride, use_se, use_hs):
  B, C, H, W = x_nchw.shape
  assert C == inp
  cin_p = _rup(inp, LANES)

  x = jnp.transpose(x_nchw, (0, 2, 3, 1)).reshape(B, H * W, inp)
  x = jnp.pad(x, ((0, 0), (0, 0), (0, cin_p - inp))).astype(BF16)

  out = inverted_residual_flat(
      x, prep, H=H, W=W, inp=inp, hidden_dim=hidden_dim, oup=oup,
      kernel_size=kernel_size, stride=stride, use_se=use_se, use_hs=use_hs)

  pad = (kernel_size - 1) // 2
  Ho = (H + 2 * pad - kernel_size) // stride + 1
  Hk = H if stride == 1 else Ho
  out = out.reshape(B, Hk, W, -1)[:, :, ::stride, :oup].astype(jnp.float32)
  return jnp.transpose(out, (0, 3, 1, 2))               # back to NCHW


# ---------------------------------------------------------------------------
# Pure-JAX reference (mirrors the kernel's bf16 MXU numerics for a tight check).
# ---------------------------------------------------------------------------
def ref_forward(x_nchw, p, *, inp, hidden_dim, oup, kernel_size, stride,
                use_se, use_hs):
  expand = inp != hidden_dim
  identity = (stride == 1) and (inp == oup)
  k = kernel_size
  pad = (k - 1) // 2

  def act(v):
    return v * _hsig(v) if use_hs else jnp.maximum(v, 0.0)

  x = jnp.transpose(x_nchw, (0, 2, 3, 1)).astype(F32)
  xq = x.astype(BF16)                   # kernel stores x as bf16 in HBM

  if expand:
    w = (p["w_exp"] * p["bn1_scale"]).astype(BF16)
    h = jnp.einsum("bhwc,cd->bhwd", xq, w, preferred_element_type=F32)
    h = act(h + p["bn1_bias"])
  else:
    h = xq.astype(F32)

  wdw = (p["w_dw"] * p["bn2_scale"]).astype(F32)         # (k, k, hidden)
  y = lax.conv_general_dilated(
      h, wdw[:, :, None, :], window_strides=(stride, stride),
      padding=[(pad, pad), (pad, pad)],
      dimension_numbers=("NHWC", "HWIO", "NHWC"),
      feature_group_count=hidden_dim, precision=lax.Precision.HIGHEST)
  y = y + p["bn2_bias"]

  def se(v):
    pooled = jnp.mean(v, axis=(1, 2)).astype(BF16)
    a1 = jnp.dot(pooled, p["se_w1"].astype(BF16),
                 preferred_element_type=F32) + p["se_b1"]
    a1 = jnp.maximum(a1, 0.0).astype(BF16)
    s = jnp.dot(a1, p["se_w2"].astype(BF16),
                preferred_element_type=F32) + p["se_b2"]
    return _hsig(s)[:, None, None, :]

  if expand:
    if use_se:
      y = y * se(y)
    y = act(y)
  else:
    y = act(y)
    if use_se:
      y = y * se(y)

  wp = (p["w_proj"] * p["bn3_scale"]).astype(BF16)
  z = jnp.einsum("bhwc,cd->bhwd", y.astype(BF16), wp, preferred_element_type=F32)
  z = z + p["bn3_bias"]
  if identity:
    z = z + xq.astype(F32)
  return jnp.transpose(z, (0, 3, 1, 2))


# ---------------------------------------------------------------------------
# Deterministic parameter construction (BatchNorm folded to scale/bias).
# ---------------------------------------------------------------------------
def make_params(key, inp, hidden_dim, oup, kernel_size, reduction=4):
  ks = jax.random.split(key, 20)

  def bn_fold(kg, kb, km, kv, c, eps=1e-5):
    gamma = 1.0 + 0.1 * jax.random.normal(kg, (1, c), F32)
    beta = 0.1 * jax.random.normal(kb, (1, c), F32)
    mean = 0.1 * jax.random.normal(km, (1, c), F32)
    var = jax.random.uniform(kv, (1, c), F32, 0.5, 1.5)
    scale = gamma / jnp.sqrt(var + eps)
    return scale, beta - mean * scale

  cr = max(hidden_dim // reduction, 1)
  p = {}
  p["w_exp"] = 0.3 * jax.random.normal(ks[0], (inp, hidden_dim), F32)
  p["bn1_scale"], p["bn1_bias"] = bn_fold(ks[1], ks[2], ks[3], ks[4], hidden_dim)
  p["w_dw"] = 0.3 * jax.random.normal(
      ks[5], (kernel_size, kernel_size, hidden_dim), F32)
  p["bn2_scale"], p["bn2_bias"] = bn_fold(ks[6], ks[7], ks[8], ks[9], hidden_dim)
  p["se_w1"] = 0.3 * jax.random.normal(ks[10], (hidden_dim, cr), F32)
  p["se_b1"] = 0.1 * jax.random.normal(ks[11], (1, cr), F32)
  p["se_w2"] = 0.3 * jax.random.normal(ks[12], (cr, hidden_dim), F32)
  p["se_b2"] = 0.1 * jax.random.normal(ks[13], (1, hidden_dim), F32)
  p["w_proj"] = 0.3 * jax.random.normal(ks[14], (hidden_dim, oup), F32)
  p["bn3_scale"], p["bn3_bias"] = bn_fold(ks[15], ks[16], ks[17], ks[18], oup)
  return p


# ---------------------------------------------------------------------------
if __name__ == "__main__":
  key = jax.random.PRNGKey(0)

  # (name, B, inp, hidden, oup, k, stride, use_se, use_hs, H)
  configs = [
      ("expand_se_hswish_identity", 2, 8, 16, 8, 3, 1, True, True, 16),
      ("noexpand_relu_project",     2, 16, 16, 24, 3, 1, False, False, 16),
      ("expand_se_hswish_stride2",  2, 16, 32, 32, 5, 2, True, True, 16),
  ]

  for name, B, inp, hidden, oup, k, stride, use_se, use_hs, H in configs:
    W = H
    k_x, k_p, key = jax.random.split(key, 3)
    x = jax.random.normal(k_x, (B, inp, H, W), F32)
    params = make_params(k_p, inp, hidden, oup, k)
    cfg = dict(inp=inp, hidden_dim=hidden, oup=oup, kernel_size=k,
               stride=stride, use_se=use_se, use_hs=use_hs)

    prep = prepare_params(params, inp=inp, hidden_dim=hidden, oup=oup,
                          kernel_size=k, use_se=use_se)

    out = jax.block_until_ready(inverted_residual_forward(x, prep, **cfg))
    ref = jax.block_until_ready(ref_forward(x, params, **cfg))

    pad = (k - 1) // 2
    Ho = (H + 2 * pad - k) // stride + 1
    Wo = (W + 2 * pad - k) // stride + 1
    assert out.shape == (B, oup, Ho, Wo), (name, out.shape)
    err = float(jnp.max(jnp.abs(out - ref)))
    assert jnp.allclose(out, ref, atol=2e-2, rtol=2e-2), (name, err)

  print("KERNEL_OK")
</pallas_src>

<mosaic_0001>
module attributes {stable_mosaic.version = 11 : i64} {
  func.func @fused_inverted_residual_kernel(%arg0: i32, %arg1: memref<1x256x128xbf16, #tpu.memory_space<vmem>>, %arg2: memref<128x128xbf16, #tpu.memory_space<vmem>>, %arg3: memref<1x128xf32, #tpu.memory_space<vmem>>, %arg4: memref<9x128xf32, #tpu.memory_space<vmem>>, %arg5: memref<1x128xf32, #tpu.memory_space<vmem>>, %arg6: memref<128x128xbf16, #tpu.memory_space<vmem>>, %arg7: memref<1x128xf32, #tpu.memory_space<vmem>>, %arg8: memref<128x128xbf16, #tpu.memory_space<vmem>>, %arg9: memref<1x128xf32, #tpu.memory_space<vmem>>, %arg10: memref<128x128xbf16, #tpu.memory_space<vmem>>, %arg11: memref<1x128xf32, #tpu.memory_space<vmem>>, %arg12: memref<1x256x128xbf16, #tpu.memory_space<vmem>>, %arg13: memref<18x24x128xf32, #tpu.memory_space<vmem>>) attributes {dimension_semantics = [#tpu.dimension_semantics<parallel>], iteration_bounds = array<i64: 2>, scalar_prefetch = 0 : i64, scratch_operands = 1 : i64, tpu.core_type = #tpu.core_type<tc>, window_params = [{transform_indices = @transform_0, window_bounds = array<i64: 1, 256, 128>}, {pipeline_mode = #tpu.pipeline_mode<synchronous>, transform_indices = @transform_1, window_bounds = array<i64: 128, 128>}, {pipeline_mode = #tpu.pipeline_mode<synchronous>, transform_indices = @transform_2, window_bounds = array<i64: 1, 128>}, {pipeline_mode = #tpu.pipeline_mode<synchronous>, transform_indices = @transform_3, window_bounds = array<i64: 9, 128>}, {pipeline_mode = #tpu.pipeline_mode<synchronous>, transform_indices = @transform_4, window_bounds = array<i64: 1, 128>}, {pipeline_mode = #tpu.pipeline_mode<synchronous>, transform_indices = @transform_5, window_bounds = array<i64: 128, 128>}, {pipeline_mode = #tpu.pipeline_mode<synchronous>, transform_indices = @transform_6, window_bounds = array<i64: 1, 128>}, {pipeline_mode = #tpu.pipeline_mode<synchronous>, transform_indices = @transform_7, window_bounds = array<i64: 128, 128>}, {pipeline_mode = #tpu.pipeline_mode<synchronous>, transform_indices = @transform_8, window_bounds = array<i64: 1, 128>}, {pipeline_mode = #tpu.pipeline_mode<synchronous>, transform_indices = @transform_9, window_bounds = array<i64: 128, 128>}, {pipeline_mode = #tpu.pipeline_mode<synchronous>, transform_indices = @transform_10, window_bounds = array<i64: 1, 128>}, {transform_indices = @transform_11, window_bounds = array<i64: 1, 256, 128>}]} {
    %c0 = arith.constant 0 : index
    %c0_0 = arith.constant 0 : index
    %c0_1 = arith.constant 0 : index
    %0 = vector.load %arg1[%c0, %c0_0, %c0_1] : memref<1x256x128xbf16, #tpu.memory_space<vmem>>, vector<1x256x128xbf16>
    %1 = vector.shape_cast %0 : vector<1x256x128xbf16> to vector<256x128xbf16>
    %c0_2 = arith.constant 0 : index
    %c0_3 = arith.constant 0 : index
    %2 = vector.load %arg2[%c0_2, %c0_3] : memref<128x128xbf16, #tpu.memory_space<vmem>>, vector<128x128xbf16>
    %cst = arith.constant dense<0.000000e+00> : vector<256x128xf32>
    %3 = tpu.matmul %1, %2, %cst {dimension_numbers = #tpu.dot_dimension_numbers<[1], [0], [0], [1], [0, 0, 1, 1], [], []>} : vector<256x128xbf16>, vector<128x128xbf16>, vector<256x128xf32> -> vector<256x128xf32>
    %c0_4 = arith.constant 0 : index
    %c0_5 = arith.constant 0 : index
    %4 = vector.load %arg3[%c0_4, %c0_5] : memref<1x128xf32, #tpu.memory_space<vmem>>, vector<1x128xf32>
    %5 = vector.broadcast %4 : vector<1x128xf32> to vector<256x128xf32>
    %6 = arith.addf %3, %5 : vector<256x128xf32>
    %cst_6 = arith.constant 3.000000e+00 : f32
    %7 = vector.broadcast %cst_6 : f32 to vector<256x128xf32>
    %8 = arith.addf %6, %7 : vector<256x128xf32>
    %cst_7 = arith.constant 0.000000e+00 : f32
    %cst_8 = arith.constant 6.000000e+00 : f32
    %9 = vector.broadcast %cst_7 : f32 to vector<256x128xf32>
    %10 = arith.maximumf %9, %8 : vector<256x128xf32>
    %11 = vector.broadcast %cst_8 : f32 to vector<256x128xf32>
    %12 = arith.minimumf %11, %10 : vector<256x128xf32>
    %cst_9 = arith.constant 0.166666672 : f32
    %13 = vector.broadcast %cst_9 : f32 to vector<256x128xf32>
    %14 = arith.mulf %12, %13 : vector<256x128xf32>
    %15 = arith.mulf %6, %14 : vector<256x128xf32>
    %cst_10 = arith.constant 0.000000e+00 : f32
    %16 = vector.broadcast %cst_10 : f32 to vector<1x24x128xf32>
    %c0_11 = arith.constant 0 : index
    %c0_12 = arith.constant 0 : index
    %c0_13 = arith.constant 0 : index
    %17 = vector.load %arg13[%c0_11, %c0_12, %c0_13] : memref<18x24x128xf32, #tpu.memory_space<vmem>>, vector<1x24x128xf32>
    tpu.vector_store %arg13[%c0_11, %c0_12, %c0_13], %16 {strides = array<i32>} : memref<18x24x128xf32, #tpu.memory_space<vmem>>, vector<1x24x128xf32>,
    %cst_14 = arith.constant 0.000000e+00 : f32
    %18 = vector.broadcast %cst_14 : f32 to vector<16x1x128xf32>
    %c1 = arith.constant 1 : index
    %c0_15 = arith.constant 0 : index
    %c0_16 = arith.constant 0 : index
    %19 = vector.load %arg13[%c1, %c0_15, %c0_16] : memref<18x24x128xf32, #tpu.memory_space<vmem>>, vector<16x1x128xf32>
    tpu.vector_store %arg13[%c1, %c0_15, %c0_16], %18 {strides = array<i32>} : memref<18x24x128xf32, #tpu.memory_space<vmem>>, vector<16x1x128xf32>,
    %cst_17 = arith.constant 0.000000e+00 : f32
    %20 = vector.broadcast %cst_17 : f32 to vector<1x24x128xf32>
    %c17 = arith.constant 17 : index
    %c0_18 = arith.constant 0 : index
    %c0_19 = arith.constant 0 : index
    %21 = vector.load %arg13[%c17, %c0_18, %c0_19] : memref<18x24x128xf32, #tpu.memory_space<vmem>>, vector<1x24x128xf32>
    tpu.vector_store %arg13[%c17, %c0_18, %c0_19], %20 {strides = array<i32>} : memref<18x24x128xf32, #tpu.memory_space<vmem>>, vector<1x24x128xf32>,
    %cst_20 = arith.constant 0.000000e+00 : f32
    %22 = vector.broadcast %cst_20 : f32 to vector<16x7x128xf32>
    %c1_21 = arith.constant 1 : index
    %c17_22 = arith.constant 17 : index
    %c0_23 = arith.constant 0 : index
    %23 = vector.load %arg13[%c1_21, %c17_22, %c0_23] : memref<18x24x128xf32, #tpu.memory_space<vmem>>, vector<16x7x128xf32>
    tpu.vector_store %arg13[%c1_21, %c17_22, %c0_23], %22 {strides = array<i32>} : memref<18x24x128xf32, #tpu.memory_space<vmem>>, vector<16x7x128xf32>,
    %24 = vector.shape_cast %15 : vector<256x128xf32> to vector<16x16x128xf32>
    %c1_24 = arith.constant 1 : index
    %c1_25 = arith.constant 1 : index
    %c0_26 = arith.constant 0 : index
    %25 = vector.load %arg13[%c1_24, %c1_25, %c0_26] : memref<18x24x128xf32, #tpu.memory_space<vmem>>, vector<16x16x128xf32>
    tpu.vector_store %arg13[%c1_24, %c1_25, %c0_26], %24 {strides = array<i32>} : memref<18x24x128xf32, #tpu.memory_space<vmem>>, vector<16x16x128xf32>,
    %c0_27 = arith.constant 0 : index
    %c0_28 = arith.constant 0 : index
    %26 = vector.load %arg4[%c0_27, %c0_28] : memref<9x128xf32, #tpu.memory_space<vmem>>, vector<9x128xf32>
    %c0_29 = arith.constant 0 : index
    %c0_30 = arith.constant 0 : index
    %c0_31 = arith.constant 0 : index
    %27 = vector.load %arg13[%c0_29, %c0_30, %c0_31] : memref<18x24x128xf32, #tpu.memory_space<vmem>>, vector<16x16x128xf32>
    %28 = vector.extract_strided_slice %26 {offsets = [0, 0], sizes = [1, 128], strides = [1, 1]} : vector<9x128xf32> to vector<1x128xf32>
    %29 = vector.shape_cast %28 : vector<1x128xf32> to vector<128xf32>
    %30 = vector.shape_cast %29 : vector<128xf32> to vector<1x1x128xf32>
    %31 = vector.broadcast %30 : vector<1x1x128xf32> to vector<16x16x128xf32>
    %32 = arith.mulf %27, %31 : vector<16x16x128xf32>
    %c0_32 = arith.constant 0 : index
    %c1_33 = arith.constant 1 : index
    %c0_34 = arith.constant 0 : index
    %33 = vector.load %arg13[%c0_32, %c1_33, %c0_34] : memref<18x24x128xf32, #tpu.memory_space<vmem>>, vector<16x16x128xf32>
    %34 = vector.extract_strided_slice %26 {offsets = [1, 0], sizes = [1, 128], strides = [1, 1]} : vector<9x128xf32> to vector<1x128xf32>
    %35 = vector.shape_cast %34 : vector<1x128xf32> to vector<128xf32>
    %36 = vector.shape_cast %35 : vector<128xf32> to vector<1x1x128xf32>
    %37 = vector.broadcast %36 : vector<1x1x128xf32> to vector<16x16x128xf32>
    %38 = arith.mulf %33, %37 : vector<16x16x128xf32>
    %39 = arith.addf %32, %38 : vector<16x16x128xf32>
    %c0_35 = arith.constant 0 : index
    %c2 = arith.constant 2 : index
    %c0_36 = arith.constant 0 : index
    %40 = vector.load %arg13[%c0_35, %c2, %c0_36] : memref<18x24x128xf32, #tpu.memory_space<vmem>>, vector<16x16x128xf32>
    %41 = vector.extract_strided_slice %26 {offsets = [2, 0], sizes = [1, 128], strides = [1, 1]} : vector<9x128xf32> to vector<1x128xf32>
    %42 = vector.shape_cast %41 : vector<1x128xf32> to vector<128xf32>
    %43 = vector.shape_cast %42 : vector<128xf32> to vector<1x1x128xf32>
    %44 = vector.broadcast %43 : vector<1x1x128xf32> to vector<16x16x128xf32>
    %45 = arith.mulf %40, %44 : vector<16x16x128xf32>
    %46 = arith.addf %39, %45 : vector<16x16x128xf32>
    %c1_37 = arith.constant 1 : index
    %c0_38 = arith.constant 0 : index
    %c0_39 = arith.constant 0 : index
    %47 = vector.load %arg13[%c1_37, %c0_38, %c0_39] : memref<18x24x128xf32, #tpu.memory_space<vmem>>, vector<16x16x128xf32>
    %48 = vector.extract_strided_slice %26 {offsets = [3, 0], sizes = [1, 128], strides = [1, 1]} : vector<9x128xf32> to vector<1x128xf32>
    %49 = vector.shape_cast %48 : vector<1x128xf32> to vector<128xf32>
    %50 = vector.shape_cast %49 : vector<128xf32> to vector<1x1x128xf32>
    %51 = vector.broadcast %50 : vector<1x1x128xf32> to vector<16x16x128xf32>
    %52 = arith.mulf %47, %51 : vector<16x16x128xf32>
    %53 = arith.addf %46, %52 : vector<16x16x128xf32>
    %c1_40 = arith.constant 1 : index
    %c1_41 = arith.constant 1 : index
    %c0_42 = arith.constant 0 : index
    %54 = vector.load %arg13[%c1_40, %c1_41, %c0_42] : memref<18x24x128xf32, #tpu.memory_space<vmem>>, vector<16x16x128xf32>
    %55 = vector.extract_strided_slice %26 {offsets = [4, 0], sizes = [1, 128], strides = [1, 1]} : vector<9x128xf32> to vector<1x128xf32>
    %56 = vector.shape_cast %55 : vector<1x128xf32> to vector<128xf32>
    %57 = vector.shape_cast %56 : vector<128xf32> to vector<1x1x128xf32>
    %58 = vector.broadcast %57 : vector<1x1x128xf32> to vector<16x16x128xf32>
    %59 = arith.mulf %54, %58 : vector<16x16x128xf32>
    %60 = arith.addf %53, %59 : vector<16x16x128xf32>
    %c1_43 = arith.constant 1 : index
    %c2_44 = arith.constant 2 : index
    %c0_45 = arith.constant 0 : index
    %61 = vector.load %arg13[%c1_43, %c2_44, %c0_45] : memref<18x24x128xf32, #tpu.memory_space<vmem>>, vector<16x16x128xf32>
    %62 = vector.extract_strided_slice %26 {offsets = [5, 0], sizes = [1, 128], strides = [1, 1]} : vector<9x128xf32> to vector<1x128xf32>
    %63 = vector.shape_cast %62 : vector<1x128xf32> to vector<128xf32>
    %64 = vector.shape_cast %63 : vector<128xf32> to vector<1x1x128xf32>
    %65 = vector.broadcast %64 : vector<1x1x128xf32> to vector<16x16x128xf32>
    %66 = arith.mulf %61, %65 : vector<16x16x128xf32>
    %67 = arith.addf %60, %66 : vector<16x16x128xf32>
    %c2_46 = arith.constant 2 : index
    %c0_47 = arith.constant 0 : index
    %c0_48 = arith.constant 0 : index
    %68 = vector.load %arg13[%c2_46, %c0_47, %c0_48] : memref<18x24x128xf32, #tpu.memory_space<vmem>>, vector<16x16x128xf32>
    %69 = vector.extract_strided_slice %26 {offsets = [6, 0], sizes = [1, 128], strides = [1, 1]} : vector<9x128xf32> to vector<1x128xf32>
    %70 = vector.shape_cast %69 : vector<1x128xf32> to vector<128xf32>
    %71 = vector.shape_cast %70 : vector<128xf32> to vector<1x1x128xf32>
    %72 = vector.broadcast %71 : vector<1x1x128xf32> to vector<16x16x128xf32>
    %73 = arith.mulf %68, %72 : vector<16x16x128xf32>
    %74 = arith.addf %67, %73 : vector<16x16x128xf32>
    %c2_49 = arith.constant 2 : index
    %c1_50 = arith.constant 1 : index
    %c0_51 = arith.constant 0 : index
    %75 = vector.load %arg13[%c2_49, %c1_50, %c0_51] : memref<18x24x128xf32, #tpu.memory_space<vmem>>, vector<16x16x128xf32>
    %76 = vector.extract_strided_slice %26 {offsets = [7, 0], sizes = [1, 128], strides = [1, 1]} : vector<9x128xf32> to vector<1x128xf32>
    %77 = vector.shape_cast %76 : vector<1x128xf32> to vector<128xf32>
    %78 = vector.shape_cast %77 : vector<128xf32> to vector<1x1x128xf32>
    %79 = vector.broadcast %78 : vector<1x1x128xf32> to vector<16x16x128xf32>
    %80 = arith.mulf %75, %79 : vector<16x16x128xf32>
    %81 = arith.addf %74, %80 : vector<16x16x128xf32>
    %c2_52 = arith.constant 2 : index
    %c2_53 = arith.constant 2 : index
    %c0_54 = arith.constant 0 : index
    %82 = vector.load %arg13[%c2_52, %c2_53, %c0_54] : memref<18x24x128xf32, #tpu.memory_space<vmem>>, vector<16x16x128xf32>
    %83 = vector.extract_strided_slice %26 {offsets = [8, 0], sizes = [1, 128], strides = [1, 1]} : vector<9x128xf32> to vector<1x128xf32>
    %84 = vector.shape_cast %83 : vector<1x128xf32> to vector<128xf32>
    %85 = vector.shape_cast %84 : vector<128xf32> to vector<1x1x128xf32>
    %86 = vector.broadcast %85 : vector<1x1x128xf32> to vector<16x16x128xf32>
    %87 = arith.mulf %82, %86 : vector<16x16x128xf32>
    %88 = arith.addf %81, %87 : vector<16x16x128xf32>
    %c0_55 = arith.constant 0 : index
    %c0_56 = arith.constant 0 : index
    %89 = vector.load %arg5[%c0_55, %c0_56] : memref<1x128xf32, #tpu.memory_space<vmem>>, vector<1x128xf32>
    %90 = vector.shape_cast %89 : vector<1x128xf32> to vector<1x1x128xf32>
    %91 = vector.broadcast %90 : vector<1x1x128xf32> to vector<16x16x128xf32>
    %92 = arith.addf %88, %91 : vector<16x16x128xf32>
    %cst_57 = arith.constant dense<0.000000e+00> : vector<128xf32>
    %93 = vector.multi_reduction <add>, %92, %cst_57 [0, 1] : vector<16x16x128xf32> to vector<128xf32>
    %94 = vector.shape_cast %93 : vector<128xf32> to vector<1x1x128xf32>
    %cst_58 = arith.constant 3.906250e-03 : f32
    %95 = vector.broadcast %cst_58 : f32 to vector<1x1x128xf32>
    %96 = arith.mulf %94, %95 : vector<1x1x128xf32>
    %97 = vector.shape_cast %96 : vector<1x1x128xf32> to vector<1x128xf32>
    %98 = arith.truncf %97 : vector<1x128xf32> to vector<1x128xbf16>
    %c0_59 = arith.constant 0 : index
    %c0_60 = arith.constant 0 : index
    %99 = vector.load %arg6[%c0_59, %c0_60] : memref<128x128xbf16, #tpu.memory_space<vmem>>, vector<128x128xbf16>
    %cst_61 = arith.constant dense<0.000000e+00> : vector<1x128xf32>
    %100 = tpu.matmul %98, %99, %cst_61 {dimension_numbers = #tpu.dot_dimension_numbers<[1], [0], [0], [1], [0, 0, 1, 1], [], []>} : vector<1x128xbf16>, vector<128x128xbf16>, vector<1x128xf32> -> vector<1x128xf32>
    %c0_62 = arith.constant 0 : index
    %c0_63 = arith.constant 0 : index
    %101 = vector.load %arg7[%c0_62, %c0_63] : memref<1x128xf32, #tpu.memory_space<vmem>>, vector<1x128xf32>
    %102 = arith.addf %100, %101 : vector<1x128xf32>
    %cst_64 = arith.constant 0.000000e+00 : f32
    %103 = vector.broadcast %cst_64 : f32 to vector<1x128xf32>
    %104 = arith.maximumf %102, %103 : vector<1x128xf32>
    %105 = arith.truncf %104 : vector<1x128xf32> to vector<1x128xbf16>
    %c0_65 = arith.constant 0 : index
    %c0_66 = arith.constant 0 : index
    %106 = vector.load %arg8[%c0_65, %c0_66] : memref<128x128xbf16, #tpu.memory_space<vmem>>, vector<128x128xbf16>
    %cst_67 = arith.constant dense<0.000000e+00> : vector<1x128xf32>
    %107 = tpu.matmul %105, %106, %cst_67 {dimension_numbers = #tpu.dot_dimension_numbers<[1], [0], [0], [1], [0, 0, 1, 1], [], []>} : vector<1x128xbf16>, vector<128x128xbf16>, vector<1x128xf32> -> vector<1x128xf32>
    %c0_68 = arith.constant 0 : index
    %c0_69 = arith.constant 0 : index
    %108 = vector.load %arg9[%c0_68, %c0_69] : memref<1x128xf32, #tpu.memory_space<vmem>>, vector<1x128xf32>
    %109 = arith.addf %107, %108 : vector<1x128xf32>
    %cst_70 = arith.constant 3.000000e+00 : f32
    %110 = vector.broadcast %cst_70 : f32 to vector<1x128xf32>
    %111 = arith.addf %109, %110 : vector<1x128xf32>
    %cst_71 = arith.constant 0.000000e+00 : f32
    %cst_72 = arith.constant 6.000000e+00 : f32
    %112 = vector.broadcast %cst_71 : f32 to vector<1x128xf32>
    %113 = arith.maximumf %112, %111 : vector<1x128xf32>
    %114 = vector.broadcast %cst_72 : f32 to vector<1x128xf32>
    %115 = arith.minimumf %114, %113 : vector<1x128xf32>
    %cst_73 = arith.constant 0.166666672 : f32
    %116 = vector.broadcast %cst_73 : f32 to vector<1x128xf32>
    %117 = arith.mulf %115, %116 : vector<1x128xf32>
    %118 = vector.shape_cast %117 : vector<1x128xf32> to vector<1x1x128xf32>
    %119 = vector.broadcast %118 : vector<1x1x128xf32> to vector<16x16x128xf32>
    %120 = arith.mulf %92, %119 : vector<16x16x128xf32>
    %cst_74 = arith.constant 3.000000e+00 : f32
    %121 = vector.broadcast %cst_74 : f32 to vector<16x16x128xf32>
    %122 = arith.addf %120, %121 : vector<16x16x128xf32>
    %cst_75 = arith.constant 0.000000e+00 : f32
    %cst_76 = arith.constant 6.000000e+00 : f32
    %123 = vector.broadcast %cst_75 : f32 to vector<16x16x128xf32>
    %124 = arith.maximumf %123, %122 : vector<16x16x128xf32>
    %125 = vector.broadcast %cst_76 : f32 to vector<16x16x128xf32>
    %126 = arith.minimumf %125, %124 : vector<16x16x128xf32>
    %cst_77 = arith.constant 0.166666672 : f32
    %127 = vector.broadcast %cst_77 : f32 to vector<16x16x128xf32>
    %128 = arith.mulf %126, %127 : vector<16x16x128xf32>
    %129 = arith.mulf %120, %128 : vector<16x16x128xf32>
    %130 = vector.shape_cast %129 : vector<16x16x128xf32> to vector<256x128xf32>
    %131 = arith.truncf %130 : vector<256x128xf32> to vector<256x128xbf16>
    %c0_78 = arith.constant 0 : index
    %c0_79 = arith.constant 0 : index
    %132 = vector.load %arg10[%c0_78, %c0_79] : memref<128x128xbf16, #tpu.memory_space<vmem>>, vector<128x128xbf16>
    %cst_80 = arith.constant dense<0.000000e+00> : vector<256x128xf32>
    %133 = tpu.matmul %131, %132, %cst_80 {dimension_numbers = #tpu.dot_dimension_numbers<[1], [0], [0], [1], [0, 0, 1, 1], [], []>} : vector<256x128xbf16>, vector<128x128xbf16>, vector<256x128xf32> -> vector<256x128xf32>
    %c0_81 = arith.constant 0 : index
    %c0_82 = arith.constant 0 : index
    %134 = vector.load %arg11[%c0_81, %c0_82] : memref<1x128xf32, #tpu.memory_space<vmem>>, vector<1x128xf32>
    %135 = vector.broadcast %134 : vector<1x128xf32> to vector<256x128xf32>
    %136 = arith.addf %133, %135 : vector<256x128xf32>
    %137 = arith.extf %1 : vector<256x128xbf16> to vector<256x128xf32>
    %138 = arith.addf %136, %137 : vector<256x128xf32>
    %139 = arith.truncf %138 : vector<256x128xf32> to vector<256x128xbf16>
    %c0_83 = arith.constant 0 : index
    %c0_84 = arith.constant 0 : index
    %c0_85 = arith.constant 0 : index
    %140 = vector.load %arg12[%c0_83, %c0_84, %c0_85] : memref<1x256x128xbf16, #tpu.memory_space<vmem>>, vector<1x256x128xbf16>
    %141 = vector.shape_cast %140 : vector<1x256x128xbf16> to vector<256x128xbf16>
    %142 = vector.shape_cast %139 : vector<256x128xbf16> to vector<1x256x128xbf16>
    tpu.vector_store %arg12[%c0_83, %c0_84, %c0_85], %142 {strides = array<i32>} : memref<1x256x128xbf16, #tpu.memory_space<vmem>>, vector<1x256x128xbf16>,
    return
  }
  func.func @transform_0(%arg0: i32) -> (i32, i32, i32) {
    %c0_i32 = arith.constant 0 : i32
    %c0_i32_0 = arith.constant 0 : i32
    %c0_i32_1 = arith.constant 0 : i32
    return %arg0, %c0_i32, %c0_i32_0 : i32, i32, i32
  }
  func.func @transform_1(%arg0: i32) -> (i32, i32) {
    %c0_i32 = arith.constant 0 : i32
    %c0_i32_0 = arith.constant 0 : i32
    %c0_i32_1 = arith.constant 0 : i32
    return %c0_i32, %c0_i32_0 : i32, i32
  }
  func.func @transform_2(%arg0: i32) -> (i32, i32) {
    %c0_i32 = arith.constant 0 : i32
    %c0_i32_0 = arith.constant 0 : i32
    %c0_i32_1 = arith.constant 0 : i32
    return %c0_i32, %c0_i32_0 : i32, i32
  }
  func.func @transform_3(%arg0: i32) -> (i32, i32) {
    %c0_i32 = arith.constant 0 : i32
    %c0_i32_0 = arith.constant 0 : i32
    %c0_i32_1 = arith.constant 0 : i32
    return %c0_i32, %c0_i32_0 : i32, i32
  }
  func.func @transform_4(%arg0: i32) -> (i32, i32) {
    %c0_i32 = arith.constant 0 : i32
    %c0_i32_0 = arith.constant 0 : i32
    %c0_i32_1 = arith.constant 0 : i32
    return %c0_i32, %c0_i32_0 : i32, i32
  }
  func.func @transform_5(%arg0: i32) -> (i32, i32) {
    %c0_i32 = arith.constant 0 : i32
    %c0_i32_0 = arith.constant 0 : i32
    %c0_i32_1 = arith.constant 0 : i32
    return %c0_i32, %c0_i32_0 : i32, i32
  }
  func.func @transform_6(%arg0: i32) -> (i32, i32) {
    %c0_i32 = arith.constant 0 : i32
    %c0_i32_0 = arith.constant 0 : i32
    %c0_i32_1 = arith.constant 0 : i32
    return %c0_i32, %c0_i32_0 : i32, i32
  }
  func.func @transform_7(%arg0: i32) -> (i32, i32) {
    %c0_i32 = arith.constant 0 : i32
    %c0_i32_0 = arith.constant 0 : i32
    %c0_i32_1 = arith.constant 0 : i32
    return %c0_i32, %c0_i32_0 : i32, i32
  }
  func.func @transform_8(%arg0: i32) -> (i32, i32) {
    %c0_i32 = arith.constant 0 : i32
    %c0_i32_0 = arith.constant 0 : i32
    %c0_i32_1 = arith.constant 0 : i32
    return %c0_i32, %c0_i32_0 : i32, i32
  }
  func.func @transform_9(%arg0: i32) -> (i32, i32) {
    %c0_i32 = arith.constant 0 : i32
    %c0_i32_0 = arith.constant 0 : i32
    %c0_i32_1 = arith.constant 0 : i32
    return %c0_i32, %c0_i32_0 : i32, i32
  }
  func.func @transform_10(%arg0: i32) -> (i32, i32) {
    %c0_i32 = arith.constant 0 : i32
    %c0_i32_0 = arith.constant 0 : i32
    %c0_i32_1 = arith.constant 0 : i32
    return %c0_i32, %c0_i32_0 : i32, i32
  }
  func.func @transform_11(%arg0: i32) -> (i32, i32, i32) {
    %c0_i32 = arith.constant 0 : i32
    %c0_i32_0 = arith.constant 0 : i32
    %c0_i32_1 = arith.constant 0 : i32
    return %arg0, %c0_i32, %c0_i32_0 : i32, i32, i32
  }
}

</mosaic_0001>

<llo_original>
// kernel: tpu_custom_call.1
$region0: #{tpu_custom_call.1}
  #allocation0 [shape = 'u32[]', space=smem, size = 0x4, offset = 0x4, fixed_abs, tag = 'smem constant byte address 0x4 - core index']
  #allocation1 [shape = 'u32[144,128]{1,0:T(1,128)}', space=vmem, size = 0x12000, scoped, tag = 'internal scratch']
  #allocation2 [shape = 'f32[18,24,128]{2,1,0:T(8,128)}', space=vmem, size = 0x36000, scoped, tag = 'scratch operand']
  %s0 = inlined_call_operand.hbm [shape: bf16[2,256,128], index: 0, kind: input, shape index: {}]
  %s1 = inlined_call_operand.hbm [shape: bf16[128,128], index: 1, kind: input, shape index: {}]
  %s2 = inlined_call_operand.vmem [shape: f32[1,128], index: 2, kind: input, shape index: {}]
  %s3 = inlined_call_operand.hbm [shape: f32[9,128], index: 3, kind: input, shape index: {}]
  %s4 = inlined_call_operand.vmem [shape: f32[1,128], index: 4, kind: input, shape index: {}]
  %s5 = inlined_call_operand.hbm [shape: bf16[128,128], index: 5, kind: input, shape index: {}]
  %s6 = inlined_call_operand.vmem [shape: f32[1,128], index: 6, kind: input, shape index: {}]
  %s7 = inlined_call_operand.hbm [shape: bf16[128,128], index: 7, kind: input, shape index: {}]
  %s8 = inlined_call_operand.vmem [shape: f32[1,128], index: 8, kind: input, shape index: {}]
  %s9 = inlined_call_operand.hbm [shape: bf16[128,128], index: 9, kind: input, shape index: {}]
  %s10 = inlined_call_operand.vmem [shape: f32[1,128], index: 10, kind: input, shape index: {}]
  %s11 = inlined_call_operand.hbm [shape: bf16[2,256,128], index: 11, kind: output, shape index: {}]
  %s12 = sld [smem:[#allocation0]]
  $region101: #{tpu_custom_call.1} parent=0
    _
  %s14 = ssub.s32 1, %s12
  %s15 = scalar_select 0, %s14, %s12
  $region1: #{tpu_custom_call.1} parent=0
    #allocation3 [shape = 'u8[131072]{0}', space=vmem, size = 0x20000, scoped, tag = 'input window, operand 0']
    #allocation4 [shape = 's32[2]{0}', space=sflag, size = 0x8, scoped, tag = 'scoped memory for tpu_custom_call.1']
    #allocation5 [shape = 's32[2]{0}', space=sflag, size = 0x8, scoped, tag = 'scoped memory for tpu_custom_call.1']
    #allocation6 [shape = 'u8[32768]{0}', space=vmem, size = 0x8000, scoped, tag = 'input window, operand 1, single buffered']
    #allocation7 [shape = 's32[1]{0}', space=sflag, size = 0x4, scoped, tag = 'scoped memory for tpu_custom_call.1']
    #allocation8 [shape = 'u8[8192]{0}', space=vmem, size = 0x2000, scoped, tag = 'input window, operand 3, single buffered']
    #allocation9 [shape = 'u8[32768]{0}', space=vmem, size = 0x8000, scoped, tag = 'input window, operand 5, single buffered']
    #allocation10 [shape = 's32[1]{0}', space=sflag, size = 0x4, scoped, tag = 'scoped memory for tpu_custom_call.1']
    #allocation11 [shape = 'u8[32768]{0}', space=vmem, size = 0x8000, scoped, tag = 'input window, operand 7, single buffered']
    #allocation12 [shape = 'u8[32768]{0}', space=vmem, size = 0x8000, scoped, tag = 'input window, operand 9, single buffered']
    #allocation13 [shape = 's32[1]{0}', space=sflag, size = 0x4, scoped, tag = 'scoped memory for tpu_custom_call.1']
    #allocation14 [shape = 'u8[131072]{0}', space=vmem, size = 0x20000, scoped, tag = 'output window, operand 0']
    %16 = vsyncpa [#allocation4], 0
    %s17 = scalar_lea.sflag [#allocation4], 1
    %18 = vsyncpa %s17, 0
    %19 = vsyncpa [#allocation7], 0
    %20 = vsyncpa [#allocation10], 0
    %21 = vsyncpa [#allocation13], 0
    %22 = vsyncpa [#allocation5], 0
    %s23 = scalar_lea.sflag [#allocation5], 1
    %24 = vsyncpa %s23, 0
    loop: start=0, step=1, limit=4
    $region2: #{tpu_custom_call.1} parent=1 // loop_pre_header
      _
    $region3: #{tpu_custom_call.1} parent=1 // loop_header
      %s26 = sphi 0, %s30
      %p27 = scmp.ge.s32.totalorder %s26, 4
      %s36 = sphi 0, %s38
      %s39 = sphi 0, %s36
      %s40 = sphi 0, %s39
      %s56 = sphi 0, %s40
      %s60 = sphi 0, %s60
      %s62 = sphi 0, %s60
      %s63 = sphi 0, %s62
      %s77 = sphi 0, %s63
      %s81 = sphi 0, %s81
      %s83 = sphi 0, %s81
      %s84 = sphi 0, %s83
      %s98 = sphi 0, %s84
      %s102 = sphi 0, %s102
      %s104 = sphi 0, %s102
      %s105 = sphi 0, %s104
      %s119 = sphi 0, %s105
      %s123 = sphi 0, %s123
      %s125 = sphi 0, %s123
      %s126 = sphi 0, %s125
      %s140 = sphi 0, %s126
      %s144 = sphi 0, %s144
      %s146 = sphi 0, %s144
      %s147 = sphi 0, %s146
      %s161 = sphi 0, %s147
      %s165 = sphi 0, %s165
      %s167 = sphi 0, %s165
      %s168 = sphi 0, %s167
      %s182 = sphi 0, %s168
      %s186 = sphi 0, %s186
      %s188 = sphi 0, %s186
      %s189 = sphi 0, %s188
      %s203 = sphi 0, %s189
      %s207 = sphi 0, %s207
      %s209 = sphi 0, %s207
      %s210 = sphi 0, %s209
      %s224 = sphi 0, %s210
      %s228 = sphi 0, %s228
      %s230 = sphi 0, %s228
      %s231 = sphi 0, %s230
      %s245 = sphi 0, %s231
      %s249 = sphi 0, %s249
      %s251 = sphi 0, %s249
      %s252 = sphi 0, %s251
      %s266 = sphi 0, %s252
      %s272 = sphi 0, %s274
      %s275 = sphi 0, %s272
      %s276 = sphi 0, %s275
      %s292 = sphi 0, %s276
    $region4: #{tpu_custom_call.1} parent=1 // loop_header_branch
      %29 = sbr.rel (%p27) target = $region8
    $region5: #{tpu_custom_call.1} parent=1 // loop_body
      %s31 = ssub.s32 %s26, 1
      %s32 = ssub.s32 %s26, 2
      %s33 = sadd.s32 %s26, 1
      %s34 = ssub.s32 %s26, %s33
      %p35 = scmp.eq.s32.totalorder %s34, 0
      %s37 = sadd.s32 %s36, 1
      %s38 = scalar_select %p35, %s36, %s37
      %p41 = pneg %p35
      %p42 = scmp.eq.s32.totalorder %s26, 1
      %p43 = por %p41, %p42
      %p44 = scmp.ne.s32.totalorder %s36, %s39
      %p45 = scmp.eq.s32.totalorder %s26, 0
      %p46 = por %p44, %p45
      %p47 = scmp.ne.s32.totalorder %s36, %s39
      %p48 = scmp.eq.s32.totalorder %s31, 1
      %p49 = por %p47, %p48
      %p50 = scmp.ne.s32.totalorder %s39, %s40
      %p51 = scmp.eq.s32.totalorder %s31, 0
      %p52 = por %p50, %p51
      %p53 = scmp.ne.s32.totalorder %s39, %s40
      %p54 = scmp.eq.s32.totalorder %s32, 1
      %p55 = por %p53, %p54
      %p57 = scmp.ne.s32.totalorder %s40, %s56
      %p58 = scmp.eq.s32.totalorder %s32, 0
      %p59 = por %p57, %p58
      %s61 = sadd.s32 %s60, 1
      %p64 = scmp.eq.s32.totalorder %s26, 1
      %p65 = scmp.ne.s32.totalorder %s60, %s62
      %p66 = scmp.eq.s32.totalorder %s26, 0
      %p67 = por %p65, %p66
      %p68 = scmp.ne.s32.totalorder %s60, %s62
      %p69 = scmp.eq.s32.totalorder %s31, 1
      %p70 = por %p68, %p69
      %p71 = scmp.ne.s32.totalorder %s62, %s63
      %p72 = scmp.eq.s32.totalorder %s31, 0
      %p73 = por %p71, %p72
      %p74 = scmp.ne.s32.totalorder %s62, %s63
      %p75 = scmp.eq.s32.totalorder %s32, 1
      %p76 = por %p74, %p75
      %p78 = scmp.ne.s32.totalorder %s63, %s77
      %p79 = scmp.eq.s32.totalorder %s32, 0
      %p80 = por %p78, %p79
      %s82 = sadd.s32 %s81, 1
      %p85 = scmp.eq.s32.totalorder %s26, 1
      %p86 = scmp.ne.s32.totalorder %s81, %s83
      %p87 = scmp.eq.s32.totalorder %s26, 0
      %p88 = por %p86, %p87
      %p89 = scmp.ne.s32.totalorder %s81, %s83
      %p90 = scmp.eq.s32.totalorder %s31, 1
      %p91 = por %p89, %p90
      %p92 = scmp.ne.s32.totalorder %s83, %s84
      %p93 = scmp.eq.s32.totalorder %s31, 0
      %p94 = por %p92, %p93
      %p95 = scmp.ne.s32.totalorder %s83, %s84
      %p96 = scmp.eq.s32.totalorder %s32, 1
      %p97 = por %p95, %p96
      %p99 = scmp.ne.s32.totalorder %s84, %s98
      %p100 = scmp.eq.s32.totalorder %s32, 0
      %p101 = por %p99, %p100
      %s103 = sadd.s32 %s102, 1
      %p106 = scmp.eq.s32.totalorder %s26, 1
      %p107 = scmp.ne.s32.totalorder %s102, %s104
      %p108 = scmp.eq.s32.totalorder %s26, 0
      %p109 = por %p107, %p108
      %p110 = scmp.ne.s32.totalorder %s102, %s104
      %p111 = scmp.eq.s32.totalorder %s31, 1
      %p112 = por %p110, %p111
      %p113 = scmp.ne.s32.totalorder %s104, %s105
      %p114 = scmp.eq.s32.totalorder %s31, 0
      %p115 = por %p113, %p114
      %p116 = scmp.ne.s32.totalorder %s104, %s105
      %p117 = scmp.eq.s32.totalorder %s32, 1
      %p118 = por %p116, %p117
      %p120 = scmp.ne.s32.totalorder %s105, %s119
      %p121 = scmp.eq.s32.totalorder %s32, 0
      %p122 = por %p120, %p121
      %s124 = sadd.s32 %s123, 1
      %p127 = scmp.eq.s32.totalorder %s26, 1
      %p128 = scmp.ne.s32.totalorder %s123, %s125
      %p129 = scmp.eq.s32.totalorder %s26, 0
      %p130 = por %p128, %p129
      %p131 = scmp.ne.s32.totalorder %s123, %s125
      %p132 = scmp.eq.s32.totalorder %s31, 1
      %p133 = por %p131, %p132
      %p134 = scmp.ne.s32.totalorder %s125, %s126
      %p135 = scmp.eq.s32.totalorder %s31, 0
      %p136 = por %p134, %p135
      %p137 = scmp.ne.s32.totalorder %s125, %s126
      %p138 = scmp.eq.s32.totalorder %s32, 1
      %p139 = por %p137, %p138
      %p141 = scmp.ne.s32.totalorder %s126, %s140
      %p142 = scmp.eq.s32.totalorder %s32, 0
      %p143 = por %p141, %p142
      %s145 = sadd.s32 %s144, 1
      %p148 = scmp.eq.s32.totalorder %s26, 1
      %p149 = scmp.ne.s32.totalorder %s144, %s146
      %p150 = scmp.eq.s32.totalorder %s26, 0
      %p151 = por %p149, %p150
      %p152 = scmp.ne.s32.totalorder %s144, %s146
      %p153 = scmp.eq.s32.totalorder %s31, 1
      %p154 = por %p152, %p153
      %p155 = scmp.ne.s32.totalorder %s146, %s147
      %p156 = scmp.eq.s32.totalorder %s31, 0
      %p157 = por %p155, %p156
      %p158 = scmp.ne.s32.totalorder %s146, %s147
      %p159 = scmp.eq.s32.totalorder %s32, 1
      %p160 = por %p158, %p159
      %p162 = scmp.ne.s32.totalorder %s147, %s161
      %p163 = scmp.eq.s32.totalorder %s32, 0
      %p164 = por %p162, %p163
      %s166 = sadd.s32 %s165, 1
      %p169 = scmp.eq.s32.totalorder %s26, 1
      %p170 = scmp.ne.s32.totalorder %s165, %s167
      %p171 = scmp.eq.s32.totalorder %s26, 0
      %p172 = por %p170, %p171
      %p173 = scmp.ne.s32.totalorder %s165, %s167
      %p174 = scmp.eq.s32.totalorder %s31, 1
      %p175 = por %p173, %p174
      %p176 = scmp.ne.s32.totalorder %s167, %s168
      %p177 = scmp.eq.s32.totalorder %s31, 0
      %p178 = por %p176, %p177
      %p179 = scmp.ne.s32.totalorder %s167, %s168
      %p180 = scmp.eq.s32.totalorder %s32, 1
      %p181 = por %p179, %p180
      %p183 = scmp.ne.s32.totalorder %s168, %s182
      %p184 = scmp.eq.s32.totalorder %s32, 0
      %p185 = por %p183, %p184
      %s187 = sadd.s32 %s186, 1
      %p190 = scmp.eq.s32.totalorder %s26, 1
      %p191 = scmp.ne.s32.totalorder %s186, %s188
      %p192 = scmp.eq.s32.totalorder %s26, 0
      %p193 = por %p191, %p192
      %p194 = scmp.ne.s32.totalorder %s186, %s188
      %p195 = scmp.eq.s32.totalorder %s31, 1
      %p196 = por %p194, %p195
      %p197 = scmp.ne.s32.totalorder %s188, %s189
      %p198 = scmp.eq.s32.totalorder %s31, 0
      %p199 = por %p197, %p198
      %p200 = scmp.ne.s32.totalorder %s188, %s189
      %p201 = scmp.eq.s32.totalorder %s32, 1
      %p202 = por %p200, %p201
      %p204 = scmp.ne.s32.totalorder %s189, %s203
      %p205 = scmp.eq.s32.totalorder %s32, 0
      %p206 = por %p204, %p205
      %s208 = sadd.s32 %s207, 1
      %p211 = scmp.eq.s32.totalorder %s26, 1
      %p212 = scmp.ne.s32.totalorder %s207, %s209
      %p213 = scmp.eq.s32.totalorder %s26, 0
      %p214 = por %p212, %p213
      %p215 = scmp.ne.s32.totalorder %s207, %s209
      %p216 = scmp.eq.s32.totalorder %s31, 1
      %p217 = por %p215, %p216
      %p218 = scmp.ne.s32.totalorder %s209, %s210
      %p219 = scmp.eq.s32.totalorder %s31, 0
      %p220 = por %p218, %p219
      %p221 = scmp.ne.s32.totalorder %s209, %s210
      %p222 = scmp.eq.s32.totalorder %s32, 1
      %p223 = por %p221, %p222
      %p225 = scmp.ne.s32.totalorder %s210, %s224
      %p226 = scmp.eq.s32.totalorder %s32, 0
      %p227 = por %p225, %p226
      %s229 = sadd.s32 %s228, 1
      %p232 = scmp.eq.s32.totalorder %s26, 1
      %p233 = scmp.ne.s32.totalorder %s228, %s230
      %p234 = scmp.eq.s32.totalorder %s26, 0
      %p235 = por %p233, %p234
      %p236 = scmp.ne.s32.totalorder %s228, %s230
      %p237 = scmp.eq.s32.totalorder %s31, 1
      %p238 = por %p236, %p237
      %p239 = scmp.ne.s32.totalorder %s230, %s231
      %p240 = scmp.eq.s32.totalorder %s31, 0
      %p241 = por %p239, %p240
      %p242 = scmp.ne.s32.totalorder %s230, %s231
      %p243 = scmp.eq.s32.totalorder %s32, 1
      %p244 = por %p242, %p243
      %p246 = scmp.ne.s32.totalorder %s231, %s245
      %p247 = scmp.eq.s32.totalorder %s32, 0
      %p248 = por %p246, %p247
      %s250 = sadd.s32 %s249, 1
      %p253 = scmp.eq.s32.totalorder %s26, 1
      %p254 = scmp.ne.s32.totalorder %s249, %s251
      %p255 = scmp.eq.s32.totalorder %s26, 0
      %p256 = por %p254, %p255
      %p257 = scmp.ne.s32.totalorder %s249, %s251
      %p258 = scmp.eq.s32.totalorder %s31, 1
      %p259 = por %p257, %p258
      %p260 = scmp.ne.s32.totalorder %s251, %s252
      %p261 = scmp.eq.s32.totalorder %s31, 0
      %p262 = por %p260, %p261
      %p263 = scmp.ne.s32.totalorder %s251, %s252
      %p264 = scmp.eq.s32.totalorder %s32, 1
      %p265 = por %p263, %p264
      %p267 = scmp.ne.s32.totalorder %s252, %s266
      %p268 = scmp.eq.s32.totalorder %s32, 0
      %p269 = por %p267, %p268
      %s270 = ssub.s32 %s26, %s33
      %p271 = scmp.eq.s32.totalorder %s270, 0
      %s273 = sadd.s32 %s272, 1
      %s274 = scalar_select %p271, %s272, %s273
      %p277 = pneg %p271
      %p278 = scmp.eq.s32.totalorder %s26, 1
      %p279 = por %p277, %p278
      %p280 = scmp.ne.s32.totalorder %s272, %s275
      %p281 = scmp.eq.s32.totalorder %s26, 0
      %p282 = por %p280, %p281
      %p283 = scmp.ne.s32.totalorder %s272, %s275
      %p284 = scmp.eq.s32.totalorder %s31, 1
      %p285 = por %p283, %p284
      %p286 = scmp.ne.s32.totalorder %s275, %s276
      %p287 = scmp.eq.s32.totalorder %s31, 0
      %p288 = por %p286, %p287
      %p289 = scmp.ne.s32.totalorder %s275, %s276
      %p290 = scmp.eq.s32.totalorder %s32, 1
      %p291 = por %p289, %p290
      %p293 = scmp.ne.s32.totalorder %s276, %s292
      %p294 = scmp.eq.s32.totalorder %s32, 0
      %p295 = por %p293, %p294
      %p296 = scmp.le.s32.totalorder 1, %s26
      %p297 = scmp.lt.s32.totalorder %s26, 3
      %p298 = pnand %p296, %p297
      %p299 = pneg %p298
      // Predicated region
      $region9: #{tpu_custom_call.1} parent=5 // pred_check
        _
      $region10: #{tpu_custom_call.1} parent=5 // pred_check_branch
        %301 = sbr.rel (%p298) target = $region12
      $region11: #{tpu_custom_call.1} parent=5 // pred_region
        %s302 = ssub.s32 %s26, 1
        // Predicated region
        $region13: #{tpu_custom_call.1} parent=11 // pred_check
          %p303 = pneg %p73
        $region14: #{tpu_custom_call.1} parent=11 // pred_check_branch
          %305 = sbr.rel (%p303) target = $region16
        $region15: #{tpu_custom_call.1} parent=11 // pred_region
          %s307 = ssub.s32 1024, 1024
          %308 = vsyncadd [#allocation7], %s307
          %s309 = sshll.u32 [#allocation6], 4
          %s310 = int_to_ptr.vmem [resolvable:$true] %s309
          %315 = dma.hbm_to_vmem [thread:$0]  %s1, 1024, %s310, [#allocation7], 64, 64, 4
        $region16: #{tpu_custom_call.1} parent=11 // pred_fallthru
          _
        // Predicated region
        $region17: #{tpu_custom_call.1} parent=11 // pred_check
          %p316 = pneg %p94
        $region18: #{tpu_custom_call.1} parent=11 // pred_check_branch
          %318 = sbr.rel (%p316) target = $region20
        $region19: #{tpu_custom_call.1} parent=11 // pred_region
          _
        $region20: #{tpu_custom_call.1} parent=11 // pred_fallthru
          _
        // Predicated region
        $region21: #{tpu_custom_call.1} parent=11 // pred_check
          %p319 = pneg %p115
        $region22: #{tpu_custom_call.1} parent=11 // pred_check_branch
          %321 = sbr.rel (%p319) target = $region24
        $region23: #{tpu_custom_call.1} parent=11 // pred_region
          %s323 = ssub.s32 256, 256
          %324 = vsyncadd [#allocation7], %s323
          %s325 = sshll.u32 [#allocation8], 4
          %s326 = int_to_ptr.vmem [resolvable:$true] %s325
          %331 = dma.hbm_to_vmem [thread:$0]  %s3, 256, %s326, [#allocation7], 128, 128, 8
        $region24: #{tpu_custom_call.1} parent=11 // pred_fallthru
          _
        // Predicated region
        $region25: #{tpu_custom_call.1} parent=11 // pred_check
          %p332 = pneg %p136
        $region26: #{tpu_custom_call.1} parent=11 // pred_check_branch
          %334 = sbr.rel (%p332) target = $region28
        $region27: #{tpu_custom_call.1} parent=11 // pred_region
          _
        $region28: #{tpu_custom_call.1} parent=11 // pred_fallthru
          _
        // Predicated region
        $region29: #{tpu_custom_call.1} parent=11 // pred_check
          %p335 = pneg %p157
        $region30: #{tpu_custom_call.1} parent=11 // pred_check_branch
          %337 = sbr.rel (%p335) target = $region32
        $region31: #{tpu_custom_call.1} parent=11 // pred_region
          %s339 = ssub.s32 1024, 1024
          %340 = vsyncadd [#allocation10], %s339
          %s341 = sshll.u32 [#allocation9], 4
          %s342 = int_to_ptr.vmem [resolvable:$true] %s341
          %347 = dma.hbm_to_vmem [thread:$0]  %s5, 1024, %s342, [#allocation10], 64, 64, 4
        $region32: #{tpu_custom_call.1} parent=11 // pred_fallthru
          _
        // Predicated region
        $region33: #{tpu_custom_call.1} parent=11 // pred_check
          %p348 = pneg %p178
        $region34: #{tpu_custom_call.1} parent=11 // pred_check_branch
          %350 = sbr.rel (%p348) target = $region36
        $region35: #{tpu_custom_call.1} parent=11 // pred_region
          _
        $region36: #{tpu_custom_call.1} parent=11 // pred_fallthru
          _
        // Predicated region
        $region37: #{tpu_custom_call.1} parent=11 // pred_check
          %p351 = pneg %p199
        $region38: #{tpu_custom_call.1} parent=11 // pred_check_branch
          %353 = sbr.rel (%p351) target = $region40
        $region39: #{tpu_custom_call.1} parent=11 // pred_region
          %s355 = ssub.s32 1024, 1024
          %356 = vsyncadd [#allocation10], %s355
          %s357 = sshll.u32 [#allocation11], 4
          %s358 = int_to_ptr.vmem [resolvable:$true] %s357
          %363 = dma.hbm_to_vmem [thread:$0]  %s7, 1024, %s358, [#allocation10], 64, 64, 4
        $region40: #{tpu_custom_call.1} parent=11 // pred_fallthru
          _
        // Predicated region
        $region41: #{tpu_custom_call.1} parent=11 // pred_check
          %p364 = pneg %p220
        $region42: #{tpu_custom_call.1} parent=11 // pred_check_branch
          %366 = sbr.rel (%p364) target = $region44
        $region43: #{tpu_custom_call.1} parent=11 // pred_region
          _
        $region44: #{tpu_custom_call.1} parent=11 // pred_fallthru
          _
        // Predicated region
        $region45: #{tpu_custom_call.1} parent=11 // pred_check
          %p367 = pneg %p241
        $region46: #{tpu_custom_call.1} parent=11 // pred_check_branch
          %369 = sbr.rel (%p367) target = $region48
        $region47: #{tpu_custom_call.1} parent=11 // pred_region
          %s371 = ssub.s32 1024, 1024
          %372 = vsyncadd [#allocation13], %s371
          %s373 = sshll.u32 [#allocation12], 4
          %s374 = int_to_ptr.vmem [resolvable:$true] %s373
          %379 = dma.hbm_to_vmem [thread:$0]  %s9, 1024, %s374, [#allocation13], 64, 64, 4
        $region48: #{tpu_custom_call.1} parent=11 // pred_fallthru
          _
        // Predicated region
        $region49: #{tpu_custom_call.1} parent=11 // pred_check
          %p380 = pneg %p262
        $region50: #{tpu_custom_call.1} parent=11 // pred_check_branch
          %382 = sbr.rel (%p380) target = $region52
        $region51: #{tpu_custom_call.1} parent=11 // pred_region
          _
        $region52: #{tpu_custom_call.1} parent=11 // pred_fallthru
          _
      $region12: #{tpu_custom_call.1} parent=5 // pred_fallthru
        _
      %p383 = scmp.lt.s32.totalorder %s26, 2
      // Predicated region
      $region53: #{tpu_custom_call.1} parent=5 // pred_check
        %p384 = pneg %p383
      $region54: #{tpu_custom_call.1} parent=5 // pred_check_branch
        %386 = sbr.rel (%p384) target = $region56
      $region55: #{tpu_custom_call.1} parent=5 // pred_region
        // Predicated region
        $region57: #{tpu_custom_call.1} parent=55 // pred_check
          %p387 = pneg %p46
        $region58: #{tpu_custom_call.1} parent=55 // pred_check_branch
          %389 = sbr.rel (%p387) target = $region60
        $region59: #{tpu_custom_call.1} parent=55 // pred_region
          %s390 = sand.u32 %s36, 1
          %s391 = scalar_lea.sflag [#allocation4], %s390
          %s392 = sand.u32 %s36, 1
          %s393 = smul.addr %s392, 128
          %s394 = scalar_lea.vmem [#allocation3], %s393
          %s396 = ssub.s32 2048, 2048
          %397 = vsyncadd %s391, %s396
          %s398 = smul.addr %s26, 32
          %s399 = smul.addr %s398, 64
          %s400 = scalar_lea.hbm %s0, %s399
          %s401 = sshll.u32 %s394, 4
          %s402 = int_to_ptr.vmem [resolvable:$true] %s401
          %407 = dma.hbm_to_vmem [thread:$0]  %s400, 2048, %s402, %s391, 64, 64, 4
        $region60: #{tpu_custom_call.1} parent=55 // pred_fallthru
          _
      $region56: #{tpu_custom_call.1} parent=5 // pred_fallthru
        _
      %p408 = scmp.le.s32.totalorder 1, %s26
      %p409 = scmp.lt.s32.totalorder %s26, 3
      %p410 = pnand %p408, %p409
      %p411 = pneg %p410
      // Predicated region
      $region61: #{tpu_custom_call.1} parent=5 // pred_check
        _
      $region62: #{tpu_custom_call.1} parent=5 // pred_check_branch
        %413 = sbr.rel (%p410) target = $region64
      $region63: #{tpu_custom_call.1} parent=5 // pred_region
        %s414 = ssub.s32 %s26, 1
        %s415 = sand.u32 %s39, 1
        %s416 = scalar_lea.sflag [#allocation4], %s415
        %s417 = sand.u32 %s39, 1
        %s418 = smul.addr %s417, 128
        %s419 = scalar_lea.vmem [#allocation3], %s418
        // Predicated region
        $region65: #{tpu_custom_call.1} parent=63 // pred_check
          %p420 = pneg %p52
        $region66: #{tpu_custom_call.1} parent=63 // pred_check_branch
          %422 = sbr.rel (%p420) target = $region68
        $region67: #{tpu_custom_call.1} parent=63 // pred_region
          %423 = dma.done %s416, 2048
        $region68: #{tpu_custom_call.1} parent=63 // pred_fallthru
          _
        // Predicated region
        $region69: #{tpu_custom_call.1} parent=63 // pred_check
          %p424 = pneg %p73
        $region70: #{tpu_custom_call.1} parent=63 // pred_check_branch
          %426 = sbr.rel (%p424) target = $region72
        $region71: #{tpu_custom_call.1} parent=63 // pred_region
          %427 = dma.done [#allocation7], 1024
        $region72: #{tpu_custom_call.1} parent=63 // pred_fallthru
          _
        // Predicated region
        $region73: #{tpu_custom_call.1} parent=63 // pred_check
          %p428 = pneg %p115
        $region74: #{tpu_custom_call.1} parent=63 // pred_check_branch
          %430 = sbr.rel (%p428) target = $region76
        $region75: #{tpu_custom_call.1} parent=63 // pred_region
          %431 = dma.done [#allocation7], 256
        $region76: #{tpu_custom_call.1} parent=63 // pred_fallthru
          _
        // Predicated region
        $region77: #{tpu_custom_call.1} parent=63 // pred_check
          %p432 = pneg %p157
        $region78: #{tpu_custom_call.1} parent=63 // pred_check_branch
          %434 = sbr.rel (%p432) target = $region80
        $region79: #{tpu_custom_call.1} parent=63 // pred_region
          %435 = dma.done [#allocation10], 1024
        $region80: #{tpu_custom_call.1} parent=63 // pred_fallthru
          _
        // Predicated region
        $region81: #{tpu_custom_call.1} parent=63 // pred_check
          %p436 = pneg %p199
        $region82: #{tpu_custom_call.1} parent=63 // pred_check_branch
          %438 = sbr.rel (%p436) target = $region84
        $region83: #{tpu_custom_call.1} parent=63 // pred_region
          %439 = dma.done [#allocation10], 1024
        $region84: #{tpu_custom_call.1} parent=63 // pred_fallthru
          _
        // Predicated region
        $region85: #{tpu_custom_call.1} parent=63 // pred_check
          %p440 = pneg %p241
        $region86: #{tpu_custom_call.1} parent=63 // pred_check_branch
          %442 = sbr.rel (%p440) target = $region88
        $region87: #{tpu_custom_call.1} parent=63 // pred_region
          %443 = dma.done [#allocation13], 1024
        $region88: #{tpu_custom_call.1} parent=63 // pred_fallthru
          _
        %s444 = sand.u32 %s39, 1
        %s445 = scalar_lea.sflag [#allocation4], %s444
        %s446 = sand.u32 %s39, 1
        %s447 = smul.addr %s446, 128
        %s448 = scalar_lea.vmem [#allocation3], %s447
        %p449 = pneg %p52
        %p450 = pneg %p49
        %p451 = pneg %p73
        %p452 = pneg %p70
        %p453 = pneg %p94
        %p454 = pneg %p91
        %p455 = pneg %p115
        %p456 = pneg %p112
        %p457 = pneg %p136
        %p458 = pneg %p133
        %p459 = pneg %p157
        %p460 = pneg %p154
        %p461 = pneg %p178
        %p462 = pneg %p175
        %p463 = pneg %p199
        %p464 = pneg %p196
        %p465 = pneg %p220
        %p466 = pneg %p217
        %p467 = pneg %p241
        %p468 = pneg %p238
        %p469 = pneg %p262
        %p470 = pneg %p259
        %p471 = pneg %p288
        %p472 = pneg %p285
        %s473 = sand.u32 %s275, 1
        %s474 = scalar_lea.sflag [#allocation5], %s473
        %s475 = sand.u32 %s275, 1
        %s476 = smul.addr %s475, 128
        %s477 = scalar_lea.vmem [#allocation14], %s476
        %v479 = vld [vmem:[%s419] sm:$0xf]
        %v480 = vld [vmem:[%s419 + $0x4] sm:$0xf]
        %v481 = vld [vmem:[%s419 + $0x8] sm:$0xf]
        %v482 = vld [vmem:[%s419 + $0xc] sm:$0xf]
        %v483 = vld [vmem:[%s419 + $0x10] sm:$0xf]
        %v484 = vld [vmem:[%s419 + $0x14] sm:$0xf]
        %v485 = vld [vmem:[%s419 + $0x18] sm:$0xf]
        %v486 = vld [vmem:[%s419 + $0x1c] sm:$0xf]
        %v487 = vld [vmem:[%s419 + $0x20] sm:$0xf]
        %v488 = vld [vmem:[%s419 + $0x24] sm:$0xf]
        %v489 = vld [vmem:[%s419 + $0x28] sm:$0xf]
        %v490 = vld [vmem:[%s419 + $0x2c] sm:$0xf]
        %v491 = vld [vmem:[%s419 + $0x30] sm:$0xf]
        %v492 = vld [vmem:[%s419 + $0x34] sm:$0xf]
        %v493 = vld [vmem:[%s419 + $0x38] sm:$0xf]
        %v494 = vld [vmem:[%s419 + $0x3c] sm:$0xf]
        %v495 = vld [vmem:[%s419 + $0x40] sm:$0xf]
        %v496 = vld [vmem:[%s419 + $0x44] sm:$0xf]
        %v497 = vld [vmem:[%s419 + $0x48] sm:$0xf]
        %v498 = vld [vmem:[%s419 + $0x4c] sm:$0xf]
        %v499 = vld [vmem:[%s419 + $0x50] sm:$0xf]
        %v500 = vld [vmem:[%s419 + $0x54] sm:$0xf]
        %v501 = vld [vmem:[%s419 + $0x58] sm:$0xf]
        %v502 = vld [vmem:[%s419 + $0x5c] sm:$0xf]
        %v503 = vld [vmem:[%s419 + $0x60] sm:$0xf]
        %v504 = vld [vmem:[%s419 + $0x64] sm:$0xf]
        %v505 = vld [vmem:[%s419 + $0x68] sm:$0xf]
        %v506 = vld [vmem:[%s419 + $0x6c] sm:$0xf]
        %v507 = vld [vmem:[%s419 + $0x70] sm:$0xf]
        %v508 = vld [vmem:[%s419 + $0x74] sm:$0xf]
        %v509 = vld [vmem:[%s419 + $0x78] sm:$0xf]
        %v510 = vld [vmem:[%s419 + $0x7c] sm:$0xf]
        %v511 = vld [vmem:[#allocation6] sm:$0xf]
        %v512 = vld [vmem:[#allocation6 + $0x4] sm:$0xf]
        %v513 = vld [vmem:[#allocation6 + $0x8] sm:$0xf]
        %v514 = vld [vmem:[#allocation6 + $0xc] sm:$0xf]
        %v515 = vld [vmem:[#allocation6 + $0x10] sm:$0xf]
        %v516 = vld [vmem:[#allocation6 + $0x14] sm:$0xf]
        %v517 = vld [vmem:[#allocation6 + $0x18] sm:$0xf]
        %v518 = vld [vmem:[#allocation6 + $0x1c] sm:$0xf]
        %v519 = vld [vmem:[#allocation6 + $0x20] sm:$0xf]
        %v520 = vld [vmem:[#allocation6 + $0x24] sm:$0xf]
        %v521 = vld [vmem:[#allocation6 + $0x28] sm:$0xf]
        %v522 = vld [vmem:[#allocation6 + $0x2c] sm:$0xf]
        %v523 = vld [vmem:[#allocation6 + $0x30] sm:$0xf]
        %v524 = vld [vmem:[#allocation6 + $0x34] sm:$0xf]
        %v525 = vld [vmem:[#allocation6 + $0x38] sm:$0xf]
        %v526 = vld [vmem:[#allocation6 + $0x3c] sm:$0xf]
        %v527 = vld [vmem:[%s2] sm:$0x1]
        %v529 = vlaneseq
        %v530 = vshrl.u32 %v529, 7
        %v531 = vsub.s32 0, %v530
        %v532 = vrot.slane %v527, %v531
        %v566 = vunpack.c.l.b16 %v479
        %v567 = vunpack.c.l.b16 %v480
        %v568 = vunpack.c.l.b16 %v481
        %v569 = vunpack.c.l.b16 %v482
        %v570 = vunpack.c.l.b16 %v483
        %v571 = vunpack.c.l.b16 %v484
        %v572 = vunpack.c.l.b16 %v485
        %v573 = vunpack.c.l.b16 %v486
        %v574 = vunpack.c.l.b16 %v487
        %v575 = vunpack.c.l.b16 %v488
        %v576 = vunpack.c.l.b16 %v489
        %v577 = vunpack.c.l.b16 %v490
        %v578 = vunpack.c.l.b16 %v491
        %v579 = vunpack.c.l.b16 %v492
        %v580 = vunpack.c.l.b16 %v493
        %v581 = vunpack.c.l.b16 %v494
        %v582 = vunpack.c.l.b16 %v495
        %v583 = vunpack.c.l.b16 %v496
        %v584 = vunpack.c.l.b16 %v497
        %v585 = vunpack.c.l.b16 %v498
        %v586 = vunpack.c.l.b16 %v499
        %v587 = vunpack.c.l.b16 %v500
        %v588 = vunpack.c.l.b16 %v501
        %v589 = vunpack.c.l.b16 %v502
        %v590 = vunpack.c.l.b16 %v503
        %v591 = vunpack.c.l.b16 %v504
        %v592 = vunpack.c.l.b16 %v505
        %v593 = vunpack.c.l.b16 %v506
        %v594 = vunpack.c.l.b16 %v507
        %v595 = vunpack.c.l.b16 %v508
        %v596 = vunpack.c.l.b16 %v509
        %v597 = vunpack.c.l.b16 %v510
        %v598 = vpack.c.b16 %v567, %v566
        %v599 = vpack.c.b16 %v569, %v568
        %v600 = vpack.c.b16 %v571, %v570
        %v601 = vpack.c.b16 %v573, %v572
        %v602 = vpack.c.b16 %v575, %v574
        %v603 = vpack.c.b16 %v577, %v576
        %v604 = vpack.c.b16 %v579, %v578
        %v605 = vpack.c.b16 %v581, %v580
        %v606 = vpack.c.b16 %v583, %v582
        %v607 = vpack.c.b16 %v585, %v584
        %v608 = vpack.c.b16 %v587, %v586
        %v609 = vpack.c.b16 %v589, %v588
        %v610 = vpack.c.b16 %v591, %v590
        %v611 = vpack.c.b16 %v593, %v592
        %v612 = vpack.c.b16 %v595, %v594
        %v613 = vpack.c.b16 %v597, %v596
        %v646 = vunpack.c.l.b16 %v511
        %v647 = vunpack.c.l.b16 %v512
        %v648 = vunpack.c.l.b16 %v513
        %v649 = vunpack.c.l.b16 %v514
        %v650 = vunpack.c.l.b16 %v515
        %v651 = vunpack.c.l.b16 %v516
        %v652 = vunpack.c.l.b16 %v517
        %v653 = vunpack.c.l.b16 %v518
        %v654 = vunpack.c.l.b16 %v519
        %v655 = vunpack.c.l.b16 %v520
        %v656 = vunpack.c.l.b16 %v521
        %v657 = vunpack.c.l.b16 %v522
        %v658 = vunpack.c.l.b16 %v523
        %v659 = vunpack.c.l.b16 %v524
        %v660 = vunpack.c.l.b16 %v525
        %v661 = vunpack.c.l.b16 %v526
        %v662 = vpack.c.b16 %v647, %v646
        %v663 = vpack.c.b16 %v649, %v648
        %v664 = vpack.c.b16 %v651, %v650
        %v665 = vpack.c.b16 %v653, %v652
        %v666 = vpack.c.b16 %v655, %v654
        %v667 = vpack.c.b16 %v657, %v656
        %v668 = vpack.c.b16 %v659, %v658
        %v669 = vpack.c.b16 %v661, %v660
        %678 = vmatprep.subr.bf16.mxu0 0
        %679 = vmatpush1.bf16.msra.mxu0 %v662
        %680 = vmatprep.subr.bf16.mxu0 0
        %681 = vmatpush1.bf16.msra.mxu0 %v663
        %682 = vmatprep.subr.bf16.mxu0 0
        %683 = vmatpush1.bf16.msra.mxu0 %v664
        %684 = vmatprep.subr.bf16.mxu0 0
        %685 = vmatpush1.bf16.msra.mxu0 %v665
        %686 = vmatprep.subr.bf16.mxu0 0
        %687 = vmatpush1.bf16.msra.mxu0 %v666
        %688 = vmatprep.subr.bf16.mxu0 0
        %689 = vmatpush1.bf16.msra.mxu0 %v667
        %690 = vmatprep.subr.bf16.mxu0 0
        %691 = vmatpush1.bf16.msra.mxu0 %v668
        %692 = vmatprep.subr.bf16.mxu0 0
        %693 = vmatpush1.bf16.msra.mxu0 %v669
        %694 = vmatprep.subr.bf16.mxu0 0
        %695 = vmatpush1.bf16.msra.mxu0 0
        %696 = vmatprep.subr.bf16.mxu0 0
        %697 = vmatpush1.bf16.msra.mxu0 0
        %698 = vmatprep.subr.bf16.mxu0 0
        %699 = vmatpush1.bf16.msra.mxu0 0
        %700 = vmatprep.subr.bf16.mxu0 0
        %701 = vmatpush1.bf16.msra.mxu0 0
        %702 = vmatprep.subr.bf16.mxu0 0
        %703 = vmatpush1.bf16.msra.mxu0 0
        %704 = vmatprep.subr.bf16.mxu0 0
        %705 = vmatpush1.bf16.msra.mxu0 0
        %706 = vmatprep.subr.bf16.mxu0 0
        %707 = vmatpush1.bf16.msra.mxu0 0
        %708 = vmatprep.subr.bf16.mxu0 0
        %709 = vmatpush1.bf16.msra.mxu0 0
        %710 = vmatprep.mubr.bf16.mxu0 0
        %711 = vmatmul.mubr.bf16.gmra.mrb[0].mxu0 %v598
        %v712 = vpop.f32.mrb[0].mxu0
        %v713 = vadd.f32 %v532, %v712
        %v714 = vpop.f32.mrb[0].mxu0
        %v715 = vpop.f32.mrb[0].mxu0
        %v716 = vadd.f32 %v532, %v715
        %v717 = vpop.f32.mrb[0].mxu0
        %718 = vmatprep.mubr.bf16.mxu0 0
        %719 = vmatmul.mubr.bf16.gmra.mrb[0].mxu0 %v599
        %v720 = vpop.f32.mrb[0].mxu0
        %v721 = vadd.f32 %v532, %v720
        %v722 = vpop.f32.mrb[0].mxu0
        %v723 = vpop.f32.mrb[0].mxu0
        %v724 = vadd.f32 %v532, %v723
        %v725 = vpop.f32.mrb[0].mxu0
        %726 = vmatprep.mubr.bf16.mxu0 0
        %727 = vmatmul.mubr.bf16.gmra.mrb[0].mxu0 %v600
        %v728 = vpop.f32.mrb[0].mxu0
        %v729 = vadd.f32 %v532, %v728
        %v730 = vpop.f32.mrb[0].mxu0
        %v731 = vpop.f32.mrb[0].mxu0
        %v732 = vadd.f32 %v532, %v731
        %v733 = vpop.f32.mrb[0].mxu0
        %734 = vmatprep.mubr.bf16.mxu0 0
        %735 = vmatmul.mubr.bf16.gmra.mrb[0].mxu0 %v601
        %v736 = vpop.f32.mrb[0].mxu0
        %v737 = vadd.f32 %v532, %v736
        %v738 = vpop.f32.mrb[0].mxu0
        %v739 = vpop.f32.mrb[0].mxu0
        %v740 = vadd.f32 %v532, %v739
        %v741 = vpop.f32.mrb[0].mxu0
        %742 = vmatprep.mubr.bf16.mxu0 0
        %743 = vmatmul.mubr.bf16.gmra.mrb[0].mxu0 %v602
        %v744 = vpop.f32.mrb[0].mxu0
        %v745 = vadd.f32 %v532, %v744
        %v746 = vpop.f32.mrb[0].mxu0
        %v747 = vpop.f32.mrb[0].mxu0
        %v748 = vadd.f32 %v532, %v747
        %v749 = vpop.f32.mrb[0].mxu0
        %750 = vmatprep.mubr.bf16.mxu0 0
        %751 = vmatmul.mubr.bf16.gmra.mrb[0].mxu0 %v603
        %v752 = vpop.f32.mrb[0].mxu0
        %v753 = vadd.f32 %v532, %v752
        %v754 = vpop.f32.mrb[0].mxu0
        %v755 = vpop.f32.mrb[0].mxu0
        %v756 = vadd.f32 %v532, %v755
        %v757 = vpop.f32.mrb[0].mxu0
        %758 = vmatprep.mubr.bf16.mxu0 0
        %759 = vmatmul.mubr.bf16.gmra.mrb[0].mxu0 %v604
        %v760 = vpop.f32.mrb[0].mxu0
        %v761 = vadd.f32 %v532, %v760
        %v762 = vpop.f32.mrb[0].mxu0
        %v763 = vpop.f32.mrb[0].mxu0
        %v764 = vadd.f32 %v532, %v763
        %v765 = vpop.f32.mrb[0].mxu0
        %766 = vmatprep.mubr.bf16.mxu0 0
        %767 = vmatmul.mubr.bf16.gmra.mrb[0].mxu0 %v605
        %v768 = vpop.f32.mrb[0].mxu0
        %v769 = vadd.f32 %v532, %v768
        %v770 = vpop.f32.mrb[0].mxu0
        %v771 = vpop.f32.mrb[0].mxu0
        %v772 = vadd.f32 %v532, %v771
        %v773 = vpop.f32.mrb[0].mxu0
        %774 = vmatprep.mubr.bf16.mxu0 0
        %775 = vmatmul.mubr.bf16.gmra.mrb[0].mxu0 %v606
        %v776 = vpop.f32.mrb[0].mxu0
        %v777 = vadd.f32 %v532, %v776
        %v778 = vpop.f32.mrb[0].mxu0
        %v779 = vpop.f32.mrb[0].mxu0
        %v780 = vadd.f32 %v532, %v779
        %v781 = vpop.f32.mrb[0].mxu0
        %782 = vmatprep.mubr.bf16.mxu0 0
        %783 = vmatmul.mubr.bf16.gmra.mrb[0].mxu0 %v607
        %v784 = vpop.f32.mrb[0].mxu0
        %v785 = vadd.f32 %v532, %v784
        %v786 = vpop.f32.mrb[0].mxu0
        %v787 = vpop.f32.mrb[0].mxu0
        %v788 = vadd.f32 %v532, %v787
        %v789 = vpop.f32.mrb[0].mxu0
        %790 = vmatprep.mubr.bf16.mxu0 0
        %791 = vmatmul.mubr.bf16.gmra.mrb[0].mxu0 %v608
        %v792 = vpop.f32.mrb[0].mxu0
        %v793 = vadd.f32 %v532, %v792
        %v794 = vpop.f32.mrb[0].mxu0
        %v795 = vpop.f32.mrb[0].mxu0
        %v796 = vadd.f32 %v532, %v795
        %v797 = vpop.f32.mrb[0].mxu0
        %798 = vmatprep.mubr.bf16.mxu0 0
        %799 = vmatmul.mubr.bf16.gmra.mrb[0].mxu0 %v609
        %v800 = vpop.f32.mrb[0].mxu0
        %v801 = vadd.f32 %v532, %v800
        %v802 = vpop.f32.mrb[0].mxu0
        %v803 = vpop.f32.mrb[0].mxu0
        %v804 = vadd.f32 %v532, %v803
        %v805 = vpop.f32.mrb[0].mxu0
        %806 = vmatprep.mubr.bf16.mxu0 0
        %807 = vmatmul.mubr.bf16.gmra.mrb[0].mxu0 %v610
        %v808 = vpop.f32.mrb[0].mxu0
        %v809 = vadd.f32 %v532, %v808
        %v810 = vpop.f32.mrb[0].mxu0
        %v811 = vpop.f32.mrb[0].mxu0
        %v812 = vadd.f32 %v532, %v811
        %v813 = vpop.f32.mrb[0].mxu0
        %814 = vmatprep.mubr.bf16.mxu0 0
        %815 = vmatmul.mubr.bf16.gmra.mrb[0].mxu0 %v611
        %v816 = vpop.f32.mrb[0].mxu0
        %v817 = vadd.f32 %v532, %v816
        %v818 = vpop.f32.mrb[0].mxu0
        %v819 = vpop.f32.mrb[0].mxu0
        %v820 = vadd.f32 %v532, %v819
        %v821 = vpop.f32.mrb[0].mxu0
        %822 = vmatprep.mubr.bf16.mxu0 0
        %823 = vmatmul.mubr.bf16.gmra.mrb[0].mxu0 %v612
        %v824 = vpop.f32.mrb[0].mxu0
        %v825 = vadd.f32 %v532, %v824
        %v826 = vpop.f32.mrb[0].mxu0
        %v827 = vpop.f32.mrb[0].mxu0
        %v828 = vadd.f32 %v532, %v827
        %v829 = vpop.f32.mrb[0].mxu0
        %830 = vmatprep.mubr.bf16.mxu0 0
        %831 = vmatmul.mubr.bf16.gmra.mrb[0].mxu0 %v613
        %v832 = vpop.f32.mrb[0].mxu0
        %v833 = vadd.f32 %v532, %v832
        %v834 = vpop.f32.mrb[0].mxu0
        %v835 = vpop.f32.mrb[0].mxu0
        %v836 = vadd.f32 %v532, %v835
        %v837 = vpop.f32.mrb[0].mxu0
        %838 = vdwg.mxu0
        %v839 = vadd.f32 %v713, 3.0
        %v840 = vadd.f32 %v716, 3.0
        %v841 = vadd.f32 %v721, 3.0
        %v842 = vadd.f32 %v724, 3.0
        %v843 = vadd.f32 %v729, 3.0
        %v844 = vadd.f32 %v732, 3.0
        %v845 = vadd.f32 %v737, 3.0
        %v846 = vadd.f32 %v740, 3.0
        %v847 = vadd.f32 %v745, 3.0
        %v848 = vadd.f32 %v748, 3.0
        %v849 = vadd.f32 %v753, 3.0
        %v850 = vadd.f32 %v756, 3.0
        %v851 = vadd.f32 %v761, 3.0
        %v852 = vadd.f32 %v764, 3.0
        %v853 = vadd.f32 %v769, 3.0
        %v854 = vadd.f32 %v772, 3.0
        %v855 = vadd.f32 %v777, 3.0
        %v856 = vadd.f32 %v780, 3.0
        %v857 = vadd.f32 %v785, 3.0
        %v858 = vadd.f32 %v788, 3.0
        %v859 = vadd.f32 %v793, 3.0
        %v860 = vadd.f32 %v796, 3.0
        %v861 = vadd.f32 %v801, 3.0
        %v862 = vadd.f32 %v804, 3.0
        %v863 = vadd.f32 %v809, 3.0
        %v864 = vadd.f32 %v812, 3.0
        %v865 = vadd.f32 %v817, 3.0
        %v866 = vadd.f32 %v820, 3.0
        %v867 = vadd.f32 %v825, 3.0
        %v868 = vadd.f32 %v828, 3.0
        %v869 = vadd.f32 %v833, 3.0
        %v870 = vadd.f32 %v836, 3.0
        %v871 = vmax.f32 %v839, 0.0
        %v872 = vmax.f32 %v840, 0.0
        %v873 = vmax.f32 %v841, 0.0
        %v874 = vmax.f32 %v842, 0.0
        %v875 = vmax.f32 %v843, 0.0
        %v876 = vmax.f32 %v844, 0.0
        %v877 = vmax.f32 %v845, 0.0
        %v878 = vmax.f32 %v846, 0.0
        %v879 = vmax.f32 %v847, 0.0
        %v880 = vmax.f32 %v848, 0.0
        %v881 = vmax.f32 %v849, 0.0
        %v882 = vmax.f32 %v850, 0.0
        %v883 = vmax.f32 %v851, 0.0
        %v884 = vmax.f32 %v852, 0.0
        %v885 = vmax.f32 %v853, 0.0
        %v886 = vmax.f32 %v854, 0.0
        %v887 = vmax.f32 %v855, 0.0
        %v888 = vmax.f32 %v856, 0.0
        %v889 = vmax.f32 %v857, 0.0
        %v890 = vmax.f32 %v858, 0.0
        %v891 = vmax.f32 %v859, 0.0
        %v892 = vmax.f32 %v860, 0.0
        %v893 = vmax.f32 %v861, 0.0
        %v894 = vmax.f32 %v862, 0.0
        %v895 = vmax.f32 %v863, 0.0
        %v896 = vmax.f32 %v864, 0.0
        %v897 = vmax.f32 %v865, 0.0
        %v898 = vmax.f32 %v866, 0.0
        %v899 = vmax.f32 %v867, 0.0
        %v900 = vmax.f32 %v868, 0.0
        %v901 = vmax.f32 %v869, 0.0
        %v902 = vmax.f32 %v870, 0.0
        %v903 = vmin.f32 %v871, 6.0
        %v904 = vmin.f32 %v872, 6.0
        %v905 = vmin.f32 %v873, 6.0
        %v906 = vmin.f32 %v874, 6.0
        %v907 = vmin.f32 %v875, 6.0
        %v908 = vmin.f32 %v876, 6.0
        %v909 = vmin.f32 %v877, 6.0
        %v910 = vmin.f32 %v878, 6.0
        %v911 = vmin.f32 %v879, 6.0
        %v912 = vmin.f32 %v880, 6.0
        %v913 = vmin.f32 %v881, 6.0
        %v914 = vmin.f32 %v882, 6.0
        %v915 = vmin.f32 %v883, 6.0
        %v916 = vmin.f32 %v884, 6.0
        %v917 = vmin.f32 %v885, 6.0
        %v918 = vmin.f32 %v886, 6.0
        %v919 = vmin.f32 %v887, 6.0
        %v920 = vmin.f32 %v888, 6.0
        %v921 = vmin.f32 %v889, 6.0
        %v922 = vmin.f32 %v890, 6.0
        %v923 = vmin.f32 %v891, 6.0
        %v924 = vmin.f32 %v892, 6.0
        %v925 = vmin.f32 %v893, 6.0
        %v926 = vmin.f32 %v894, 6.0
        %v927 = vmin.f32 %v895, 6.0
        %v928 = vmin.f32 %v896, 6.0
        %v929 = vmin.f32 %v897, 6.0
        %v930 = vmin.f32 %v898, 6.0
        %v931 = vmin.f32 %v899, 6.0
        %v932 = vmin.f32 %v900, 6.0
        %v933 = vmin.f32 %v901, 6.0
        %v934 = vmin.f32 %v902, 6.0
        %v935 = vmul.f32 %v903, 0.16666667
        %v936 = vmul.f32 %v904, 0.16666667
        %v937 = vmul.f32 %v905, 0.16666667
        %v938 = vmul.f32 %v906, 0.16666667
        %v939 = vmul.f32 %v907, 0.16666667
        %v940 = vmul.f32 %v908, 0.16666667
        %v941 = vmul.f32 %v909, 0.16666667
        %v942 = vmul.f32 %v910, 0.16666667
        %v943 = vmul.f32 %v911, 0.16666667
        %v944 = vmul.f32 %v912, 0.16666667
        %v945 = vmul.f32 %v913, 0.16666667
        %v946 = vmul.f32 %v914, 0.16666667
        %v947 = vmul.f32 %v915, 0.16666667
        %v948 = vmul.f32 %v916, 0.16666667
        %v949 = vmul.f32 %v917, 0.16666667
        %v950 = vmul.f32 %v918, 0.16666667
        %v951 = vmul.f32 %v919, 0.16666667
        %v952 = vmul.f32 %v920, 0.16666667
        %v953 = vmul.f32 %v921, 0.16666667
        %v954 = vmul.f32 %v922, 0.16666667
        %v955 = vmul.f32 %v923, 0.16666667
        %v956 = vmul.f32 %v924, 0.16666667
        %v957 = vmul.f32 %v925, 0.16666667
        %v958 = vmul.f32 %v926, 0.16666667
        %v959 = vmul.f32 %v927, 0.16666667
        %v960 = vmul.f32 %v928, 0.16666667
        %v961 = vmul.f32 %v929, 0.16666667
        %v962 = vmul.f32 %v930, 0.16666667
        %v963 = vmul.f32 %v931, 0.16666667
        %v964 = vmul.f32 %v932, 0.16666667
        %v965 = vmul.f32 %v933, 0.16666667
        %v966 = vmul.f32 %v934, 0.16666667
        %v967 = vmul.f32 %v713, %v935
        %v968 = vmul.f32 %v716, %v936
        %v969 = vmul.f32 %v721, %v937
        %v970 = vmul.f32 %v724, %v938
        %v971 = vmul.f32 %v729, %v939
        %v972 = vmul.f32 %v732, %v940
        %v973 = vmul.f32 %v737, %v941
        %v974 = vmul.f32 %v740, %v942
        %v975 = vmul.f32 %v745, %v943
        %v976 = vmul.f32 %v748, %v944
        %v977 = vmul.f32 %v753, %v945
        %v978 = vmul.f32 %v756, %v946
        %v979 = vmul.f32 %v761, %v947
        %v980 = vmul.f32 %v764, %v948
        %v981 = vmul.f32 %v769, %v949
        %v982 = vmul.f32 %v772, %v950
        %v983 = vmul.f32 %v777, %v951
        %v984 = vmul.f32 %v780, %v952
        %v985 = vmul.f32 %v785, %v953
        %v986 = vmul.f32 %v788, %v954
        %v987 = vmul.f32 %v793, %v955
        %v988 = vmul.f32 %v796, %v956
        %v989 = vmul.f32 %v801, %v957
        %v990 = vmul.f32 %v804, %v958
        %v991 = vmul.f32 %v809, %v959
        %v992 = vmul.f32 %v812, %v960
        %v993 = vmul.f32 %v817, %v961
        %v994 = vmul.f32 %v820, %v962
        %v995 = vmul.f32 %v825, %v963
        %v996 = vmul.f32 %v828, %v964
        %v997 = vmul.f32 %v833, %v965
        %v998 = vmul.f32 %v836, %v966
        %999 = vst [vmem:[#allocation2] sm:$0xff] 0.0
        %1000 = vst [vmem:[#allocation2 + $0x8] sm:$0xff] 0.0
        %1001 = vst [vmem:[#allocation2 + $0x10] sm:$0xff] 0.0
        %s1002 = scalar_lea.vmem [#allocation2], 24
        %1003 = vst [vmem:[%s1002] sm:$0x1] 0.0
        %1004 = vst [vmem:[%s1002 + $0x18] sm:$0x1] 0.0
        %1005 = vst [vmem:[%s1002 + $0x30] sm:$0x1] 0.0
        %1006 = vst [vmem:[%s1002 + $0x48] sm:$0x1] 0.0
        %1007 = vst [vmem:[%s1002 + $0x60] sm:$0x1] 0.0
        %1008 = vst [vmem:[%s1002 + $0x78] sm:$0x1] 0.0
        %1009 = vst [vmem:[%s1002 + $0x90] sm:$0x1] 0.0
        %1010 = vst [vmem:[%s1002 + $0xa8] sm:$0x1] 0.0
        %1011 = vst [vmem:[%s1002 + $0xc0] sm:$0x1] 0.0
        %1012 = vst [vmem:[%s1002 + $0xd8] sm:$0x1] 0.0
        %1013 = vst [vmem:[%s1002 + $0xf0] sm:$0x1] 0.0
        %1014 = vst [vmem:[%s1002 + $0x108] sm:$0x1] 0.0
        %1015 = vst [vmem:[%s1002 + $0x120] sm:$0x1] 0.0
        %1016 = vst [vmem:[%s1002 + $0x138] sm:$0x1] 0.0
        %1017 = vst [vmem:[%s1002 + $0x150] sm:$0x1] 0.0
        %1018 = vst [vmem:[%s1002 + $0x168] sm:$0x1] 0.0
        %s1019 = scalar_lea.vmem [#allocation2], 408
        %1020 = vst [vmem:[%s1019] sm:$0xff] 0.0
        %1021 = vst [vmem:[%s1019 + $0x8] sm:$0xff] 0.0
        %1022 = vst [vmem:[%s1019 + $0x10] sm:$0xff] 0.0
        %1023 = vst [vmem:[%s1002 + $0x11] sm:$0x7f] 0.0
        %1024 = vst [vmem:[%s1002 + $0x29] sm:$0x7f] 0.0
        %1025 = vst [vmem:[%s1002 + $0x41] sm:$0x7f] 0.0
        %1026 = vst [vmem:[%s1002 + $0x59] sm:$0x7f] 0.0
        %1027 = vst [vmem:[%s1002 + $0x71] sm:$0x7f] 0.0
        %1028 = vst [vmem:[%s1002 + $0x89] sm:$0x7f] 0.0
        %1029 = vst [vmem:[%s1002 + $0xa1] sm:$0x7f] 0.0
        %1030 = vst [vmem:[%s1002 + $0xb9] sm:$0x7f] 0.0
        %1031 = vst [vmem:[%s1002 + $0xd1] sm:$0x7f] 0.0
        %1032 = vst [vmem:[%s1002 + $0xe9] sm:$0x7f] 0.0
        %1033 = vst [vmem:[%s1002 + $0x101] sm:$0x7f] 0.0
        %1034 = vst [vmem:[%s1002 + $0x119] sm:$0x7f] 0.0
        %1035 = vst [vmem:[%s1002 + $0x131] sm:$0x7f] 0.0
        %1036 = vst [vmem:[%s1002 + $0x149] sm:$0x7f] 0.0
        %1037 = vst [vmem:[%s1002 + $0x161] sm:$0x7f] 0.0
        %1038 = vst [vmem:[%s1002 + $0x179] sm:$0x7f] 0.0
        %1039 = vst [vmem:[%s1002 + $0x1] sm:$0xff] %v967
        %1040 = vst [vmem:[%s1002 + $0x9] sm:$0xff] %v968
        %1041 = vst [vmem:[%s1002 + $0x19] sm:$0xff] %v969
        %1042 = vst [vmem:[%s1002 + $0x21] sm:$0xff] %v970
        %1043 = vst [vmem:[%s1002 + $0x31] sm:$0xff] %v971
        %1044 = vst [vmem:[%s1002 + $0x39] sm:$0xff] %v972
        %1045 = vst [vmem:[%s1002 + $0x49] sm:$0xff] %v973
        %1046 = vst [vmem:[%s1002 + $0x51] sm:$0xff] %v974
        %1047 = vst [vmem:[%s1002 + $0x61] sm:$0xff] %v975
        %1048 = vst [vmem:[%s1002 + $0x69] sm:$0xff] %v976
        %1049 = vst [vmem:[%s1002 + $0x79] sm:$0xff] %v977
        %1050 = vst [vmem:[%s1002 + $0x81] sm:$0xff] %v978
        %1051 = vst [vmem:[%s1002 + $0x91] sm:$0xff] %v979
        %1052 = vst [vmem:[%s1002 + $0x99] sm:$0xff] %v980
        %1053 = vst [vmem:[%s1002 + $0xa9] sm:$0xff] %v981
        %1054 = vst [vmem:[%s1002 + $0xb1] sm:$0xff] %v982
        %1055 = vst [vmem:[%s1002 + $0xc1] sm:$0xff] %v983
        %1056 = vst [vmem:[%s1002 + $0xc9] sm:$0xff] %v984
        %1057 = vst [vmem:[%s1002 + $0xd9] sm:$0xff] %v985
        %1058 = vst [vmem:[%s1002 + $0xe1] sm:$0xff] %v986
        %1059 = vst [vmem:[%s1002 + $0xf1] sm:$0xff] %v987
        %1060 = vst [vmem:[%s1002 + $0xf9] sm:$0xff] %v988
        %1061 = vst [vmem:[%s1002 + $0x109] sm:$0xff] %v989
        %1062 = vst [vmem:[%s1002 + $0x111] sm:$0xff] %v990
        %1063 = vst [vmem:[%s1002 + $0x121] sm:$0xff] %v991
        %1064 = vst [vmem:[%s1002 + $0x129] sm:$0xff] %v992
        %1065 = vst [vmem:[%s1002 + $0x139] sm:$0xff] %v993
        %1066 = vst [vmem:[%s1002 + $0x141] sm:$0xff] %v994
        %1067 = vst [vmem:[%s1002 + $0x151] sm:$0xff] %v995
        %1068 = vst [vmem:[%s1002 + $0x159] sm:$0xff] %v996
        %1069 = vst [vmem:[%s1002 + $0x169] sm:$0xff] %v997
        %1070 = vst [vmem:[%s1002 + $0x171] sm:$0xff] %v998
        %v1071 = vld [vmem:[#allocation8] sm:$0xff]
        %v1072 = vld [vmem:[#allocation8 + $0x8] sm:$0x1]
        %v1073 = vld [vmem:[#allocation2] sm:$0xff]
        %v1074 = vld [vmem:[#allocation2 + $0x8] sm:$0xff]
        %v1075 = vld [vmem:[#allocation2 + $0x18] sm:$0xff]
        %v1076 = vld [vmem:[#allocation2 + $0x20] sm:$0xff]
        %v1077 = vld [vmem:[#allocation2 + $0x30] sm:$0xff]
        %v1078 = vld [vmem:[#allocation2 + $0x38] sm:$0xff]
        %v1079 = vld [vmem:[#allocation2 + $0x48] sm:$0xff]
        %v1080 = vld [vmem:[#allocation2 + $0x50] sm:$0xff]
        %v1081 = vld [vmem:[#allocation2 + $0x60] sm:$0xff]
        %v1082 = vld [vmem:[#allocation2 + $0x68] sm:$0xff]
        %v1083 = vld [vmem:[#allocation2 + $0x78] sm:$0xff]
        %v1084 = vld [vmem:[#allocation2 + $0x80] sm:$0xff]
        %v1085 = vld [vmem:[#allocation2 + $0x90] sm:$0xff]
        %v1086 = vld [vmem:[#allocation2 + $0x98] sm:$0xff]
        %v1087 = vld [vmem:[#allocation2 + $0xa8] sm:$0xff]
        %v1088 = vld [vmem:[#allocation2 + $0xb0] sm:$0xff]
        %v1089 = vld [vmem:[#allocation2 + $0xc0] sm:$0xff]
        %v1090 = vld [vmem:[#allocation2 + $0xc8] sm:$0xff]
        %v1091 = vld [vmem:[#allocation2 + $0xd8] sm:$0xff]
        %v1092 = vld [vmem:[#allocation2 + $0xe0] sm:$0xff]
        %v1093 = vld [vmem:[#allocation2 + $0xf0] sm:$0xff]
        %v1094 = vld [vmem:[#allocation2 + $0xf8] sm:$0xff]
        %v1095 = vld [vmem:[#allocation2 + $0x108] sm:$0xff]
        %v1096 = vld [vmem:[#allocation2 + $0x110] sm:$0xff]
        %v1097 = vld [vmem:[#allocation2 + $0x120] sm:$0xff]
        %v1098 = vld [vmem:[#allocation2 + $0x128] sm:$0xff]
        %v1099 = vld [vmem:[#allocation2 + $0x138] sm:$0xff]
        %v1100 = vld [vmem:[#allocation2 + $0x140] sm:$0xff]
        %v1101 = vld [vmem:[#allocation2 + $0x150] sm:$0xff]
        %v1102 = vld [vmem:[#allocation2 + $0x158] sm:$0xff]
        %v1103 = vld [vmem:[#allocation2 + $0x168] sm:$0xff]
        %v1104 = vld [vmem:[#allocation2 + $0x170] sm:$0xff]
        %v1105 = vlaneseq
        %v1106 = vshrl.u32 %v1105, 7
        %v1107 = vsub.s32 0, %v1106
        %v1108 = vrot.slane %v1071, %v1107
        %v1109 = vmul.f32 %v1073, %v1108
        %v1110 = vmul.f32 %v1074, %v1108
        %v1111 = vmul.f32 %v1075, %v1108
        %v1112 = vmul.f32 %v1076, %v1108
        %v1113 = vmul.f32 %v1077, %v1108
        %v1114 = vmul.f32 %v1078, %v1108
        %v1115 = vmul.f32 %v1079, %v1108
        %v1116 = vmul.f32 %v1080, %v1108
        %v1117 = vmul.f32 %v1081, %v1108
        %v1118 = vmul.f32 %v1082, %v1108
        %v1119 = vmul.f32 %v1083, %v1108
        %v1120 = vmul.f32 %v1084, %v1108
        %v1121 = vmul.f32 %v1085, %v1108
        %v1122 = vmul.f32 %v1086, %v1108
        %v1123 = vmul.f32 %v1087, %v1108
        %v1124 = vmul.f32 %v1088, %v1108
        %v1125 = vmul.f32 %v1089, %v1108
        %v1126 = vmul.f32 %v1090, %v1108
        %v1127 = vmul.f32 %v1091, %v1108
        %v1128 = vmul.f32 %v1092, %v1108
        %v1129 = vmul.f32 %v1093, %v1108
        %v1130 = vmul.f32 %v1094, %v1108
        %v1131 = vmul.f32 %v1095, %v1108
        %v1132 = vmul.f32 %v1096, %v1108
        %v1133 = vmul.f32 %v1097, %v1108
        %v1134 = vmul.f32 %v1098, %v1108
        %v1135 = vmul.f32 %v1099, %v1108
        %v1136 = vmul.f32 %v1100, %v1108
        %v1137 = vmul.f32 %v1101, %v1108
        %v1138 = vmul.f32 %v1102, %v1108
        %v1139 = vmul.f32 %v1103, %v1108
        %v1140 = vmul.f32 %v1104, %v1108
        %v1141 = vld [vmem:[#allocation2 + $0x1] sm:$0xff]
        %v1142 = vld [vmem:[#allocation2 + $0x9] sm:$0xff]
        %v1143 = vld [vmem:[#allocation2 + $0x19] sm:$0xff]
        %v1144 = vld [vmem:[#allocation2 + $0x21] sm:$0xff]
        %v1145 = vld [vmem:[#allocation2 + $0x31] sm:$0xff]
        %v1146 = vld [vmem:[#allocation2 + $0x39] sm:$0xff]
        %v1147 = vld [vmem:[#allocation2 + $0x49] sm:$0xff]
        %v1148 = vld [vmem:[#allocation2 + $0x51] sm:$0xff]
        %v1149 = vld [vmem:[#allocation2 + $0x61] sm:$0xff]
        %v1150 = vld [vmem:[#allocation2 + $0x69] sm:$0xff]
        %v1151 = vld [vmem:[#allocation2 + $0x79] sm:$0xff]
        %v1152 = vld [vmem:[#allocation2 + $0x81] sm:$0xff]
        %v1153 = vld [vmem:[#allocation2 + $0x91] sm:$0xff]
        %v1154 = vld [vmem:[#allocation2 + $0x99] sm:$0xff]
        %v1155 = vld [vmem:[#allocation2 + $0xa9] sm:$0xff]
        %v1156 = vld [vmem:[#allocation2 + $0xb1] sm:$0xff]
        %v1157 = vld [vmem:[#allocation2 + $0xc1] sm:$0xff]
        %v1158 = vld [vmem:[#allocation2 + $0xc9] sm:$0xff]
        %v1159 = vld [vmem:[#allocation2 + $0xd9] sm:$0xff]
        %v1160 = vld [vmem:[#allocation2 + $0xe1] sm:$0xff]
        %v1161 = vld [vmem:[#allocation2 + $0xf1] sm:$0xff]
        %v1162 = vld [vmem:[#allocation2 + $0xf9] sm:$0xff]
        %v1163 = vld [vmem:[#allocation2 + $0x109] sm:$0xff]
        %v1164 = vld [vmem:[#allocation2 + $0x111] sm:$0xff]
        %v1165 = vld [vmem:[#allocation2 + $0x121] sm:$0xff]
        %v1166 = vld [vmem:[#allocation2 + $0x129] sm:$0xff]
        %v1167 = vld [vmem:[#allocation2 + $0x139] sm:$0xff]
        %v1168 = vld [vmem:[#allocation2 + $0x141] sm:$0xff]
        %v1169 = vld [vmem:[#allocation2 + $0x151] sm:$0xff]
        %v1170 = vld [vmem:[#allocation2 + $0x159] sm:$0xff]
        %v1171 = vld [vmem:[#allocation2 + $0x169] sm:$0xff]
        %v1172 = vld [vmem:[#allocation2 + $0x171] sm:$0xff]
        %v1173 = vlaneseq
        %v1174 = vshrl.u32 %v1173, 7
        %v1175 = vsub.s32 1, %v1174
        %v1176 = vrot.slane %v1071, %v1175
        %v1177 = vmul.f32 %v1141, %v1176
        %v1178 = vmul.f32 %v1142, %v1176
        %v1179 = vmul.f32 %v1143, %v1176
        %v1180 = vmul.f32 %v1144, %v1176
        %v1181 = vmul.f32 %v1145, %v1176
        %v1182 = vmul.f32 %v1146, %v1176
        %v1183 = vmul.f32 %v1147, %v1176
        %v1184 = vmul.f32 %v1148, %v1176
        %v1185 = vmul.f32 %v1149, %v1176
        %v1186 = vmul.f32 %v1150, %v1176
        %v1187 = vmul.f32 %v1151, %v1176
        %v1188 = vmul.f32 %v1152, %v1176
        %v1189 = vmul.f32 %v1153, %v1176
        %v1190 = vmul.f32 %v1154, %v1176
        %v1191 = vmul.f32 %v1155, %v1176
        %v1192 = vmul.f32 %v1156, %v1176
        %v1193 = vmul.f32 %v1157, %v1176
        %v1194 = vmul.f32 %v1158, %v1176
        %v1195 = vmul.f32 %v1159, %v1176
        %v1196 = vmul.f32 %v1160, %v1176
        %v1197 = vmul.f32 %v1161, %v1176
        %v1198 = vmul.f32 %v1162, %v1176
        %v1199 = vmul.f32 %v1163, %v1176
        %v1200 = vmul.f32 %v1164, %v1176
        %v1201 = vmul.f32 %v1165, %v1176
        %v1202 = vmul.f32 %v1166, %v1176
        %v1203 = vmul.f32 %v1167, %v1176
        %v1204 = vmul.f32 %v1168, %v1176
        %v1205 = vmul.f32 %v1169, %v1176
        %v1206 = vmul.f32 %v1170, %v1176
        %v1207 = vmul.f32 %v1171, %v1176
        %v1208 = vmul.f32 %v1172, %v1176
        %v1209 = vadd.f32 %v1109, %v1177
        %v1210 = vadd.f32 %v1110, %v1178
        %v1211 = vadd.f32 %v1111, %v1179
        %v1212 = vadd.f32 %v1112, %v1180
        %v1213 = vadd.f32 %v1113, %v1181
        %v1214 = vadd.f32 %v1114, %v1182
        %v1215 = vadd.f32 %v1115, %v1183
        %v1216 = vadd.f32 %v1116, %v1184
        %v1217 = vadd.f32 %v1117, %v1185
        %v1218 = vadd.f32 %v1118, %v1186
        %v1219 = vadd.f32 %v1119, %v1187
        %v1220 = vadd.f32 %v1120, %v1188
        %v1221 = vadd.f32 %v1121, %v1189
        %v1222 = vadd.f32 %v1122, %v1190
        %v1223 = vadd.f32 %v1123, %v1191
        %v1224 = vadd.f32 %v1124, %v1192
        %v1225 = vadd.f32 %v1125, %v1193
        %v1226 = vadd.f32 %v1126, %v1194
        %v1227 = vadd.f32 %v1127, %v1195
        %v1228 = vadd.f32 %v1128, %v1196
        %v1229 = vadd.f32 %v1129, %v1197
        %v1230 = vadd.f32 %v1130, %v1198
        %v1231 = vadd.f32 %v1131, %v1199
        %v1232 = vadd.f32 %v1132, %v1200
        %v1233 = vadd.f32 %v1133, %v1201
        %v1234 = vadd.f32 %v1134, %v1202
        %v1235 = vadd.f32 %v1135, %v1203
        %v1236 = vadd.f32 %v1136, %v1204
        %v1237 = vadd.f32 %v1137, %v1205
        %v1238 = vadd.f32 %v1138, %v1206
        %v1239 = vadd.f32 %v1139, %v1207
        %v1240 = vadd.f32 %v1140, %v1208
        %v1241 = vld [vmem:[#allocation2 + $0x2] sm:$0xff]
        %v1242 = vld [vmem:[#allocation2 + $0xa] sm:$0xff]
        %v1243 = vld [vmem:[#allocation2 + $0x1a] sm:$0xff]
        %v1244 = vld [vmem:[#allocation2 + $0x22] sm:$0xff]
        %v1245 = vld [vmem:[#allocation2 + $0x32] sm:$0xff]
        %v1246 = vld [vmem:[#allocation2 + $0x3a] sm:$0xff]
        %v1247 = vld [vmem:[#allocation2 + $0x4a] sm:$0xff]
        %v1248 = vld [vmem:[#allocation2 + $0x52] sm:$0xff]
        %v1249 = vld [vmem:[#allocation2 + $0x62] sm:$0xff]
        %v1250 = vld [vmem:[#allocation2 + $0x6a] sm:$0xff]
        %v1251 = vld [vmem:[#allocation2 + $0x7a] sm:$0xff]
        %v1252 = vld [vmem:[#allocation2 + $0x82] sm:$0xff]
        %v1253 = vld [vmem:[#allocation2 + $0x92] sm:$0xff]
        %v1254 = vld [vmem:[#allocation2 + $0x9a] sm:$0xff]
        %v1255 = vld [vmem:[#allocation2 + $0xaa] sm:$0xff]
        %v1256 = vld [vmem:[#allocation2 + $0xb2] sm:$0xff]
        %v1257 = vld [vmem:[#allocation2 + $0xc2] sm:$0xff]
        %v1258 = vld [vmem:[#allocation2 + $0xca] sm:$0xff]
        %v1259 = vld [vmem:[#allocation2 + $0xda] sm:$0xff]
        %v1260 = vld [vmem:[#allocation2 + $0xe2] sm:$0xff]
        %v1261 = vld [vmem:[#allocation2 + $0xf2] sm:$0xff]
        %v1262 = vld [vmem:[#allocation2 + $0xfa] sm:$0xff]
        %v1263 = vld [vmem:[#allocation2 + $0x10a] sm:$0xff]
        %v1264 = vld [vmem:[#allocation2 + $0x112] sm:$0xff]
        %v1265 = vld [vmem:[#allocation2 + $0x122] sm:$0xff]
        %v1266 = vld [vmem:[#allocation2 + $0x12a] sm:$0xff]
        %v1267 = vld [vmem:[#allocation2 + $0x13a] sm:$0xff]
        %v1268 = vld [vmem:[#allocation2 + $0x142] sm:$0xff]
        %v1269 = vld [vmem:[#allocation2 + $0x152] sm:$0xff]
        %v1270 = vld [vmem:[#allocation2 + $0x15a] sm:$0xff]
        %v1271 = vld [vmem:[#allocation2 + $0x16a] sm:$0xff]
        %v1272 = vld [vmem:[#allocation2 + $0x172] sm:$0xff]
        %v1273 = vlaneseq
        %v1274 = vshrl.u32 %v1273, 7
        %v1275 = vsub.s32 2, %v1274
        %v1276 = vrot.slane %v1071, %v1275
        %v1277 = vmul.f32 %v1241, %v1276
        %v1278 = vmul.f32 %v1242, %v1276
        %v1279 = vmul.f32 %v1243, %v1276
        %v1280 = vmul.f32 %v1244, %v1276
        %v1281 = vmul.f32 %v1245, %v1276
        %v1282 = vmul.f32 %v1246, %v1276
        %v1283 = vmul.f32 %v1247, %v1276
        %v1284 = vmul.f32 %v1248, %v1276
        %v1285 = vmul.f32 %v1249, %v1276
        %v1286 = vmul.f32 %v1250, %v1276
        %v1287 = vmul.f32 %v1251, %v1276
        %v1288 = vmul.f32 %v1252, %v1276
        %v1289 = vmul.f32 %v1253, %v1276
        %v1290 = vmul.f32 %v1254, %v1276
        %v1291 = vmul.f32 %v1255, %v1276
        %v1292 = vmul.f32 %v1256, %v1276
        %v1293 = vmul.f32 %v1257, %v1276
        %v1294 = vmul.f32 %v1258, %v1276
        %v1295 = vmul.f32 %v1259, %v1276
        %v1296 = vmul.f32 %v1260, %v1276
        %v1297 = vmul.f32 %v1261, %v1276
        %v1298 = vmul.f32 %v1262, %v1276
        %v1299 = vmul.f32 %v1263, %v1276
        %v1300 = vmul.f32 %v1264, %v1276
        %v1301 = vmul.f32 %v1265, %v1276
        %v1302 = vmul.f32 %v1266, %v1276
        %v1303 = vmul.f32 %v1267, %v1276
        %v1304 = vmul.f32 %v1268, %v1276
        %v1305 = vmul.f32 %v1269, %v1276
        %v1306 = vmul.f32 %v1270, %v1276
        %v1307 = vmul.f32 %v1271, %v1276
        %v1308 = vmul.f32 %v1272, %v1276
        %v1309 = vadd.f32 %v1209, %v1277
        %v1310 = vadd.f32 %v1210, %v1278
        %v1311 = vadd.f32 %v1211, %v1279
        %v1312 = vadd.f32 %v1212, %v1280
        %v1313 = vadd.f32 %v1213, %v1281
        %v1314 = vadd.f32 %v1214, %v1282
        %v1315 = vadd.f32 %v1215, %v1283
        %v1316 = vadd.f32 %v1216, %v1284
        %v1317 = vadd.f32 %v1217, %v1285
        %v1318 = vadd.f32 %v1218, %v1286
        %v1319 = vadd.f32 %v1219, %v1287
        %v1320 = vadd.f32 %v1220, %v1288
        %v1321 = vadd.f32 %v1221, %v1289
        %v1322 = vadd.f32 %v1222, %v1290
        %v1323 = vadd.f32 %v1223, %v1291
        %v1324 = vadd.f32 %v1224, %v1292
        %v1325 = vadd.f32 %v1225, %v1293
        %v1326 = vadd.f32 %v1226, %v1294
        %v1327 = vadd.f32 %v1227, %v1295
        %v1328 = vadd.f32 %v1228, %v1296
        %v1329 = vadd.f32 %v1229, %v1297
        %v1330 = vadd.f32 %v1230, %v1298
        %v1331 = vadd.f32 %v1231, %v1299
        %v1332 = vadd.f32 %v1232, %v1300
        %v1333 = vadd.f32 %v1233, %v1301
        %v1334 = vadd.f32 %v1234, %v1302
        %v1335 = vadd.f32 %v1235, %v1303
        %v1336 = vadd.f32 %v1236, %v1304
        %v1337 = vadd.f32 %v1237, %v1305
        %v1338 = vadd.f32 %v1238, %v1306
        %v1339 = vadd.f32 %v1239, %v1307
        %v1340 = vadd.f32 %v1240, %v1308
        %v1341 = vld [vmem:[%s1002] sm:$0xff]
        %v1342 = vld [vmem:[%s1002 + $0x8] sm:$0xff]
        %v1343 = vld [vmem:[%s1002 + $0x18] sm:$0xff]
        %v1344 = vld [vmem:[%s1002 + $0x20] sm:$0xff]
        %v1345 = vld [vmem:[%s1002 + $0x30] sm:$0xff]
        %v1346 = vld [vmem:[%s1002 + $0x38] sm:$0xff]
        %v1347 = vld [vmem:[%s1002 + $0x48] sm:$0xff]
        %v1348 = vld [vmem:[%s1002 + $0x50] sm:$0xff]
        %v1349 = vld [vmem:[%s1002 + $0x60] sm:$0xff]
        %v1350 = vld [vmem:[%s1002 + $0x68] sm:$0xff]
        %v1351 = vld [vmem:[%s1002 + $0x78] sm:$0xff]
        %v1352 = vld [vmem:[%s1002 + $0x80] sm:$0xff]
        %v1353 = vld [vmem:[%s1002 + $0x90] sm:$0xff]
        %v1354 = vld [vmem:[%s1002 + $0x98] sm:$0xff]
        %v1355 = vld [vmem:[%s1002 + $0xa8] sm:$0xff]
        %v1356 = vld [vmem:[%s1002 + $0xb0] sm:$0xff]
        %v1357 = vld [vmem:[%s1002 + $0xc0] sm:$0xff]
        %v1358 = vld [vmem:[%s1002 + $0xc8] sm:$0xff]
        %v1359 = vld [vmem:[%s1002 + $0xd8] sm:$0xff]
        %v1360 = vld [vmem:[%s1002 + $0xe0] sm:$0xff]
        %v1361 = vld [vmem:[%s1002 + $0xf0] sm:$0xff]
        %v1362 = vld [vmem:[%s1002 + $0xf8] sm:$0xff]
        %v1363 = vld [vmem:[%s1002 + $0x108] sm:$0xff]
        %v1364 = vld [vmem:[%s1002 + $0x110] sm:$0xff]
        %v1365 = vld [vmem:[%s1002 + $0x120] sm:$0xff]
        %v1366 = vld [vmem:[%s1002 + $0x128] sm:$0xff]
        %v1367 = vld [vmem:[%s1002 + $0x138] sm:$0xff]
        %v1368 = vld [vmem:[%s1002 + $0x140] sm:$0xff]
        %v1369 = vld [vmem:[%s1002 + $0x150] sm:$0xff]
        %v1370 = vld [vmem:[%s1002 + $0x158] sm:$0xff]
        %v1371 = vld [vmem:[%s1002 + $0x168] sm:$0xff]
        %v1372 = vld [vmem:[%s1002 + $0x170] sm:$0xff]
        %v1373 = vlaneseq
        %v1374 = vshrl.u32 %v1373, 7
        %v1375 = vsub.s32 3, %v1374
        %v1376 = vrot.slane %v1071, %v1375
        %v1377 = vmul.f32 %v1341, %v1376
        %v1378 = vmul.f32 %v1342, %v1376
        %v1379 = vmul.f32 %v1343, %v1376
        %v1380 = vmul.f32 %v1344, %v1376
        %v1381 = vmul.f32 %v1345, %v1376
        %v1382 = vmul.f32 %v1346, %v1376
        %v1383 = vmul.f32 %v1347, %v1376
        %v1384 = vmul.f32 %v1348, %v1376
        %v1385 = vmul.f32 %v1349, %v1376
        %v1386 = vmul.f32 %v1350, %v1376
        %v1387 = vmul.f32 %v1351, %v1376
        %v1388 = vmul.f32 %v1352, %v1376
        %v1389 = vmul.f32 %v1353, %v1376
        %v1390 = vmul.f32 %v1354, %v1376
        %v1391 = vmul.f32 %v1355, %v1376
        %v1392 = vmul.f32 %v1356, %v1376
        %v1393 = vmul.f32 %v1357, %v1376
        %v1394 = vmul.f32 %v1358, %v1376
        %v1395 = vmul.f32 %v1359, %v1376
        %v1396 = vmul.f32 %v1360, %v1376
        %v1397 = vmul.f32 %v1361, %v1376
        %v1398 = vmul.f32 %v1362, %v1376
        %v1399 = vmul.f32 %v1363, %v1376
        %v1400 = vmul.f32 %v1364, %v1376
        %v1401 = vmul.f32 %v1365, %v1376
        %v1402 = vmul.f32 %v1366, %v1376
        %v1403 = vmul.f32 %v1367, %v1376
        %v1404 = vmul.f32 %v1368, %v1376
        %v1405 = vmul.f32 %v1369, %v1376
        %v1406 = vmul.f32 %v1370, %v1376
        %v1407 = vmul.f32 %v1371, %v1376
        %v1408 = vmul.f32 %v1372, %v1376
        %v1409 = vadd.f32 %v1309, %v1377
        %v1410 = vadd.f32 %v1310, %v1378
        %v1411 = vadd.f32 %v1311, %v1379
        %v1412 = vadd.f32 %v1312, %v1380
        %v1413 = vadd.f32 %v1313, %v1381
        %v1414 = vadd.f32 %v1314, %v1382
        %v1415 = vadd.f32 %v1315, %v1383
        %v1416 = vadd.f32 %v1316, %v1384
        %v1417 = vadd.f32 %v1317, %v1385
        %v1418 = vadd.f32 %v1318, %v1386
        %v1419 = vadd.f32 %v1319, %v1387
        %v1420 = vadd.f32 %v1320, %v1388
        %v1421 = vadd.f32 %v1321, %v1389
        %v1422 = vadd.f32 %v1322, %v1390
        %v1423 = vadd.f32 %v1323, %v1391
        %v1424 = vadd.f32 %v1324, %v1392
        %v1425 = vadd.f32 %v1325, %v1393
        %v1426 = vadd.f32 %v1326, %v1394
        %v1427 = vadd.f32 %v1327, %v1395
        %v1428 = vadd.f32 %v1328, %v1396
        %v1429 = vadd.f32 %v1329, %v1397
        %v1430 = vadd.f32 %v1330, %v1398
        %v1431 = vadd.f32 %v1331, %v1399
        %v1432 = vadd.f32 %v1332, %v1400
        %v1433 = vadd.f32 %v1333, %v1401
        %v1434 = vadd.f32 %v1334, %v1402
        %v1435 = vadd.f32 %v1335, %v1403
        %v1436 = vadd.f32 %v1336, %v1404
        %v1437 = vadd.f32 %v1337, %v1405
        %v1438 = vadd.f32 %v1338, %v1406
        %v1439 = vadd.f32 %v1339, %v1407
        %v1440 = vadd.f32 %v1340, %v1408
        %v1441 = vld [vmem:[%s1002 + $0x1] sm:$0xff]
        %v1442 = vld [vmem:[%s1002 + $0x9] sm:$0xff]
        %v1443 = vld [vmem:[%s1002 + $0x19] sm:$0xff]
        %v1444 = vld [vmem:[%s1002 + $0x21] sm:$0xff]
        %v1445 = vld [vmem:[%s1002 + $0x31] sm:$0xff]
        %v1446 = vld [vmem:[%s1002 + $0x39] sm:$0xff]
        %v1447 = vld [vmem:[%s1002 + $0x49] sm:$0xff]
        %v1448 = vld [vmem:[%s1002 + $0x51] sm:$0xff]
        %v1449 = vld [vmem:[%s1002 + $0x61] sm:$0xff]
        %v1450 = vld [vmem:[%s1002 + $0x69] sm:$0xff]
        %v1451 = vld [vmem:[%s1002 + $0x79] sm:$0xff]
        %v1452 = vld [vmem:[%s1002 + $0x81] sm:$0xff]
        %v1453 = vld [vmem:[%s1002 + $0x91] sm:$0xff]
        %v1454 = vld [vmem:[%s1002 + $0x99] sm:$0xff]
        %v1455 = vld [vmem:[%s1002 + $0xa9] sm:$0xff]
        %v1456 = vld [vmem:[%s1002 + $0xb1] sm:$0xff]
        %v1457 = vld [vmem:[%s1002 + $0xc1] sm:$0xff]
        %v1458 = vld [vmem:[%s1002 + $0xc9] sm:$0xff]
        %v1459 = vld [vmem:[%s1002 + $0xd9] sm:$0xff]
        %v1460 = vld [vmem:[%s1002 + $0xe1] sm:$0xff]
        %v1461 = vld [vmem:[%s1002 + $0xf1] sm:$0xff]
        %v1462 = vld [vmem:[%s1002 + $0xf9] sm:$0xff]
        %v1463 = vld [vmem:[%s1002 + $0x109] sm:$0xff]
        %v1464 = vld [vmem:[%s1002 + $0x111] sm:$0xff]
        %v1465 = vld [vmem:[%s1002 + $0x121] sm:$0xff]
        %v1466 = vld [vmem:[%s1002 + $0x129] sm:$0xff]
        %v1467 = vld [vmem:[%s1002 + $0x139] sm:$0xff]
        %v1468 = vld [vmem:[%s1002 + $0x141] sm:$0xff]
        %v1469 = vld [vmem:[%s1002 + $0x151] sm:$0xff]
        %v1470 = vld [vmem:[%s1002 + $0x159] sm:$0xff]
        %v1471 = vld [vmem:[%s1002 + $0x169] sm:$0xff]
        %v1472 = vld [vmem:[%s1002 + $0x171] sm:$0xff]
        %v1473 = vlaneseq
        %v1474 = vshrl.u32 %v1473, 7
        %v1475 = vsub.s32 4, %v1474
        %v1476 = vrot.slane %v1071, %v1475
        %v1477 = vmul.f32 %v1441, %v1476
        %v1478 = vmul.f32 %v1442, %v1476
        %v1479 = vmul.f32 %v1443, %v1476
        %v1480 = vmul.f32 %v1444, %v1476
        %v1481 = vmul.f32 %v1445, %v1476
        %v1482 = vmul.f32 %v1446, %v1476
        %v1483 = vmul.f32 %v1447, %v1476
        %v1484 = vmul.f32 %v1448, %v1476
        %v1485 = vmul.f32 %v1449, %v1476
        %v1486 = vmul.f32 %v1450, %v1476
        %v1487 = vmul.f32 %v1451, %v1476
        %v1488 = vmul.f32 %v1452, %v1476
        %v1489 = vmul.f32 %v1453, %v1476
        %v1490 = vmul.f32 %v1454, %v1476
        %v1491 = vmul.f32 %v1455, %v1476
        %v1492 = vmul.f32 %v1456, %v1476
        %v1493 = vmul.f32 %v1457, %v1476
        %v1494 = vmul.f32 %v1458, %v1476
        %v1495 = vmul.f32 %v1459, %v1476
        %v1496 = vmul.f32 %v1460, %v1476
        %v1497 = vmul.f32 %v1461, %v1476
        %v1498 = vmul.f32 %v1462, %v1476
        %v1499 = vmul.f32 %v1463, %v1476
        %v1500 = vmul.f32 %v1464, %v1476
        %v1501 = vmul.f32 %v1465, %v1476
        %v1502 = vmul.f32 %v1466, %v1476
        %v1503 = vmul.f32 %v1467, %v1476
        %v1504 = vmul.f32 %v1468, %v1476
        %v1505 = vmul.f32 %v1469, %v1476
        %v1506 = vmul.f32 %v1470, %v1476
        %v1507 = vmul.f32 %v1471, %v1476
        %v1508 = vmul.f32 %v1472, %v1476
        %v1509 = vadd.f32 %v1409, %v1477
        %v1510 = vadd.f32 %v1410, %v1478
        %v1511 = vadd.f32 %v1411, %v1479
        %v1512 = vadd.f32 %v1412, %v1480
        %v1513 = vadd.f32 %v1413, %v1481
        %v1514 = vadd.f32 %v1414, %v1482
        %v1515 = vadd.f32 %v1415, %v1483
        %v1516 = vadd.f32 %v1416, %v1484
        %v1517 = vadd.f32 %v1417, %v1485
        %v1518 = vadd.f32 %v1418, %v1486
        %v1519 = vadd.f32 %v1419, %v1487
        %v1520 = vadd.f32 %v1420, %v1488
        %v1521 = vadd.f32 %v1421, %v1489
        %v1522 = vadd.f32 %v1422, %v1490
        %v1523 = vadd.f32 %v1423, %v1491
        %v1524 = vadd.f32 %v1424, %v1492
        %v1525 = vadd.f32 %v1425, %v1493
        %v1526 = vadd.f32 %v1426, %v1494
        %v1527 = vadd.f32 %v1427, %v1495
        %v1528 = vadd.f32 %v1428, %v1496
        %v1529 = vadd.f32 %v1429, %v1497
        %v1530 = vadd.f32 %v1430, %v1498
        %v1531 = vadd.f32 %v1431, %v1499
        %v1532 = vadd.f32 %v1432, %v1500
        %v1533 = vadd.f32 %v1433, %v1501
        %v1534 = vadd.f32 %v1434, %v1502
        %v1535 = vadd.f32 %v1435, %v1503
        %v1536 = vadd.f32 %v1436, %v1504
        %v1537 = vadd.f32 %v1437, %v1505
        %v1538 = vadd.f32 %v1438, %v1506
        %v1539 = vadd.f32 %v1439, %v1507
        %v1540 = vadd.f32 %v1440, %v1508
        %v1541 = vld [vmem:[%s1002 + $0x2] sm:$0xff]
        %v1542 = vld [vmem:[%s1002 + $0xa] sm:$0xff]
        %v1543 = vld [vmem:[%s1002 + $0x1a] sm:$0xff]
        %v1544 = vld [vmem:[%s1002 + $0x22] sm:$0xff]
        %v1545 = vld [vmem:[%s1002 + $0x32] sm:$0xff]
        %v1546 = vld [vmem:[%s1002 + $0x3a] sm:$0xff]
        %v1547 = vld [vmem:[%s1002 + $0x4a] sm:$0xff]
        %v1548 = vld [vmem:[%s1002 + $0x52] sm:$0xff]
        %v1549 = vld [vmem:[%s1002 + $0x62] sm:$0xff]
        %v1550 = vld [vmem:[%s1002 + $0x6a] sm:$0xff]
        %v1551 = vld [vmem:[%s1002 + $0x7a] sm:$0xff]
        %v1552 = vld [vmem:[%s1002 + $0x82] sm:$0xff]
        %v1553 = vld [vmem:[%s1002 + $0x92] sm:$0xff]
        %v1554 = vld [vmem:[%s1002 + $0x9a] sm:$0xff]
        %v1555 = vld [vmem:[%s1002 + $0xaa] sm:$0xff]
        %v1556 = vld [vmem:[%s1002 + $0xb2] sm:$0xff]
        %v1557 = vld [vmem:[%s1002 + $0xc2] sm:$0xff]
        %v1558 = vld [vmem:[%s1002 + $0xca] sm:$0xff]
        %v1559 = vld [vmem:[%s1002 + $0xda] sm:$0xff]
        %v1560 = vld [vmem:[%s1002 + $0xe2] sm:$0xff]
        %v1561 = vld [vmem:[%s1002 + $0xf2] sm:$0xff]
        %v1562 = vld [vmem:[%s1002 + $0xfa] sm:$0xff]
        %v1563 = vld [vmem:[%s1002 + $0x10a] sm:$0xff]
        %v1564 = vld [vmem:[%s1002 + $0x112] sm:$0xff]
        %v1565 = vld [vmem:[%s1002 + $0x122] sm:$0xff]
        %v1566 = vld [vmem:[%s1002 + $0x12a] sm:$0xff]
        %v1567 = vld [vmem:[%s1002 + $0x13a] sm:$0xff]
        %v1568 = vld [vmem:[%s1002 + $0x142] sm:$0xff]
        %v1569 = vld [vmem:[%s1002 + $0x152] sm:$0xff]
        %v1570 = vld [vmem:[%s1002 + $0x15a] sm:$0xff]
        %v1571 = vld [vmem:[%s1002 + $0x16a] sm:$0xff]
        %v1572 = vld [vmem:[%s1002 + $0x172] sm:$0xff]
        %v1573 = vlaneseq
        %v1574 = vshrl.u32 %v1573, 7
        %v1575 = vsub.s32 5, %v1574
        %v1576 = vrot.slane %v1071, %v1575
        %v1577 = vmul.f32 %v1541, %v1576
        %v1578 = vmul.f32 %v1542, %v1576
        %v1579 = vmul.f32 %v1543, %v1576
        %v1580 = vmul.f32 %v1544, %v1576
        %v1581 = vmul.f32 %v1545, %v1576
        %v1582 = vmul.f32 %v1546, %v1576
        %v1583 = vmul.f32 %v1547, %v1576
        %v1584 = vmul.f32 %v1548, %v1576
        %v1585 = vmul.f32 %v1549, %v1576
        %v1586 = vmul.f32 %v1550, %v1576
        %v1587 = vmul.f32 %v1551, %v1576
        %v1588 = vmul.f32 %v1552, %v1576
        %v1589 = vmul.f32 %v1553, %v1576
        %v1590 = vmul.f32 %v1554, %v1576
        %v1591 = vmul.f32 %v1555, %v1576
        %v1592 = vmul.f32 %v1556, %v1576
        %v1593 = vmul.f32 %v1557, %v1576
        %v1594 = vmul.f32 %v1558, %v1576
        %v1595 = vmul.f32 %v1559, %v1576
        %v1596 = vmul.f32 %v1560, %v1576
        %v1597 = vmul.f32 %v1561, %v1576
        %v1598 = vmul.f32 %v1562, %v1576
        %v1599 = vmul.f32 %v1563, %v1576
        %v1600 = vmul.f32 %v1564, %v1576
        %v1601 = vmul.f32 %v1565, %v1576
        %v1602 = vmul.f32 %v1566, %v1576
        %v1603 = vmul.f32 %v1567, %v1576
        %v1604 = vmul.f32 %v1568, %v1576
        %v1605 = vmul.f32 %v1569, %v1576
        %v1606 = vmul.f32 %v1570, %v1576
        %v1607 = vmul.f32 %v1571, %v1576
        %v1608 = vmul.f32 %v1572, %v1576
        %v1609 = vadd.f32 %v1509, %v1577
        %v1610 = vadd.f32 %v1510, %v1578
        %v1611 = vadd.f32 %v1511, %v1579
        %v1612 = vadd.f32 %v1512, %v1580
        %v1613 = vadd.f32 %v1513, %v1581
        %v1614 = vadd.f32 %v1514, %v1582
        %v1615 = vadd.f32 %v1515, %v1583
        %v1616 = vadd.f32 %v1516, %v1584
        %v1617 = vadd.f32 %v1517, %v1585
        %v1618 = vadd.f32 %v1518, %v1586
        %v1619 = vadd.f32 %v1519, %v1587
        %v1620 = vadd.f32 %v1520, %v1588
        %v1621 = vadd.f32 %v1521, %v1589
        %v1622 = vadd.f32 %v1522, %v1590
        %v1623 = vadd.f32 %v1523, %v1591
        %v1624 = vadd.f32 %v1524, %v1592
        %v1625 = vadd.f32 %v1525, %v1593
        %v1626 = vadd.f32 %v1526, %v1594
        %v1627 = vadd.f32 %v1527, %v1595
        %v1628 = vadd.f32 %v1528, %v1596
        %v1629 = vadd.f32 %v1529, %v1597
        %v1630 = vadd.f32 %v1530, %v1598
        %v1631 = vadd.f32 %v1531, %v1599
        %v1632 = vadd.f32 %v1532, %v1600
        %v1633 = vadd.f32 %v1533, %v1601
        %v1634 = vadd.f32 %v1534, %v1602
        %v1635 = vadd.f32 %v1535, %v1603
        %v1636 = vadd.f32 %v1536, %v1604
        %v1637 = vadd.f32 %v1537, %v1605
        %v1638 = vadd.f32 %v1538, %v1606
        %v1639 = vadd.f32 %v1539, %v1607
        %v1640 = vadd.f32 %v1540, %v1608
        %s1641 = scalar_lea.vmem [#allocation2], 48
        %v1642 = vld [vmem:[%s1641] sm:$0xff]
        %v1643 = vld [vmem:[%s1641 + $0x8] sm:$0xff]
        %v1644 = vld [vmem:[%s1641 + $0x18] sm:$0xff]
        %v1645 = vld [vmem:[%s1641 + $0x20] sm:$0xff]
        %v1646 = vld [vmem:[%s1641 + $0x30] sm:$0xff]
        %v1647 = vld [vmem:[%s1641 + $0x38] sm:$0xff]
        %v1648 = vld [vmem:[%s1641 + $0x48] sm:$0xff]
        %v1649 = vld [vmem:[%s1641 + $0x50] sm:$0xff]
        %v1650 = vld [vmem:[%s1641 + $0x60] sm:$0xff]
        %v1651 = vld [vmem:[%s1641 + $0x68] sm:$0xff]
        %v1652 = vld [vmem:[%s1641 + $0x78] sm:$0xff]
        %v1653 = vld [vmem:[%s1641 + $0x80] sm:$0xff]
        %v1654 = vld [vmem:[%s1641 + $0x90] sm:$0xff]
        %v1655 = vld [vmem:[%s1641 + $0x98] sm:$0xff]
        %v1656 = vld [vmem:[%s1641 + $0xa8] sm:$0xff]
        %v1657 = vld [vmem:[%s1641 + $0xb0] sm:$0xff]
        %v1658 = vld [vmem:[%s1641 + $0xc0] sm:$0xff]
        %v1659 = vld [vmem:[%s1641 + $0xc8] sm:$0xff]
        %v1660 = vld [vmem:[%s1641 + $0xd8] sm:$0xff]
        %v1661 = vld [vmem:[%s1641 + $0xe0] sm:$0xff]
        %v1662 = vld [vmem:[%s1641 + $0xf0] sm:$0xff]
        %v1663 = vld [vmem:[%s1641 + $0xf8] sm:$0xff]
        %v1664 = vld [vmem:[%s1641 + $0x108] sm:$0xff]
        %v1665 = vld [vmem:[%s1641 + $0x110] sm:$0xff]
        %v1666 = vld [vmem:[%s1641 + $0x120] sm:$0xff]
        %v1667 = vld [vmem:[%s1641 + $0x128] sm:$0xff]
        %v1668 = vld [vmem:[%s1641 + $0x138] sm:$0xff]
        %v1669 = vld [vmem:[%s1641 + $0x140] sm:$0xff]
        %v1670 = vld [vmem:[%s1641 + $0x150] sm:$0xff]
        %v1671 = vld [vmem:[%s1641 + $0x158] sm:$0xff]
        %v1672 = vld [vmem:[%s1641 + $0x168] sm:$0xff]
        %v1673 = vld [vmem:[%s1641 + $0x170] sm:$0xff]
        %v1674 = vlaneseq
        %v1675 = vshrl.u32 %v1674, 7
        %v1676 = vsub.s32 6, %v1675
        %v1677 = vrot.slane %v1071, %v1676
        %v1678 = vmul.f32 %v1642, %v1677
        %v1679 = vmul.f32 %v1643, %v1677
        %v1680 = vmul.f32 %v1644, %v1677
        %v1681 = vmul.f32 %v1645, %v1677
        %v1682 = vmul.f32 %v1646, %v1677
        %v1683 = vmul.f32 %v1647, %v1677
        %v1684 = vmul.f32 %v1648, %v1677
        %v1685 = vmul.f32 %v1649, %v1677
        %v1686 = vmul.f32 %v1650, %v1677
        %v1687 = vmul.f32 %v1651, %v1677
        %v1688 = vmul.f32 %v1652, %v1677
        %v1689 = vmul.f32 %v1653, %v1677
        %v1690 = vmul.f32 %v1654, %v1677
        %v1691 = vmul.f32 %v1655, %v1677
        %v1692 = vmul.f32 %v1656, %v1677
        %v1693 = vmul.f32 %v1657, %v1677
        %v1694 = vmul.f32 %v1658, %v1677
        %v1695 = vmul.f32 %v1659, %v1677
        %v1696 = vmul.f32 %v1660, %v1677
        %v1697 = vmul.f32 %v1661, %v1677
        %v1698 = vmul.f32 %v1662, %v1677
        %v1699 = vmul.f32 %v1663, %v1677
        %v1700 = vmul.f32 %v1664, %v1677
        %v1701 = vmul.f32 %v1665, %v1677
        %v1702 = vmul.f32 %v1666, %v1677
        %v1703 = vmul.f32 %v1667, %v1677
        %v1704 = vmul.f32 %v1668, %v1677
        %v1705 = vmul.f32 %v1669, %v1677
        %v1706 = vmul.f32 %v1670, %v1677
        %v1707 = vmul.f32 %v1671, %v1677
        %v1708 = vmul.f32 %v1672, %v1677
        %v1709 = vmul.f32 %v1673, %v1677
        %v1710 = vadd.f32 %v1609, %v1678
        %v1711 = vadd.f32 %v1610, %v1679
        %v1712 = vadd.f32 %v1611, %v1680
        %v1713 = vadd.f32 %v1612, %v1681
        %v1714 = vadd.f32 %v1613, %v1682
        %v1715 = vadd.f32 %v1614, %v1683
        %v1716 = vadd.f32 %v1615, %v1684
        %v1717 = vadd.f32 %v1616, %v1685
        %v1718 = vadd.f32 %v1617, %v1686
        %v1719 = vadd.f32 %v1618, %v1687
        %v1720 = vadd.f32 %v1619, %v1688
        %v1721 = vadd.f32 %v1620, %v1689
        %v1722 = vadd.f32 %v1621, %v1690
        %v1723 = vadd.f32 %v1622, %v1691
        %v1724 = vadd.f32 %v1623, %v1692
        %v1725 = vadd.f32 %v1624, %v1693
        %v1726 = vadd.f32 %v1625, %v1694
        %v1727 = vadd.f32 %v1626, %v1695
        %v1728 = vadd.f32 %v1627, %v1696
        %v1729 = vadd.f32 %v1628, %v1697
        %v1730 = vadd.f32 %v1629, %v1698
        %v1731 = vadd.f32 %v1630, %v1699
        %v1732 = vadd.f32 %v1631, %v1700
        %v1733 = vadd.f32 %v1632, %v1701
        %v1734 = vadd.f32 %v1633, %v1702
        %v1735 = vadd.f32 %v1634, %v1703
        %v1736 = vadd.f32 %v1635, %v1704
        %v1737 = vadd.f32 %v1636, %v1705
        %v1738 = vadd.f32 %v1637, %v1706
        %v1739 = vadd.f32 %v1638, %v1707
        %v1740 = vadd.f32 %v1639, %v1708
        %v1741 = vadd.f32 %v1640, %v1709
        %v1742 = vld [vmem:[%s1641 + $0x1] sm:$0xff]
        %v1743 = vld [vmem:[%s1641 + $0x9] sm:$0xff]
        %v1744 = vld [vmem:[%s1641 + $0x19] sm:$0xff]
        %v1745 = vld [vmem:[%s1641 + $0x21] sm:$0xff]
        %v1746 = vld [vmem:[%s1641 + $0x31] sm:$0xff]
        %v1747 = vld [vmem:[%s1641 + $0x39] sm:$0xff]
        %v1748 = vld [vmem:[%s1641 + $0x49] sm:$0xff]
        %v1749 = vld [vmem:[%s1641 + $0x51] sm:$0xff]
        %v1750 = vld [vmem:[%s1641 + $0x61] sm:$0xff]
        %v1751 = vld [vmem:[%s1641 + $0x69] sm:$0xff]
        %v1752 = vld [vmem:[%s1641 + $0x79] sm:$0xff]
        %v1753 = vld [vmem:[%s1641 + $0x81] sm:$0xff]
        %v1754 = vld [vmem:[%s1641 + $0x91] sm:$0xff]
        %v1755 = vld [vmem:[%s1641 + $0x99] sm:$0xff]
        %v1756 = vld [vmem:[%s1641 + $0xa9] sm:$0xff]
        %v1757 = vld [vmem:[%s1641 + $0xb1] sm:$0xff]
        %v1758 = vld [vmem:[%s1641 + $0xc1] sm:$0xff]
        %v1759 = vld [vmem:[%s1641 + $0xc9] sm:$0xff]
        %v1760 = vld [vmem:[%s1641 + $0xd9] sm:$0xff]
        %v1761 = vld [vmem:[%s1641 + $0xe1] sm:$0xff]
        %v1762 = vld [vmem:[%s1641 + $0xf1] sm:$0xff]
        %v1763 = vld [vmem:[%s1641 + $0xf9] sm:$0xff]
        %v1764 = vld [vmem:[%s1641 + $0x109] sm:$0xff]
        %v1765 = vld [vmem:[%s1641 + $0x111] sm:$0xff]
        %v1766 = vld [vmem:[%s1641 + $0x121] sm:$0xff]
        %v1767 = vld [vmem:[%s1641 + $0x129] sm:$0xff]
        %v1768 = vld [vmem:[%s1641 + $0x139] sm:$0xff]
        %v1769 = vld [vmem:[%s1641 + $0x141] sm:$0xff]
        %v1770 = vld [vmem:[%s1641 + $0x151] sm:$0xff]
        %v1771 = vld [vmem:[%s1641 + $0x159] sm:$0xff]
        %v1772 = vld [vmem:[%s1641 + $0x169] sm:$0xff]
        %v1773 = vld [vmem:[%s1641 + $0x171] sm:$0xff]
        %v1774 = vlaneseq
        %v1775 = vshrl.u32 %v1774, 7
        %v1776 = vsub.s32 7, %v1775
        %v1777 = vrot.slane %v1071, %v1776
        %v1778 = vmul.f32 %v1742, %v1777
        %v1779 = vmul.f32 %v1743, %v1777
        %v1780 = vmul.f32 %v1744, %v1777
        %v1781 = vmul.f32 %v1745, %v1777
        %v1782 = vmul.f32 %v1746, %v1777
        %v1783 = vmul.f32 %v1747, %v1777
        %v1784 = vmul.f32 %v1748, %v1777
        %v1785 = vmul.f32 %v1749, %v1777
        %v1786 = vmul.f32 %v1750, %v1777
        %v1787 = vmul.f32 %v1751, %v1777
        %v1788 = vmul.f32 %v1752, %v1777
        %v1789 = vmul.f32 %v1753, %v1777
        %v1790 = vmul.f32 %v1754, %v1777
        %v1791 = vmul.f32 %v1755, %v1777
        %v1792 = vmul.f32 %v1756, %v1777
        %v1793 = vmul.f32 %v1757, %v1777
        %v1794 = vmul.f32 %v1758, %v1777
        %v1795 = vmul.f32 %v1759, %v1777
        %v1796 = vmul.f32 %v1760, %v1777
        %v1797 = vmul.f32 %v1761, %v1777
        %v1798 = vmul.f32 %v1762, %v1777
        %v1799 = vmul.f32 %v1763, %v1777
        %v1800 = vmul.f32 %v1764, %v1777
        %v1801 = vmul.f32 %v1765, %v1777
        %v1802 = vmul.f32 %v1766, %v1777
        %v1803 = vmul.f32 %v1767, %v1777
        %v1804 = vmul.f32 %v1768, %v1777
        %v1805 = vmul.f32 %v1769, %v1777
        %v1806 = vmul.f32 %v1770, %v1777
        %v1807 = vmul.f32 %v1771, %v1777
        %v1808 = vmul.f32 %v1772, %v1777
        %v1809 = vmul.f32 %v1773, %v1777
        %v1810 = vadd.f32 %v1710, %v1778
        %v1811 = vadd.f32 %v1711, %v1779
        %v1812 = vadd.f32 %v1712, %v1780
        %v1813 = vadd.f32 %v1713, %v1781
        %v1814 = vadd.f32 %v1714, %v1782
        %v1815 = vadd.f32 %v1715, %v1783
        %v1816 = vadd.f32 %v1716, %v1784
        %v1817 = vadd.f32 %v1717, %v1785
        %v1818 = vadd.f32 %v1718, %v1786
        %v1819 = vadd.f32 %v1719, %v1787
        %v1820 = vadd.f32 %v1720, %v1788
        %v1821 = vadd.f32 %v1721, %v1789
        %v1822 = vadd.f32 %v1722, %v1790
        %v1823 = vadd.f32 %v1723, %v1791
        %v1824 = vadd.f32 %v1724, %v1792
        %v1825 = vadd.f32 %v1725, %v1793
        %v1826 = vadd.f32 %v1726, %v1794
        %v1827 = vadd.f32 %v1727, %v1795
        %v1828 = vadd.f32 %v1728, %v1796
        %v1829 = vadd.f32 %v1729, %v1797
        %v1830 = vadd.f32 %v1730, %v1798
        %v1831 = vadd.f32 %v1731, %v1799
        %v1832 = vadd.f32 %v1732, %v1800
        %v1833 = vadd.f32 %v1733, %v1801
        %v1834 = vadd.f32 %v1734, %v1802
        %v1835 = vadd.f32 %v1735, %v1803
        %v1836 = vadd.f32 %v1736, %v1804
        %v1837 = vadd.f32 %v1737, %v1805
        %v1838 = vadd.f32 %v1738, %v1806
        %v1839 = vadd.f32 %v1739, %v1807
        %v1840 = vadd.f32 %v1740, %v1808
        %v1841 = vadd.f32 %v1741, %v1809
        %v1842 = vld [vmem:[%s1641 + $0x2] sm:$0xff]
        %v1843 = vld [vmem:[%s1641 + $0xa] sm:$0xff]
        %v1844 = vld [vmem:[%s1641 + $0x1a] sm:$0xff]
        %v1845 = vld [vmem:[%s1641 + $0x22] sm:$0xff]
        %v1846 = vld [vmem:[%s1641 + $0x32] sm:$0xff]
        %v1847 = vld [vmem:[%s1641 + $0x3a] sm:$0xff]
        %v1848 = vld [vmem:[%s1641 + $0x4a] sm:$0xff]
        %v1849 = vld [vmem:[%s1641 + $0x52] sm:$0xff]
        %v1850 = vld [vmem:[%s1641 + $0x62] sm:$0xff]
        %v1851 = vld [vmem:[%s1641 + $0x6a] sm:$0xff]
        %v1852 = vld [vmem:[%s1641 + $0x7a] sm:$0xff]
        %v1853 = vld [vmem:[%s1641 + $0x82] sm:$0xff]
        %v1854 = vld [vmem:[%s1641 + $0x92] sm:$0xff]
        %v1855 = vld [vmem:[%s1641 + $0x9a] sm:$0xff]
        %v1856 = vld [vmem:[%s1641 + $0xaa] sm:$0xff]
        %v1857 = vld [vmem:[%s1641 + $0xb2] sm:$0xff]
        %v1858 = vld [vmem:[%s1641 + $0xc2] sm:$0xff]
        %v1859 = vld [vmem:[%s1641 + $0xca] sm:$0xff]
        %v1860 = vld [vmem:[%s1641 + $0xda] sm:$0xff]
        %v1861 = vld [vmem:[%s1641 + $0xe2] sm:$0xff]
        %v1862 = vld [vmem:[%s1641 + $0xf2] sm:$0xff]
        %v1863 = vld [vmem:[%s1641 + $0xfa] sm:$0xff]
        %v1864 = vld [vmem:[%s1641 + $0x10a] sm:$0xff]
        %v1865 = vld [vmem:[%s1641 + $0x112] sm:$0xff]
        %v1866 = vld [vmem:[%s1641 + $0x122] sm:$0xff]
        %v1867 = vld [vmem:[%s1641 + $0x12a] sm:$0xff]
        %v1868 = vld [vmem:[%s1641 + $0x13a] sm:$0xff]
        %v1869 = vld [vmem:[%s1641 + $0x142] sm:$0xff]
        %v1870 = vld [vmem:[%s1641 + $0x152] sm:$0xff]
        %v1871 = vld [vmem:[%s1641 + $0x15a] sm:$0xff]
        %v1872 = vld [vmem:[%s1641 + $0x16a] sm:$0xff]
        %v1873 = vld [vmem:[%s1641 + $0x172] sm:$0xff]
        %v1874 = vlaneseq
        %v1875 = vshrl.u32 %v1874, 7
        %v1876 = vsub.s32 0, %v1875
        %v1877 = vrot.slane %v1072, %v1876
        %v1878 = vmul.f32 %v1842, %v1877
        %v1879 = vmul.f32 %v1843, %v1877
        %v1880 = vmul.f32 %v1844, %v1877
        %v1881 = vmul.f32 %v1845, %v1877
        %v1882 = vmul.f32 %v1846, %v1877
        %v1883 = vmul.f32 %v1847, %v1877
        %v1884 = vmul.f32 %v1848, %v1877
        %v1885 = vmul.f32 %v1849, %v1877
        %v1886 = vmul.f32 %v1850, %v1877
        %v1887 = vmul.f32 %v1851, %v1877
        %v1888 = vmul.f32 %v1852, %v1877
        %v1889 = vmul.f32 %v1853, %v1877
        %v1890 = vmul.f32 %v1854, %v1877
        %v1891 = vmul.f32 %v1855, %v1877
        %v1892 = vmul.f32 %v1856, %v1877
        %v1893 = vmul.f32 %v1857, %v1877
        %v1894 = vmul.f32 %v1858, %v1877
        %v1895 = vmul.f32 %v1859, %v1877
        %v1896 = vmul.f32 %v1860, %v1877
        %v1897 = vmul.f32 %v1861, %v1877
        %v1898 = vmul.f32 %v1862, %v1877
        %v1899 = vmul.f32 %v1863, %v1877
        %v1900 = vmul.f32 %v1864, %v1877
        %v1901 = vmul.f32 %v1865, %v1877
        %v1902 = vmul.f32 %v1866, %v1877
        %v1903 = vmul.f32 %v1867, %v1877
        %v1904 = vmul.f32 %v1868, %v1877
        %v1905 = vmul.f32 %v1869, %v1877
        %v1906 = vmul.f32 %v1870, %v1877
        %v1907 = vmul.f32 %v1871, %v1877
        %v1908 = vmul.f32 %v1872, %v1877
        %v1909 = vmul.f32 %v1873, %v1877
        %v1910 = vadd.f32 %v1810, %v1878
        %v1911 = vadd.f32 %v1811, %v1879
        %v1912 = vadd.f32 %v1812, %v1880
        %v1913 = vadd.f32 %v1813, %v1881
        %v1914 = vadd.f32 %v1814, %v1882
        %v1915 = vadd.f32 %v1815, %v1883
        %v1916 = vadd.f32 %v1816, %v1884
        %v1917 = vadd.f32 %v1817, %v1885
        %v1918 = vadd.f32 %v1818, %v1886
        %v1919 = vadd.f32 %v1819, %v1887
        %v1920 = vadd.f32 %v1820, %v1888
        %v1921 = vadd.f32 %v1821, %v1889
        %v1922 = vadd.f32 %v1822, %v1890
        %v1923 = vadd.f32 %v1823, %v1891
        %v1924 = vadd.f32 %v1824, %v1892
        %v1925 = vadd.f32 %v1825, %v1893
        %v1926 = vadd.f32 %v1826, %v1894
        %v1927 = vadd.f32 %v1827, %v1895
        %v1928 = vadd.f32 %v1828, %v1896
        %v1929 = vadd.f32 %v1829, %v1897
        %v1930 = vadd.f32 %v1830, %v1898
        %v1931 = vadd.f32 %v1831, %v1899
        %v1932 = vadd.f32 %v1832, %v1900
        %v1933 = vadd.f32 %v1833, %v1901
        %v1934 = vadd.f32 %v1834, %v1902
        %v1935 = vadd.f32 %v1835, %v1903
        %v1936 = vadd.f32 %v1836, %v1904
        %v1937 = vadd.f32 %v1837, %v1905
        %v1938 = vadd.f32 %v1838, %v1906
        %v1939 = vadd.f32 %v1839, %v1907
        %v1940 = vadd.f32 %v1840, %v1908
        %v1941 = vadd.f32 %v1841, %v1909
        %v1942 = vld [vmem:[%s4] sm:$0x1]
        %v1944 = vlaneseq
        %v1945 = vshrl.u32 %v1944, 7
        %v1946 = vsub.s32 0, %v1945
        %v1947 = vrot.slane %v1942, %v1946
        %v1949 = vadd.f32 %v1910, %v1947
        %v1950 = vadd.f32 %v1911, %v1947
        %v1951 = vadd.f32 %v1912, %v1947
        %v1952 = vadd.f32 %v1913, %v1947
        %v1953 = vadd.f32 %v1914, %v1947
        %v1954 = vadd.f32 %v1915, %v1947
        %v1955 = vadd.f32 %v1916, %v1947
        %v1956 = vadd.f32 %v1917, %v1947
        %v1957 = vadd.f32 %v1918, %v1947
        %v1958 = vadd.f32 %v1919, %v1947
        %v1959 = vadd.f32 %v1920, %v1947
        %v1960 = vadd.f32 %v1921, %v1947
        %v1961 = vadd.f32 %v1922, %v1947
        %v1962 = vadd.f32 %v1923, %v1947
        %v1963 = vadd.f32 %v1924, %v1947
        %v1964 = vadd.f32 %v1925, %v1947
        %v1965 = vadd.f32 %v1926, %v1947
        %v1966 = vadd.f32 %v1927, %v1947
        %v1967 = vadd.f32 %v1928, %v1947
        %v1968 = vadd.f32 %v1929, %v1947
        %v1969 = vadd.f32 %v1930, %v1947
        %v1970 = vadd.f32 %v1931, %v1947
        %v1971 = vadd.f32 %v1932, %v1947
        %v1972 = vadd.f32 %v1933, %v1947
        %v1973 = vadd.f32 %v1934, %v1947
        %v1974 = vadd.f32 %v1935, %v1947
        %v1975 = vadd.f32 %v1936, %v1947
        %v1976 = vadd.f32 %v1937, %v1947
        %v1977 = vadd.f32 %v1938, %v1947
        %v1978 = vadd.f32 %v1939, %v1947
        %v1979 = vadd.f32 %v1940, %v1947
        %v1980 = vadd.f32 %v1941, %v1947
        %v1981 = vadd.f32 %v1949, %v1950
        %v1982 = vadd.f32 %v1981, %v1951
        %v1983 = vadd.f32 %v1982, %v1952
        %v1984 = vadd.f32 %v1983, %v1953
        %v1985 = vadd.f32 %v1984, %v1954
        %v1986 = vadd.f32 %v1985, %v1955
        %v1987 = vadd.f32 %v1986, %v1956
        %v1988 = vadd.f32 %v1987, %v1957
        %v1989 = vadd.f32 %v1988, %v1958
        %v1990 = vadd.f32 %v1989, %v1959
        %v1991 = vadd.f32 %v1990, %v1960
        %v1992 = vadd.f32 %v1991, %v1961
        %v1993 = vadd.f32 %v1992, %v1962
        %v1994 = vadd.f32 %v1993, %v1963
        %v1995 = vadd.f32 %v1994, %v1964
        %v1996 = vadd.f32 %v1995, %v1965
        %v1997 = vadd.f32 %v1996, %v1966
        %v1998 = vadd.f32 %v1997, %v1967
        %v1999 = vadd.f32 %v1998, %v1968
        %v2000 = vadd.f32 %v1999, %v1969
        %v2001 = vadd.f32 %v2000, %v1970
        %v2002 = vadd.f32 %v2001, %v1971
        %v2003 = vadd.f32 %v2002, %v1972
        %v2004 = vadd.f32 %v2003, %v1973
        %v2005 = vadd.f32 %v2004, %v1974
        %v2006 = vadd.f32 %v2005, %v1975
        %v2007 = vadd.f32 %v2006, %v1976
        %v2008 = vadd.f32 %v2007, %v1977
        %v2009 = vadd.f32 %v2008, %v1978
        %v2010 = vadd.f32 %v2009, %v1979
        %v2011 = vadd.f32 %v2010, %v1980
        %v2012 = vrot.slane %v2011, 4
        %v2013 = vadd.f32 %v2011, %v2012
        %v2014 = vrot.slane %v2013, 2
        %v2015 = vadd.f32 %v2013, %v2014
        %v2016 = vrot.slane %v2015, 1
        %v2017 = vadd.f32 %v2015, %v2016
        %v2018 = vmul.f32 %v2017, 0.00390625
        %v2019 = vpack.c.bf16 %v2018, %v2018
        %v2020 = vld [vmem:[#allocation9] sm:$0xf]
        %v2021 = vld [vmem:[#allocation9 + $0x4] sm:$0xf]
        %v2022 = vld [vmem:[#allocation9 + $0x8] sm:$0xf]
        %v2023 = vld [vmem:[#allocation9 + $0xc] sm:$0xf]
        %v2024 = vld [vmem:[#allocation9 + $0x10] sm:$0xf]
        %v2025 = vld [vmem:[#allocation9 + $0x14] sm:$0xf]
        %v2026 = vld [vmem:[#allocation9 + $0x18] sm:$0xf]
        %v2027 = vld [vmem:[#allocation9 + $0x1c] sm:$0xf]
        %v2028 = vld [vmem:[#allocation9 + $0x20] sm:$0xf]
        %v2029 = vld [vmem:[#allocation9 + $0x24] sm:$0xf]
        %v2030 = vld [vmem:[#allocation9 + $0x28] sm:$0xf]
        %v2031 = vld [vmem:[#allocation9 + $0x2c] sm:$0xf]
        %v2032 = vld [vmem:[#allocation9 + $0x30] sm:$0xf]
        %v2033 = vld [vmem:[#allocation9 + $0x34] sm:$0xf]
        %v2034 = vld [vmem:[#allocation9 + $0x38] sm:$0xf]
        %v2035 = vld [vmem:[#allocation9 + $0x3c] sm:$0xf]
        %v2036 = vld [vmem:[%s6] sm:$0x1]
        %v2053 = vunpack.c.l.b16 %v2020
        %v2054 = vunpack.c.l.b16 %v2021
        %v2055 = vunpack.c.l.b16 %v2022
        %v2056 = vunpack.c.l.b16 %v2023
        %v2057 = vunpack.c.l.b16 %v2024
        %v2058 = vunpack.c.l.b16 %v2025
        %v2059 = vunpack.c.l.b16 %v2026
        %v2060 = vunpack.c.l.b16 %v2027
        %v2061 = vunpack.c.l.b16 %v2028
        %v2062 = vunpack.c.l.b16 %v2029
        %v2063 = vunpack.c.l.b16 %v2030
        %v2064 = vunpack.c.l.b16 %v2031
        %v2065 = vunpack.c.l.b16 %v2032
        %v2066 = vunpack.c.l.b16 %v2033
        %v2067 = vunpack.c.l.b16 %v2034
        %v2068 = vunpack.c.l.b16 %v2035
        %v2069 = vpack.c.b16 %v2054, %v2053
        %v2070 = vpack.c.b16 %v2056, %v2055
        %v2071 = vpack.c.b16 %v2058, %v2057
        %v2072 = vpack.c.b16 %v2060, %v2059
        %v2073 = vpack.c.b16 %v2062, %v2061
        %v2074 = vpack.c.b16 %v2064, %v2063
        %v2075 = vpack.c.b16 %v2066, %v2065
        %v2076 = vpack.c.b16 %v2068, %v2067
        %2085 = vmatprep.subr.bf16.mxu0 0
        %2086 = vmatpush1.bf16.msra.mxu0 %v2069
        %2087 = vmatprep.subr.bf16.mxu0 0
        %2088 = vmatpush1.bf16.msra.mxu0 %v2070
        %2089 = vmatprep.subr.bf16.mxu0 0
        %2090 = vmatpush1.bf16.msra.mxu0 %v2071
        %2091 = vmatprep.subr.bf16.mxu0 0
        %2092 = vmatpush1.bf16.msra.mxu0 %v2072
        %2093 = vmatprep.subr.bf16.mxu0 0
        %2094 = vmatpush1.bf16.msra.mxu0 %v2073
        %2095 = vmatprep.subr.bf16.mxu0 0
        %2096 = vmatpush1.bf16.msra.mxu0 %v2074
        %2097 = vmatprep.subr.bf16.mxu0 0
        %2098 = vmatpush1.bf16.msra.mxu0 %v2075
        %2099 = vmatprep.subr.bf16.mxu0 0
        %2100 = vmatpush1.bf16.msra.mxu0 %v2076
        %2101 = vmatprep.subr.bf16.mxu0 0
        %2102 = vmatpush1.bf16.msra.mxu0 0
        %2103 = vmatprep.subr.bf16.mxu0 0
        %2104 = vmatpush1.bf16.msra.mxu0 0
        %2105 = vmatprep.subr.bf16.mxu0 0
        %2106 = vmatpush1.bf16.msra.mxu0 0
        %2107 = vmatprep.subr.bf16.mxu0 0
        %2108 = vmatpush1.bf16.msra.mxu0 0
        %2109 = vmatprep.subr.bf16.mxu0 0
        %2110 = vmatpush1.bf16.msra.mxu0 0
        %2111 = vmatprep.subr.bf16.mxu0 0
        %2112 = vmatpush1.bf16.msra.mxu0 0
        %2113 = vmatprep.subr.bf16.mxu0 0
        %2114 = vmatpush1.bf16.msra.mxu0 0
        %2115 = vmatprep.subr.bf16.mxu0 0
        %2116 = vmatpush1.bf16.msra.mxu0 0
        %2117 = vmatprep.mubr.bf16.mxu0 0
        %2118 = vmatmul.mubr.bf16.gmra.mrb[0].mxu0 %v2019
        %v2119 = vpop.f32.mrb[0].mxu0
        %v2120 = vadd.f32 %v2036, %v2119
        %v2121 = vpop.f32.mrb[0].mxu0
        %v2122 = vpop.f32.mrb[0].mxu0
        %v2123 = vpop.f32.mrb[0].mxu0
        %2124 = vdwg.mxu0
        %v2125 = vmax.f32 %v2120, 0.0
        %v2126 = vpack.c.bf16 %v2125, %v2125
        %v2127 = vld [vmem:[#allocation11] sm:$0xf]
        %v2128 = vld [vmem:[#allocation11 + $0x4] sm:$0xf]
        %v2129 = vld [vmem:[#allocation11 + $0x8] sm:$0xf]
        %v2130 = vld [vmem:[#allocation11 + $0xc] sm:$0xf]
        %v2131 = vld [vmem:[#allocation11 + $0x10] sm:$0xf]
        %v2132 = vld [vmem:[#allocation11 + $0x14] sm:$0xf]
        %v2133 = vld [vmem:[#allocation11 + $0x18] sm:$0xf]
        %v2134 = vld [vmem:[#allocation11 + $0x1c] sm:$0xf]
        %v2135 = vld [vmem:[#allocation11 + $0x20] sm:$0xf]
        %v2136 = vld [vmem:[#allocation11 + $0x24] sm:$0xf]
        %v2137 = vld [vmem:[#allocation11 + $0x28] sm:$0xf]
        %v2138 = vld [vmem:[#allocation11 + $0x2c] sm:$0xf]
        %v2139 = vld [vmem:[#allocation11 + $0x30] sm:$0xf]
        %v2140 = vld [vmem:[#allocation11 + $0x34] sm:$0xf]
        %v2141 = vld [vmem:[#allocation11 + $0x38] sm:$0xf]
        %v2142 = vld [vmem:[#allocation11 + $0x3c] sm:$0xf]
        %v2143 = vld [vmem:[%s8] sm:$0x1]
        %v2160 = vunpack.c.l.b16 %v2127
        %v2161 = vunpack.c.l.b16 %v2128
        %v2162 = vunpack.c.l.b16 %v2129
        %v2163 = vunpack.c.l.b16 %v2130
        %v2164 = vunpack.c.l.b16 %v2131
        %v2165 = vunpack.c.l.b16 %v2132
        %v2166 = vunpack.c.l.b16 %v2133
        %v2167 = vunpack.c.l.b16 %v2134
        %v2168 = vunpack.c.l.b16 %v2135
        %v2169 = vunpack.c.l.b16 %v2136
        %v2170 = vunpack.c.l.b16 %v2137
        %v2171 = vunpack.c.l.b16 %v2138
        %v2172 = vunpack.c.l.b16 %v2139
        %v2173 = vunpack.c.l.b16 %v2140
        %v2174 = vunpack.c.l.b16 %v2141
        %v2175 = vunpack.c.l.b16 %v2142
        %v2176 = vpack.c.b16 %v2161, %v2160
        %v2177 = vpack.c.b16 %v2163, %v2162
        %v2178 = vpack.c.b16 %v2165, %v2164
        %v2179 = vpack.c.b16 %v2167, %v2166
        %v2180 = vpack.c.b16 %v2169, %v2168
        %v2181 = vpack.c.b16 %v2171, %v2170
        %v2182 = vpack.c.b16 %v2173, %v2172
        %v2183 = vpack.c.b16 %v2175, %v2174
        %2192 = vmatprep.subr.bf16.mxu0 0
        %2193 = vmatpush1.bf16.msra.mxu0 %v2176
        %2194 = vmatprep.subr.bf16.mxu0 0
        %2195 = vmatpush1.bf16.msra.mxu0 %v2177
        %2196 = vmatprep.subr.bf16.mxu0 0
        %2197 = vmatpush1.bf16.msra.mxu0 %v2178
        %2198 = vmatprep.subr.bf16.mxu0 0
        %2199 = vmatpush1.bf16.msra.mxu0 %v2179
        %2200 = vmatprep.subr.bf16.mxu0 0
        %2201 = vmatpush1.bf16.msra.mxu0 %v2180
        %2202 = vmatprep.subr.bf16.mxu0 0
        %2203 = vmatpush1.bf16.msra.mxu0 %v2181
        %2204 = vmatprep.subr.bf16.mxu0 0
        %2205 = vmatpush1.bf16.msra.mxu0 %v2182
        %2206 = vmatprep.subr.bf16.mxu0 0
        %2207 = vmatpush1.bf16.msra.mxu0 %v2183
        %2208 = vmatprep.subr.bf16.mxu0 0
        %2209 = vmatpush1.bf16.msra.mxu0 0
        %2210 = vmatprep.subr.bf16.mxu0 0
        %2211 = vmatpush1.bf16.msra.mxu0 0
        %2212 = vmatprep.subr.bf16.mxu0 0
        %2213 = vmatpush1.bf16.msra.mxu0 0
        %2214 = vmatprep.subr.bf16.mxu0 0
        %2215 = vmatpush1.bf16.msra.mxu0 0
        %2216 = vmatprep.subr.bf16.mxu0 0
        %2217 = vmatpush1.bf16.msra.mxu0 0
        %2218 = vmatprep.subr.bf16.mxu0 0
        %2219 = vmatpush1.bf16.msra.mxu0 0
        %2220 = vmatprep.subr.bf16.mxu0 0
        %2221 = vmatpush1.bf16.msra.mxu0 0
        %2222 = vmatprep.subr.bf16.mxu0 0
        %2223 = vmatpush1.bf16.msra.mxu0 0
        %2224 = vmatprep.mubr.bf16.mxu0 0
        %2225 = vmatmul.mubr.bf16.gmra.mrb[0].mxu0 %v2126
        %v2226 = vpop.f32.mrb[0].mxu0
        %v2227 = vadd.f32 %v2143, %v2226
        %v2228 = vpop.f32.mrb[0].mxu0
        %v2229 = vpop.f32.mrb[0].mxu0
        %v2230 = vpop.f32.mrb[0].mxu0
        %2231 = vdwg.mxu0
        %v2232 = vadd.f32 %v2227, 3.0
        %v2233 = vmax.f32 %v2232, 0.0
        %v2234 = vmin.f32 %v2233, 6.0
        %v2235 = vmul.f32 %v2234, 0.16666667
        %v2236 = vlaneseq
        %v2237 = vshrl.u32 %v2236, 7
        %v2238 = vsub.s32 0, %v2237
        %v2239 = vrot.slane %v2235, %v2238
        %v2240 = vmul.f32 %v1949, %v2239
        %v2241 = vmul.f32 %v1950, %v2239
        %v2242 = vmul.f32 %v1951, %v2239
        %v2243 = vmul.f32 %v1952, %v2239
        %v2244 = vmul.f32 %v1953, %v2239
        %v2245 = vmul.f32 %v1954, %v2239
        %v2246 = vmul.f32 %v1955, %v2239
        %v2247 = vmul.f32 %v1956, %v2239
        %v2248 = vmul.f32 %v1957, %v2239
        %v2249 = vmul.f32 %v1958, %v2239
        %v2250 = vmul.f32 %v1959, %v2239
        %v2251 = vmul.f32 %v1960, %v2239
        %v2252 = vmul.f32 %v1961, %v2239
        %v2253 = vmul.f32 %v1962, %v2239
        %v2254 = vmul.f32 %v1963, %v2239
        %v2255 = vmul.f32 %v1964, %v2239
        %v2256 = vmul.f32 %v1965, %v2239
        %v2257 = vmul.f32 %v1966, %v2239
        %v2258 = vmul.f32 %v1967, %v2239
        %v2259 = vmul.f32 %v1968, %v2239
        %v2260 = vmul.f32 %v1969, %v2239
        %v2261 = vmul.f32 %v1970, %v2239
        %v2262 = vmul.f32 %v1971, %v2239
        %v2263 = vmul.f32 %v1972, %v2239
        %v2264 = vmul.f32 %v1973, %v2239
        %v2265 = vmul.f32 %v1974, %v2239
        %v2266 = vmul.f32 %v1975, %v2239
        %v2267 = vmul.f32 %v1976, %v2239
        %v2268 = vmul.f32 %v1977, %v2239
        %v2269 = vmul.f32 %v1978, %v2239
        %v2270 = vmul.f32 %v1979, %v2239
        %v2271 = vmul.f32 %v1980, %v2239
        %v2272 = vadd.f32 %v2240, 3.0
        %v2273 = vadd.f32 %v2241, 3.0
        %v2274 = vadd.f32 %v2242, 3.0
        %v2275 = vadd.f32 %v2243, 3.0
        %v2276 = vadd.f32 %v2244, 3.0
        %v2277 = vadd.f32 %v2245, 3.0
        %v2278 = vadd.f32 %v2246, 3.0
        %v2279 = vadd.f32 %v2247, 3.0
        %v2280 = vadd.f32 %v2248, 3.0
        %v2281 = vadd.f32 %v2249, 3.0
        %v2282 = vadd.f32 %v2250, 3.0
        %v2283 = vadd.f32 %v2251, 3.0
        %v2284 = vadd.f32 %v2252, 3.0
        %v2285 = vadd.f32 %v2253, 3.0
        %v2286 = vadd.f32 %v2254, 3.0
        %v2287 = vadd.f32 %v2255, 3.0
        %v2288 = vadd.f32 %v2256, 3.0
        %v2289 = vadd.f32 %v2257, 3.0
        %v2290 = vadd.f32 %v2258, 3.0
        %v2291 = vadd.f32 %v2259, 3.0
        %v2292 = vadd.f32 %v2260, 3.0
        %v2293 = vadd.f32 %v2261, 3.0
        %v2294 = vadd.f32 %v2262, 3.0
        %v2295 = vadd.f32 %v2263, 3.0
        %v2296 = vadd.f32 %v2264, 3.0
        %v2297 = vadd.f32 %v2265, 3.0
        %v2298 = vadd.f32 %v2266, 3.0
        %v2299 = vadd.f32 %v2267, 3.0
        %v2300 = vadd.f32 %v2268, 3.0
        %v2301 = vadd.f32 %v2269, 3.0
        %v2302 = vadd.f32 %v2270, 3.0
        %v2303 = vadd.f32 %v2271, 3.0
        %v2304 = vmax.f32 %v2272, 0.0
        %v2305 = vmax.f32 %v2273, 0.0
        %v2306 = vmax.f32 %v2274, 0.0
        %v2307 = vmax.f32 %v2275, 0.0
        %v2308 = vmax.f32 %v2276, 0.0
        %v2309 = vmax.f32 %v2277, 0.0
        %v2310 = vmax.f32 %v2278, 0.0
        %v2311 = vmax.f32 %v2279, 0.0
        %v2312 = vmax.f32 %v2280, 0.0
        %v2313 = vmax.f32 %v2281, 0.0
        %v2314 = vmax.f32 %v2282, 0.0
        %v2315 = vmax.f32 %v2283, 0.0
        %v2316 = vmax.f32 %v2284, 0.0
        %v2317 = vmax.f32 %v2285, 0.0
        %v2318 = vmax.f32 %v2286, 0.0
        %v2319 = vmax.f32 %v2287, 0.0
        %v2320 = vmax.f32 %v2288, 0.0
        %v2321 = vmax.f32 %v2289, 0.0
        %v2322 = vmax.f32 %v2290, 0.0
        %v2323 = vmax.f32 %v2291, 0.0
        %v2324 = vmax.f32 %v2292, 0.0
        %v2325 = vmax.f32 %v2293, 0.0
        %v2326 = vmax.f32 %v2294, 0.0
        %v2327 = vmax.f32 %v2295, 0.0
        %v2328 = vmax.f32 %v2296, 0.0
        %v2329 = vmax.f32 %v2297, 0.0
        %v2330 = vmax.f32 %v2298, 0.0
        %v2331 = vmax.f32 %v2299, 0.0
        %v2332 = vmax.f32 %v2300, 0.0
        %v2333 = vmax.f32 %v2301, 0.0
        %v2334 = vmax.f32 %v2302, 0.0
        %v2335 = vmax.f32 %v2303, 0.0
        %v2336 = vmin.f32 %v2304, 6.0
        %v2337 = vmin.f32 %v2305, 6.0
        %v2338 = vmin.f32 %v2306, 6.0
        %v2339 = vmin.f32 %v2307, 6.0
        %v2340 = vmin.f32 %v2308, 6.0
        %v2341 = vmin.f32 %v2309, 6.0
        %v2342 = vmin.f32 %v2310, 6.0
        %v2343 = vmin.f32 %v2311, 6.0
        %v2344 = vmin.f32 %v2312, 6.0
        %v2345 = vmin.f32 %v2313, 6.0
        %v2346 = vmin.f32 %v2314, 6.0
        %v2347 = vmin.f32 %v2315, 6.0
        %v2348 = vmin.f32 %v2316, 6.0
        %v2349 = vmin.f32 %v2317, 6.0
        %v2350 = vmin.f32 %v2318, 6.0
        %v2351 = vmin.f32 %v2319, 6.0
        %v2352 = vmin.f32 %v2320, 6.0
        %v2353 = vmin.f32 %v2321, 6.0
        %v2354 = vmin.f32 %v2322, 6.0
        %v2355 = vmin.f32 %v2323, 6.0
        %v2356 = vmin.f32 %v2324, 6.0
        %v2357 = vmin.f32 %v2325, 6.0
        %v2358 = vmin.f32 %v2326, 6.0
        %v2359 = vmin.f32 %v2327, 6.0
        %v2360 = vmin.f32 %v2328, 6.0
        %v2361 = vmin.f32 %v2329, 6.0
        %v2362 = vmin.f32 %v2330, 6.0
        %v2363 = vmin.f32 %v2331, 6.0
        %v2364 = vmin.f32 %v2332, 6.0
        %v2365 = vmin.f32 %v2333, 6.0
        %v2366 = vmin.f32 %v2334, 6.0
        %v2367 = vmin.f32 %v2335, 6.0
        %v2368 = vmul.f32 %v2336, 0.16666667
        %v2369 = vmul.f32 %v2337, 0.16666667
        %v2370 = vmul.f32 %v2338, 0.16666667
        %v2371 = vmul.f32 %v2339, 0.16666667
        %v2372 = vmul.f32 %v2340, 0.16666667
        %v2373 = vmul.f32 %v2341, 0.16666667
        %v2374 = vmul.f32 %v2342, 0.16666667
        %v2375 = vmul.f32 %v2343, 0.16666667
        %v2376 = vmul.f32 %v2344, 0.16666667
        %v2377 = vmul.f32 %v2345, 0.16666667
        %v2378 = vmul.f32 %v2346, 0.16666667
        %v2379 = vmul.f32 %v2347, 0.16666667
        %v2380 = vmul.f32 %v2348, 0.16666667
        %v2381 = vmul.f32 %v2349, 0.16666667
        %v2382 = vmul.f32 %v2350, 0.16666667
        %v2383 = vmul.f32 %v2351, 0.16666667
        %v2384 = vmul.f32 %v2352, 0.16666667
        %v2385 = vmul.f32 %v2353, 0.16666667
        %v2386 = vmul.f32 %v2354, 0.16666667
        %v2387 = vmul.f32 %v2355, 0.16666667
        %v2388 = vmul.f32 %v2356, 0.16666667
        %v2389 = vmul.f32 %v2357, 0.16666667
        %v2390 = vmul.f32 %v2358, 0.16666667
        %v2391 = vmul.f32 %v2359, 0.16666667
        %v2392 = vmul.f32 %v2360, 0.16666667
        %v2393 = vmul.f32 %v2361, 0.16666667
        %v2394 = vmul.f32 %v2362, 0.16666667
        %v2395 = vmul.f32 %v2363, 0.16666667
        %v2396 = vmul.f32 %v2364, 0.16666667
        %v2397 = vmul.f32 %v2365, 0.16666667
        %v2398 = vmul.f32 %v2366, 0.16666667
        %v2399 = vmul.f32 %v2367, 0.16666667
        %v2400 = vmul.f32 %v2240, %v2368
        %v2401 = vmul.f32 %v2241, %v2369
        %v2402 = vmul.f32 %v2242, %v2370
        %v2403 = vmul.f32 %v2243, %v2371
        %v2404 = vmul.f32 %v2244, %v2372
        %v2405 = vmul.f32 %v2245, %v2373
        %v2406 = vmul.f32 %v2246, %v2374
        %v2407 = vmul.f32 %v2247, %v2375
        %v2408 = vmul.f32 %v2248, %v2376
        %v2409 = vmul.f32 %v2249, %v2377
        %v2410 = vmul.f32 %v2250, %v2378
        %v2411 = vmul.f32 %v2251, %v2379
        %v2412 = vmul.f32 %v2252, %v2380
        %v2413 = vmul.f32 %v2253, %v2381
        %v2414 = vmul.f32 %v2254, %v2382
        %v2415 = vmul.f32 %v2255, %v2383
        %v2416 = vmul.f32 %v2256, %v2384
        %v2417 = vmul.f32 %v2257, %v2385
        %v2418 = vmul.f32 %v2258, %v2386
        %v2419 = vmul.f32 %v2259, %v2387
        %v2420 = vmul.f32 %v2260, %v2388
        %v2421 = vmul.f32 %v2261, %v2389
        %v2422 = vmul.f32 %v2262, %v2390
        %v2423 = vmul.f32 %v2263, %v2391
        %v2424 = vmul.f32 %v2264, %v2392
        %v2425 = vmul.f32 %v2265, %v2393
        %v2426 = vmul.f32 %v2266, %v2394
        %v2427 = vmul.f32 %v2267, %v2395
        %v2428 = vmul.f32 %v2268, %v2396
        %v2429 = vmul.f32 %v2269, %v2397
        %v2430 = vmul.f32 %v2270, %v2398
        %v2431 = vmul.f32 %v2271, %v2399
        %v2432 = vpack.c.bf16 %v2401, %v2400
        %v2433 = vpack.c.bf16 %v2403, %v2402
        %v2434 = vpack.c.bf16 %v2405, %v2404
        %v2435 = vpack.c.bf16 %v2407, %v2406
        %v2436 = vpack.c.bf16 %v2409, %v2408
        %v2437 = vpack.c.bf16 %v2411, %v2410
        %v2438 = vpack.c.bf16 %v2413, %v2412
        %v2439 = vpack.c.bf16 %v2415, %v2414
        %v2440 = vpack.c.bf16 %v2417, %v2416
        %v2441 = vpack.c.bf16 %v2419, %v2418
        %v2442 = vpack.c.bf16 %v2421, %v2420
        %v2443 = vpack.c.bf16 %v2423, %v2422
        %v2444 = vpack.c.bf16 %v2425, %v2424
        %v2445 = vpack.c.bf16 %v2427, %v2426
        %v2446 = vpack.c.bf16 %v2429, %v2428
        %v2447 = vpack.c.bf16 %v2431, %v2430
        %v2448 = vld [vmem:[#allocation12] sm:$0xf]
        %v2449 = vld [vmem:[#allocation12 + $0x4] sm:$0xf]
        %v2450 = vld [vmem:[#allocation12 + $0x8] sm:$0xf]
        %v2451 = vld [vmem:[#allocation12 + $0xc] sm:$0xf]
        %v2452 = vld [vmem:[#allocation12 + $0x10] sm:$0xf]
        %v2453 = vld [vmem:[#allocation12 + $0x14] sm:$0xf]
        %v2454 = vld [vmem:[#allocation12 + $0x18] sm:$0xf]
        %v2455 = vld [vmem:[#allocation12 + $0x1c] sm:$0xf]
        %v2456 = vld [vmem:[#allocation12 + $0x20] sm:$0xf]
        %v2457 = vld [vmem:[#allocation12 + $0x24] sm:$0xf]
        %v2458 = vld [vmem:[#allocation12 + $0x28] sm:$0xf]
        %v2459 = vld [vmem:[#allocation12 + $0x2c] sm:$0xf]
        %v2460 = vld [vmem:[#allocation12 + $0x30] sm:$0xf]
        %v2461 = vld [vmem:[#allocation12 + $0x34] sm:$0xf]
        %v2462 = vld [vmem:[#allocation12 + $0x38] sm:$0xf]
        %v2463 = vld [vmem:[#allocation12 + $0x3c] sm:$0xf]
        %v2464 = vld [vmem:[%s10] sm:$0x1]
        %v2466 = vlaneseq
        %v2467 = vshrl.u32 %v2466, 7
        %v2468 = vsub.s32 0, %v2467
        %v2469 = vrot.slane %v2464, %v2468
        %v2487 = vunpack.c.l.b16 %v2448
        %v2488 = vunpack.c.l.b16 %v2449
        %v2489 = vunpack.c.l.b16 %v2450
        %v2490 = vunpack.c.l.b16 %v2451
        %v2491 = vunpack.c.l.b16 %v2452
        %v2492 = vunpack.c.l.b16 %v2453
        %v2493 = vunpack.c.l.b16 %v2454
        %v2494 = vunpack.c.l.b16 %v2455
        %v2495 = vunpack.c.l.b16 %v2456
        %v2496 = vunpack.c.l.b16 %v2457
        %v2497 = vunpack.c.l.b16 %v2458
        %v2498 = vunpack.c.l.b16 %v2459
        %v2499 = vunpack.c.l.b16 %v2460
        %v2500 = vunpack.c.l.b16 %v2461
        %v2501 = vunpack.c.l.b16 %v2462
        %v2502 = vunpack.c.l.b16 %v2463
        %v2503 = vpack.c.b16 %v2488, %v2487
        %v2504 = vpack.c.b16 %v2490, %v2489
        %v2505 = vpack.c.b16 %v2492, %v2491
        %v2506 = vpack.c.b16 %v2494, %v2493
        %v2507 = vpack.c.b16 %v2496, %v2495
        %v2508 = vpack.c.b16 %v2498, %v2497
        %v2509 = vpack.c.b16 %v2500, %v2499
        %v2510 = vpack.c.b16 %v2502, %v2501
        %2519 = vmatprep.subr.bf16.mxu0 0
        %2520 = vmatpush1.bf16.msra.mxu0 %v2503
        %2521 = vmatprep.subr.bf16.mxu0 0
        %2522 = vmatpush1.bf16.msra.mxu0 %v2504
        %2523 = vmatprep.subr.bf16.mxu0 0
        %2524 = vmatpush1.bf16.msra.mxu0 %v2505
        %2525 = vmatprep.subr.bf16.mxu0 0
        %2526 = vmatpush1.bf16.msra.mxu0 %v2506
        %2527 = vmatprep.subr.bf16.mxu0 0
        %2528 = vmatpush1.bf16.msra.mxu0 %v2507
        %2529 = vmatprep.subr.bf16.mxu0 0
        %2530 = vmatpush1.bf16.msra.mxu0 %v2508
        %2531 = vmatprep.subr.bf16.mxu0 0
        %2532 = vmatpush1.bf16.msra.mxu0 %v2509
        %2533 = vmatprep.subr.bf16.mxu0 0
        %2534 = vmatpush1.bf16.msra.mxu0 %v2510
        %2535 = vmatprep.subr.bf16.mxu0 0
        %2536 = vmatpush1.bf16.msra.mxu0 0
        %2537 = vmatprep.subr.bf16.mxu0 0
        %2538 = vmatpush1.bf16.msra.mxu0 0
        %2539 = vmatprep.subr.bf16.mxu0 0
        %2540 = vmatpush1.bf16.msra.mxu0 0
        %2541 = vmatprep.subr.bf16.mxu0 0
        %2542 = vmatpush1.bf16.msra.mxu0 0
        %2543 = vmatprep.subr.bf16.mxu0 0
        %2544 = vmatpush1.bf16.msra.mxu0 0
        %2545 = vmatprep.subr.bf16.mxu0 0
        %2546 = vmatpush1.bf16.msra.mxu0 0
        %2547 = vmatprep.subr.bf16.mxu0 0
        %2548 = vmatpush1.bf16.msra.mxu0 0
        %2549 = vmatprep.subr.bf16.mxu0 0
        %2550 = vmatpush1.bf16.msra.mxu0 0
        %2551 = vmatprep.mubr.bf16.mxu0 0
        %2552 = vmatmul.mubr.bf16.gmra.mrb[0].mxu0 %v2432
        %v2553 = vpop.f32.mrb[0].mxu0
        %v2554 = vadd.f32 %v2469, %v2553
        %v2555 = vpop.f32.mrb[0].mxu0
        %v2556 = vpop.f32.mrb[0].mxu0
        %v2557 = vadd.f32 %v2469, %v2556
        %v2558 = vpop.f32.mrb[0].mxu0
        %2559 = vmatprep.mubr.bf16.mxu0 0
        %2560 = vmatmul.mubr.bf16.gmra.mrb[0].mxu0 %v2433
        %v2561 = vpop.f32.mrb[0].mxu0
        %v2562 = vadd.f32 %v2469, %v2561
        %v2563 = vpop.f32.mrb[0].mxu0
        %v2564 = vpop.f32.mrb[0].mxu0
        %v2565 = vadd.f32 %v2469, %v2564
        %v2566 = vpop.f32.mrb[0].mxu0
        %2567 = vmatprep.mubr.bf16.mxu0 0
        %2568 = vmatmul.mubr.bf16.gmra.mrb[0].mxu0 %v2434
        %v2569 = vpop.f32.mrb[0].mxu0
        %v2570 = vadd.f32 %v2469, %v2569
        %v2571 = vpop.f32.mrb[0].mxu0
        %v2572 = vpop.f32.mrb[0].mxu0
        %v2573 = vadd.f32 %v2469, %v2572
        %v2574 = vpop.f32.mrb[0].mxu0
        %2575 = vmatprep.mubr.bf16.mxu0 0
        %2576 = vmatmul.mubr.bf16.gmra.mrb[0].mxu0 %v2435
        %v2577 = vpop.f32.mrb[0].mxu0
        %v2578 = vadd.f32 %v2469, %v2577
        %v2579 = vpop.f32.mrb[0].mxu0
        %v2580 = vpop.f32.mrb[0].mxu0
        %v2581 = vadd.f32 %v2469, %v2580
        %v2582 = vpop.f32.mrb[0].mxu0
        %2583 = vmatprep.mubr.bf16.mxu0 0
        %2584 = vmatmul.mubr.bf16.gmra.mrb[0].mxu0 %v2436
        %v2585 = vpop.f32.mrb[0].mxu0
        %v2586 = vadd.f32 %v2469, %v2585
        %v2587 = vpop.f32.mrb[0].mxu0
        %v2588 = vpop.f32.mrb[0].mxu0
        %v2589 = vadd.f32 %v2469, %v2588
        %v2590 = vpop.f32.mrb[0].mxu0
        %2591 = vmatprep.mubr.bf16.mxu0 0
        %2592 = vmatmul.mubr.bf16.gmra.mrb[0].mxu0 %v2437
        %v2593 = vpop.f32.mrb[0].mxu0
        %v2594 = vadd.f32 %v2469, %v2593
        %v2595 = vpop.f32.mrb[0].mxu0
        %v2596 = vpop.f32.mrb[0].mxu0
        %v2597 = vadd.f32 %v2469, %v2596
        %v2598 = vpop.f32.mrb[0].mxu0
        %2599 = vmatprep.mubr.bf16.mxu0 0
        %2600 = vmatmul.mubr.bf16.gmra.mrb[0].mxu0 %v2438
        %v2601 = vpop.f32.mrb[0].mxu0
        %v2602 = vadd.f32 %v2469, %v2601
        %v2603 = vpop.f32.mrb[0].mxu0
        %v2604 = vpop.f32.mrb[0].mxu0
        %v2605 = vadd.f32 %v2469, %v2604
        %v2606 = vpop.f32.mrb[0].mxu0
        %2607 = vmatprep.mubr.bf16.mxu0 0
        %2608 = vmatmul.mubr.bf16.gmra.mrb[0].mxu0 %v2439
        %v2609 = vpop.f32.mrb[0].mxu0
        %v2610 = vadd.f32 %v2469, %v2609
        %v2611 = vpop.f32.mrb[0].mxu0
        %v2612 = vpop.f32.mrb[0].mxu0
        %v2613 = vadd.f32 %v2469, %v2612
        %v2614 = vpop.f32.mrb[0].mxu0
        %2615 = vmatprep.mubr.bf16.mxu0 0
        %2616 = vmatmul.mubr.bf16.gmra.mrb[0].mxu0 %v2440
        %v2617 = vpop.f32.mrb[0].mxu0
        %v2618 = vadd.f32 %v2469, %v2617
        %v2619 = vpop.f32.mrb[0].mxu0
        %v2620 = vpop.f32.mrb[0].mxu0
        %v2621 = vadd.f32 %v2469, %v2620
        %v2622 = vpop.f32.mrb[0].mxu0
        %2623 = vmatprep.mubr.bf16.mxu0 0
        %2624 = vmatmul.mubr.bf16.gmra.mrb[0].mxu0 %v2441
        %v2625 = vpop.f32.mrb[0].mxu0
        %v2626 = vadd.f32 %v2469, %v2625
        %v2627 = vpop.f32.mrb[0].mxu0
        %v2628 = vpop.f32.mrb[0].mxu0
        %v2629 = vadd.f32 %v2469, %v2628
        %v2630 = vpop.f32.mrb[0].mxu0
        %2631 = vmatprep.mubr.bf16.mxu0 0
        %2632 = vmatmul.mubr.bf16.gmra.mrb[0].mxu0 %v2442
        %v2633 = vpop.f32.mrb[0].mxu0
        %v2634 = vadd.f32 %v2469, %v2633
        %v2635 = vpop.f32.mrb[0].mxu0
        %v2636 = vpop.f32.mrb[0].mxu0
        %v2637 = vadd.f32 %v2469, %v2636
        %v2638 = vpop.f32.mrb[0].mxu0
        %2639 = vmatprep.mubr.bf16.mxu0 0
        %2640 = vmatmul.mubr.bf16.gmra.mrb[0].mxu0 %v2443
        %v2641 = vpop.f32.mrb[0].mxu0
        %v2642 = vadd.f32 %v2469, %v2641
        %v2643 = vpop.f32.mrb[0].mxu0
        %v2644 = vpop.f32.mrb[0].mxu0
        %v2645 = vadd.f32 %v2469, %v2644
        %v2646 = vpop.f32.mrb[0].mxu0
        %2647 = vmatprep.mubr.bf16.mxu0 0
        %2648 = vmatmul.mubr.bf16.gmra.mrb[0].mxu0 %v2444
        %v2649 = vpop.f32.mrb[0].mxu0
        %v2650 = vadd.f32 %v2469, %v2649
        %v2651 = vpop.f32.mrb[0].mxu0
        %v2652 = vpop.f32.mrb[0].mxu0
        %v2653 = vadd.f32 %v2469, %v2652
        %v2654 = vpop.f32.mrb[0].mxu0
        %2655 = vmatprep.mubr.bf16.mxu0 0
        %2656 = vmatmul.mubr.bf16.gmra.mrb[0].mxu0 %v2445
        %v2657 = vpop.f32.mrb[0].mxu0
        %v2658 = vadd.f32 %v2469, %v2657
        %v2659 = vpop.f32.mrb[0].mxu0
        %v2660 = vpop.f32.mrb[0].mxu0
        %v2661 = vadd.f32 %v2469, %v2660
        %v2662 = vpop.f32.mrb[0].mxu0
        %2663 = vmatprep.mubr.bf16.mxu0 0
        %2664 = vmatmul.mubr.bf16.gmra.mrb[0].mxu0 %v2446
        %v2665 = vpop.f32.mrb[0].mxu0
        %v2666 = vadd.f32 %v2469, %v2665
        %v2667 = vpop.f32.mrb[0].mxu0
        %v2668 = vpop.f32.mrb[0].mxu0
        %v2669 = vadd.f32 %v2469, %v2668
        %v2670 = vpop.f32.mrb[0].mxu0
        %2671 = vmatprep.mubr.bf16.mxu0 0
        %2672 = vmatmul.mubr.bf16.gmra.mrb[0].mxu0 %v2447
        %v2673 = vpop.f32.mrb[0].mxu0
        %v2674 = vadd.f32 %v2469, %v2673
        %v2675 = vpop.f32.mrb[0].mxu0
        %v2676 = vpop.f32.mrb[0].mxu0
        %v2677 = vadd.f32 %v2469, %v2676
        %v2678 = vpop.f32.mrb[0].mxu0
        %2679 = vdwg.mxu0
        %v2680 = vunpack.c.l.bf16 %v479
        %v2681 = vunpack.c.l.bf16 %v480
        %v2682 = vunpack.c.l.bf16 %v481
        %v2683 = vunpack.c.l.bf16 %v482
        %v2684 = vunpack.c.l.bf16 %v483
        %v2685 = vunpack.c.l.bf16 %v484
        %v2686 = vunpack.c.l.bf16 %v485
        %v2687 = vunpack.c.l.bf16 %v486
        %v2688 = vunpack.c.l.bf16 %v487
        %v2689 = vunpack.c.l.bf16 %v488
        %v2690 = vunpack.c.l.bf16 %v489
        %v2691 = vunpack.c.l.bf16 %v490
        %v2692 = vunpack.c.l.bf16 %v491
        %v2693 = vunpack.c.l.bf16 %v492
        %v2694 = vunpack.c.l.bf16 %v493
        %v2695 = vunpack.c.l.bf16 %v494
        %v2696 = vunpack.c.l.bf16 %v495
        %v2697 = vunpack.c.l.bf16 %v496
        %v2698 = vunpack.c.l.bf16 %v497
        %v2699 = vunpack.c.l.bf16 %v498
        %v2700 = vunpack.c.l.bf16 %v499
        %v2701 = vunpack.c.l.bf16 %v500
        %v2702 = vunpack.c.l.bf16 %v501
        %v2703 = vunpack.c.l.bf16 %v502
        %v2704 = vunpack.c.l.bf16 %v503
        %v2705 = vunpack.c.l.bf16 %v504
        %v2706 = vunpack.c.l.bf16 %v505
        %v2707 = vunpack.c.l.bf16 %v506
        %v2708 = vunpack.c.l.bf16 %v507
        %v2709 = vunpack.c.l.bf16 %v508
        %v2710 = vunpack.c.l.bf16 %v509
        %v2711 = vunpack.c.l.bf16 %v510
        %v2712 = vadd.f32 %v2554, %v2680
        %v2713 = vadd.f32 %v2557, %v2681
        %v2714 = vadd.f32 %v2562, %v2682
        %v2715 = vadd.f32 %v2565, %v2683
        %v2716 = vadd.f32 %v2570, %v2684
        %v2717 = vadd.f32 %v2573, %v2685
        %v2718 = vadd.f32 %v2578, %v2686
        %v2719 = vadd.f32 %v2581, %v2687
        %v2720 = vadd.f32 %v2586, %v2688
        %v2721 = vadd.f32 %v2589, %v2689
        %v2722 = vadd.f32 %v2594, %v2690
        %v2723 = vadd.f32 %v2597, %v2691
        %v2724 = vadd.f32 %v2602, %v2692
        %v2725 = vadd.f32 %v2605, %v2693
        %v2726 = vadd.f32 %v2610, %v2694
        %v2727 = vadd.f32 %v2613, %v2695
        %v2728 = vadd.f32 %v2618, %v2696
        %v2729 = vadd.f32 %v2621, %v2697
        %v2730 = vadd.f32 %v2626, %v2698
        %v2731 = vadd.f32 %v2629, %v2699
        %v2732 = vadd.f32 %v2634, %v2700
        %v2733 = vadd.f32 %v2637, %v2701
        %v2734 = vadd.f32 %v2642, %v2702
        %v2735 = vadd.f32 %v2645, %v2703
        %v2736 = vadd.f32 %v2650, %v2704
        %v2737 = vadd.f32 %v2653, %v2705
        %v2738 = vadd.f32 %v2658, %v2706
        %v2739 = vadd.f32 %v2661, %v2707
        %v2740 = vadd.f32 %v2666, %v2708
        %v2741 = vadd.f32 %v2669, %v2709
        %v2742 = vadd.f32 %v2674, %v2710
        %v2743 = vadd.f32 %v2677, %v2711
        %v2744 = vpack.c.bf16 %v2713, %v2712
        %v2745 = vpack.c.bf16 %v2715, %v2714
        %v2746 = vpack.c.bf16 %v2717, %v2716
        %v2747 = vpack.c.bf16 %v2719, %v2718
        %v2748 = vpack.c.bf16 %v2721, %v2720
        %v2749 = vpack.c.bf16 %v2723, %v2722
        %v2750 = vpack.c.bf16 %v2725, %v2724
        %v2751 = vpack.c.bf16 %v2727, %v2726
        %v2752 = vpack.c.bf16 %v2729, %v2728
        %v2753 = vpack.c.bf16 %v2731, %v2730
        %v2754 = vpack.c.bf16 %v2733, %v2732
        %v2755 = vpack.c.bf16 %v2735, %v2734
        %v2756 = vpack.c.bf16 %v2737, %v2736
        %v2757 = vpack.c.bf16 %v2739, %v2738
        %v2758 = vpack.c.bf16 %v2741, %v2740
        %v2759 = vpack.c.bf16 %v2743, %v2742
        %v2776 = vunpack.c.l.b16 %v2744
        %v2777 = vunpack.c.h.b16 %v2744
        %v2778 = vunpack.c.l.b16 %v2745
        %v2779 = vunpack.c.h.b16 %v2745
        %v2780 = vunpack.c.l.b16 %v2746
        %v2781 = vunpack.c.h.b16 %v2746
        %v2782 = vunpack.c.l.b16 %v2747
        %v2783 = vunpack.c.h.b16 %v2747
        %v2784 = vunpack.c.l.b16 %v2748
        %v2785 = vunpack.c.h.b16 %v2748
        %v2786 = vunpack.c.l.b16 %v2749
        %v2787 = vunpack.c.h.b16 %v2749
        %v2788 = vunpack.c.l.b16 %v2750
        %v2789 = vunpack.c.h.b16 %v2750
        %v2790 = vunpack.c.l.b16 %v2751
        %v2791 = vunpack.c.h.b16 %v2751
        %v2792 = vunpack.c.l.b16 %v2752
        %v2793 = vunpack.c.h.b16 %v2752
        %v2794 = vunpack.c.l.b16 %v2753
        %v2795 = vunpack.c.h.b16 %v2753
        %v2796 = vunpack.c.l.b16 %v2754
        %v2797 = vunpack.c.h.b16 %v2754
        %v2798 = vunpack.c.l.b16 %v2755
        %v2799 = vunpack.c.h.b16 %v2755
        %v2800 = vunpack.c.l.b16 %v2756
        %v2801 = vunpack.c.h.b16 %v2756
        %v2802 = vunpack.c.l.b16 %v2757
        %v2803 = vunpack.c.h.b16 %v2757
        %v2804 = vunpack.c.l.b16 %v2758
        %v2805 = vunpack.c.h.b16 %v2758
        %v2806 = vunpack.c.l.b16 %v2759
        %v2807 = vunpack.c.h.b16 %v2759
        %v2808 = vpack.c.b16 %v2776, %v2776
        %v2809 = vpack.c.b16 %v2777, %v2777
        %v2810 = vpack.c.b16 %v2778, %v2778
        %v2811 = vpack.c.b16 %v2779, %v2779
        %v2812 = vpack.c.b16 %v2780, %v2780
        %v2813 = vpack.c.b16 %v2781, %v2781
        %v2814 = vpack.c.b16 %v2782, %v2782
        %v2815 = vpack.c.b16 %v2783, %v2783
        %v2816 = vpack.c.b16 %v2784, %v2784
        %v2817 = vpack.c.b16 %v2785, %v2785
        %v2818 = vpack.c.b16 %v2786, %v2786
        %v2819 = vpack.c.b16 %v2787, %v2787
        %v2820 = vpack.c.b16 %v2788, %v2788
        %v2821 = vpack.c.b16 %v2789, %v2789
        %v2822 = vpack.c.b16 %v2790, %v2790
        %v2823 = vpack.c.b16 %v2791, %v2791
        %v2824 = vpack.c.b16 %v2792, %v2792
        %v2825 = vpack.c.b16 %v2793, %v2793
        %v2826 = vpack.c.b16 %v2794, %v2794
        %v2827 = vpack.c.b16 %v2795, %v2795
        %v2828 = vpack.c.b16 %v2796, %v2796
        %v2829 = vpack.c.b16 %v2797, %v2797
        %v2830 = vpack.c.b16 %v2798, %v2798
        %v2831 = vpack.c.b16 %v2799, %v2799
        %v2832 = vpack.c.b16 %v2800, %v2800
        %v2833 = vpack.c.b16 %v2801, %v2801
        %v2834 = vpack.c.b16 %v2802, %v2802
        %v2835 = vpack.c.b16 %v2803, %v2803
        %v2836 = vpack.c.b16 %v2804, %v2804
        %v2837 = vpack.c.b16 %v2805, %v2805
        %v2838 = vpack.c.b16 %v2806, %v2806
        %v2839 = vpack.c.b16 %v2807, %v2807
        %2872 = vst [vmem:[%s477] sm:$0xf] %v2808
        %2873 = vst [vmem:[%s477 + $0x4] sm:$0xf] %v2809
        %2874 = vst [vmem:[%s477 + $0x8] sm:$0xf] %v2810
        %2875 = vst [vmem:[%s477 + $0xc] sm:$0xf] %v2811
        %2876 = vst [vmem:[%s477 + $0x10] sm:$0xf] %v2812
        %2877 = vst [vmem:[%s477 + $0x14] sm:$0xf] %v2813
        %2878 = vst [vmem:[%s477 + $0x18] sm:$0xf] %v2814
        %2879 = vst [vmem:[%s477 + $0x1c] sm:$0xf] %v2815
        %2880 = vst [vmem:[%s477 + $0x20] sm:$0xf] %v2816
        %2881 = vst [vmem:[%s477 + $0x24] sm:$0xf] %v2817
        %2882 = vst [vmem:[%s477 + $0x28] sm:$0xf] %v2818
        %2883 = vst [vmem:[%s477 + $0x2c] sm:$0xf] %v2819
        %2884 = vst [vmem:[%s477 + $0x30] sm:$0xf] %v2820
        %2885 = vst [vmem:[%s477 + $0x34] sm:$0xf] %v2821
        %2886 = vst [vmem:[%s477 + $0x38] sm:$0xf] %v2822
        %2887 = vst [vmem:[%s477 + $0x3c] sm:$0xf] %v2823
        %2888 = vst [vmem:[%s477 + $0x40] sm:$0xf] %v2824
        %2889 = vst [vmem:[%s477 + $0x44] sm:$0xf] %v2825
        %2890 = vst [vmem:[%s477 + $0x48] sm:$0xf] %v2826
        %2891 = vst [vmem:[%s477 + $0x4c] sm:$0xf] %v2827
        %2892 = vst [vmem:[%s477 + $0x50] sm:$0xf] %v2828
        %2893 = vst [vmem:[%s477 + $0x54] sm:$0xf] %v2829
        %2894 = vst [vmem:[%s477 + $0x58] sm:$0xf] %v2830
        %2895 = vst [vmem:[%s477 + $0x5c] sm:$0xf] %v2831
        %2896 = vst [vmem:[%s477 + $0x60] sm:$0xf] %v2832
        %2897 = vst [vmem:[%s477 + $0x64] sm:$0xf] %v2833
        %2898 = vst [vmem:[%s477 + $0x68] sm:$0xf] %v2834
        %2899 = vst [vmem:[%s477 + $0x6c] sm:$0xf] %v2835
        %2900 = vst [vmem:[%s477 + $0x70] sm:$0xf] %v2836
        %2901 = vst [vmem:[%s477 + $0x74] sm:$0xf] %v2837
        %2902 = vst [vmem:[%s477 + $0x78] sm:$0xf] %v2838
        %2903 = vst [vmem:[%s477 + $0x7c] sm:$0xf] %v2839
        %s2904 = sand.u32 %s275, 1
        %s2905 = scalar_lea.sflag [#allocation5], %s2904
        %s2906 = sand.u32 %s275, 1
        %s2907 = smul.addr %s2906, 128
        %s2908 = scalar_lea.vmem [#allocation14], %s2907
        // Predicated region
        $region89: #{tpu_custom_call.1} parent=63 // pred_check
          %p2909 = pneg %p285
        $region90: #{tpu_custom_call.1} parent=63 // pred_check_branch
          %2911 = sbr.rel (%p2909) target = $region92
        $region91: #{tpu_custom_call.1} parent=63 // pred_region
          %s2913 = ssub.s32 2048, 2048
          %2914 = vsyncadd %s2905, %s2913
          %s2915 = smul.addr %s31, 32
          %s2916 = smul.addr %s2915, 64
          %s2917 = scalar_lea.hbm %s11, %s2916
          %s2918 = sshll.u32 %s2908, 4
          %s2919 = int_to_ptr.vmem [resolvable:$true] %s2918
          %2924 = dma.vmem_to_hbm [thread:$0]  %s2919, 2048, %s2917, %s2905, 64, 64, 4
        $region92: #{tpu_custom_call.1} parent=63 // pred_fallthru
          _
      $region64: #{tpu_custom_call.1} parent=5 // pred_fallthru
        _
      %p2925 = scmp.le.s32.totalorder 2, %s26
      // Predicated region
      $region93: #{tpu_custom_call.1} parent=5 // pred_check
        %p2926 = pneg %p2925
      $region94: #{tpu_custom_call.1} parent=5 // pred_check_branch
        %2928 = sbr.rel (%p2926) target = $region96
      $region95: #{tpu_custom_call.1} parent=5 // pred_region
        %s2929 = ssub.s32 %s26, 2
        // Predicated region
        $region97: #{tpu_custom_call.1} parent=95 // pred_check
          %p2930 = pneg %p291
        $region98: #{tpu_custom_call.1} parent=95 // pred_check_branch
          %2932 = sbr.rel (%p2930) target = $region100
        $region99: #{tpu_custom_call.1} parent=95 // pred_region
          %s2933 = sand.u32 %s276, 1
          %s2934 = scalar_lea.sflag [#allocation5], %s2933
          %s2935 = sand.u32 %s276, 1
          %s2936 = smul.addr %s2935, 128
          %s2937 = scalar_lea.vmem [#allocation14], %s2936
          %2938 = dma.done %s2934, 2048
        $region100: #{tpu_custom_call.1} parent=95 // pred_fallthru
          _
      $region96: #{tpu_custom_call.1} parent=5 // pred_fallthru
        _
    $region6: #{tpu_custom_call.1} parent=1 // loop_footer
      %s30 = sadd.s32 1, %s26
    $region7: #{tpu_custom_call.1} parent=1 // loop_footer_branch
      %25 = sbr.rel target = $region3
    $region8: #{tpu_custom_call.1} parent=1 // loop_exit
      _
    %2939 = vsyncpa [#allocation4], 1
    %s2940 = scalar_lea.sflag [#allocation4], 1
    %2941 = vsyncpa %s2940, 1
    %2942 = vsyncpa [#allocation7], 1
    %2943 = vsyncpa [#allocation10], 1
    %2944 = vsyncpa [#allocation13], 1
    %2945 = vsyncpa [#allocation5], 1
    %s2946 = scalar_lea.sflag [#allocation5], 1
    %2947 = vsyncpa %s2946, 1

</llo_original>
